<compile_context>
chip_gen: v7x
topology: tpu7x:2x2x1
jax: 0.10.0
libtpu: 0.0.40
codegen_flags: <defaults>
</compile_context>

<pallas_src>
import jax
import jax.numpy as jnp
from jax.experimental import pallas as pl
from jax.experimental.pallas import tpu as pltpu

CHANNELS = 1
IMG_SIZE = 28
IMG_PIXELS = CHANNELS * IMG_SIZE * IMG_SIZE   # 784
IMG_PIXELS_PAD = 896                          # 7 * 128 (lane-aligned output)
LATENT_DIM = 100
LATENT_DIM_PAD = 128                          # lane-aligned input
HIDDEN = (128, 256, 512, 1024)
LAYER_OUT = (128, 256, 512, 1024, IMG_PIXELS_PAD)
BN_LAYERS = (2, 3, 4)
BN_EPS = 1e-5                                 # nn.BatchNorm1d default


# ---------------------------------------------------------------------------
# Packed per-channel parameter vector layout (dequant scale s_i, bias b_i,
# BN gamma g_i / beta be_i), all (1, N) f32, concatenated along lanes.
# Every size is a multiple of 128 so every offset is lane-aligned.
# ---------------------------------------------------------------------------
def _build_param_layout():
    order, layout, off = [], {}, 0
    for i, n in enumerate(LAYER_OUT, start=1):
        names = [f"s{i}", f"b{i}"]
        if i in BN_LAYERS:
            names += [f"g{i}", f"be{i}"]
        for name in names:
            order.append(name)
            layout[name] = (off, n)
            off += n
    return order, layout, off


_PARAM_ORDER, _PARAM_LAYOUT, _PVEC_LEN = _build_param_layout()   # _PVEC_LEN == 9216


# ---------------------------------------------------------------------------
# Kernel
# ---------------------------------------------------------------------------
def generator_kernel(z_ref, w1_ref, w2_ref, w3_ref, w4_hbm, w5_hbm, pvec_ref,
                     out_ref, w4_buf, w5_buf, dma_sems):
    # Kick off the two dominant weight DMAs immediately; they overlap the
    # layer 1-3 compute and are waited on right before layers 4 / 5.
    cp4 = pltpu.make_async_copy(w4_hbm, w4_buf, dma_sems.at[0])
    cp5 = pltpu.make_async_copy(w5_hbm, w5_buf, dma_sems.at[1])
    cp4.start()
    cp5.start()

    def pv(name):
        off, n = _PARAM_LAYOUT[name]
        return pvec_ref[:, off:off + n]          # static, lane-aligned slice

    def dense(h, w_int8, i):
        # int8 weights -> bf16 on the VPU (exact: |w_q| <= 127), bf16 MXU
        # operands, f32 accumulation; per-output-channel dequant scale folded
        # into the epilogue FMA together with the bias.
        w_bf16 = w_int8.astype(jnp.float32).astype(jnp.bfloat16)
        acc = jnp.dot(h.astype(jnp.bfloat16), w_bf16,
                      preferred_element_type=jnp.float32)
        return acc * pv(f"s{i}") + pv(f"b{i}")

    def leaky(y):
        return jnp.where(y > 0, y, 0.2 * y)

    def bn_leaky(a, i):
        # Training-mode BatchNorm1d: one-pass biased batch stats (f32),
        # affine folded into a single FMA, LeakyReLU fused after.
        mean = jnp.mean(a, axis=0, keepdims=True)
        var = jnp.maximum(jnp.mean(a * a, axis=0, keepdims=True) - mean * mean, 0.0)
        scale = pv(f"g{i}") * jax.lax.rsqrt(var + BN_EPS)
        shift = pv(f"be{i}") - mean * scale
        return leaky(a * scale + shift)

    # block(latent_dim, 128, normalize=False): Linear + LeakyReLU
    h = leaky(dense(z_ref[...], w1_ref[...], 1))
    # block(128, 256) / block(256, 512): Linear + BatchNorm1d + LeakyReLU
    h = bn_leaky(dense(h, w2_ref[...], 2), 2)
    h = bn_leaky(dense(h, w3_ref[...], 3), 3)
    # block(512, 1024)
    cp4.wait()
    h = bn_leaky(dense(h, w4_buf[...], 4), 4)
    # Linear(1024, 784 padded to 896) + Tanh; padded columns are exactly 0.
    cp5.wait()
    out_ref[...] = jnp.tanh(dense(h, w5_buf[...], 5)).astype(out_ref.dtype)


# ---------------------------------------------------------------------------
# Parameters
# ---------------------------------------------------------------------------
def init_params(key):
    """Deterministic synthetic parameters (PyTorch-like uniform fan-in init)."""
    dims = [LATENT_DIM, *HIDDEN, IMG_PIXELS]
    params = {}
    for i in range(5):
        fan_in, fan_out = dims[i], dims[i + 1]
        key, kw, kb = jax.random.split(key, 3)
        bound = 1.0 / (fan_in ** 0.5)
        params[f"w{i+1}"] = jax.random.uniform(
            kw, (fan_in, fan_out), jnp.float32, -bound, bound)
        params[f"b{i+1}"] = jax.random.uniform(
            kb, (1, fan_out), jnp.float32, -bound, bound)
    for i, feat in zip(BN_LAYERS, HIDDEN[1:]):
        params[f"g{i}"] = jnp.ones((1, feat), jnp.float32)
        params[f"be{i}"] = jnp.zeros((1, feat), jnp.float32)
    return params


def _quantize_int8(w):
    """Symmetric per-output-channel int8 quantization: w ~= w_q * scale[col]."""
    amax = jnp.max(jnp.abs(w), axis=0)
    scale = jnp.where(amax > 0, amax / 127.0, 1.0)       # all-zero (pad) cols -> 1
    w_q = jnp.clip(jnp.round(w / scale), -127, 127).astype(jnp.int8)
    return w_q, scale.reshape(1, -1).astype(jnp.float32)


def prepare_params(params):
    """One-time prep: lane-align w1/w5/b5, int8-quantize weights, pack per-channel params."""
    w1 = jnp.zeros((LATENT_DIM_PAD, HIDDEN[0]), jnp.float32)
    w1 = w1.at[:LATENT_DIM, :].set(params["w1"])
    w5 = jnp.zeros((HIDDEN[3], IMG_PIXELS_PAD), jnp.float32)
    w5 = w5.at[:, :IMG_PIXELS].set(params["w5"])
    b5 = jnp.zeros((1, IMG_PIXELS_PAD), jnp.float32)
    b5 = b5.at[:, :IMG_PIXELS].set(params["b5"])

    weights = [w1, params["w2"], params["w3"], params["w4"], w5]
    biases = [params["b1"], params["b2"], params["b3"], params["b4"], b5]

    prepped, pieces = {}, {}
    for i in range(5):
        wq, s = _quantize_int8(weights[i])
        prepped[f"wq{i+1}"] = wq
        pieces[f"s{i+1}"] = s
        pieces[f"b{i+1}"] = biases[i]
    for i in BN_LAYERS:
        pieces[f"g{i}"] = params[f"g{i}"]
        pieces[f"be{i}"] = params[f"be{i}"]

    pvec = jnp.concatenate([pieces[name] for name in _PARAM_ORDER], axis=1)
    assert pvec.shape == (1, _PVEC_LEN)
    prepped["pvec"] = pvec
    prepped.update(pieces)        # keep individual pieces for the reference
    return prepped


# ---------------------------------------------------------------------------
# Wrapper
# ---------------------------------------------------------------------------
def generator_forward(z, p):
    B = z.shape[0]
    z_pad = jnp.pad(z, ((0, 0), (0, LATENT_DIM_PAD - LATENT_DIM)))

    vmem = pl.BlockSpec(memory_space=pltpu.MemorySpace.VMEM)
    hbm = pl.BlockSpec(memory_space=pl.ANY)    # w4 / w5 stay in HBM; DMA'd in-kernel

    flat = pl.pallas_call(
        generator_kernel,
        out_shape=jax.ShapeDtypeStruct((B, IMG_PIXELS_PAD), jnp.bfloat16),
        in_specs=[vmem, vmem, vmem, vmem, hbm, hbm, vmem],
        out_specs=vmem,
        scratch_shapes=[
            pltpu.VMEM((HIDDEN[2], HIDDEN[3]), jnp.int8),          # w4 buffer
            pltpu.VMEM((HIDDEN[3], IMG_PIXELS_PAD), jnp.int8),     # w5 buffer
            pltpu.SemaphoreType.DMA((2,)),
        ],
        compiler_params=pltpu.CompilerParams(vmem_limit_bytes=32 * 1024 * 1024),
    )(z_pad, p["wq1"], p["wq2"], p["wq3"], p["wq4"], p["wq5"], p["pvec"])

    # Drop lane padding, upcast, img.view(B, *img_shape) -> NCHW (single fused XLA op).
    return flat[:, :IMG_PIXELS].astype(jnp.float32).reshape(
        B, CHANNELS, IMG_SIZE, IMG_SIZE)


def generator_forward_ref(z, p):
    """Pure-JAX mirror of the kernel math (int8 weights, bf16 MXU operands,
    f32 accumulation, one-pass BN, bf16 output)."""
    z_pad = jnp.pad(z, ((0, 0), (0, LATENT_DIM_PAD - LATENT_DIM)))

    def dense(h, i):
        w = p[f"wq{i}"].astype(jnp.float32).astype(jnp.bfloat16)
        acc = jnp.dot(h.astype(jnp.bfloat16), w,
                      preferred_element_type=jnp.float32)
        return acc * p[f"s{i}"] + p[f"b{i}"]

    def leaky(y):
        return jnp.where(y > 0, y, 0.2 * y)

    def bn_leaky(a, i):
        mean = jnp.mean(a, axis=0, keepdims=True)
        var = jnp.maximum(jnp.mean(a * a, axis=0, keepdims=True) - mean * mean, 0.0)
        scale = p[f"g{i}"] * jax.lax.rsqrt(var + BN_EPS)
        shift = p[f"be{i}"] - mean * scale
        return leaky(a * scale + shift)

    h = leaky(dense(z_pad, 1))
    for i in BN_LAYERS:
        h = bn_leaky(dense(h, i), i)
    out = jnp.tanh(dense(h, 5)).astype(jnp.bfloat16)
    return out[:, :IMG_PIXELS].astype(jnp.float32).reshape(
        z.shape[0], CHANNELS, IMG_SIZE, IMG_SIZE)


if __name__ == "__main__":
    key = jax.random.PRNGKey(0)
    kp, kz = jax.random.split(key)
    params = init_params(kp)
    prepared = prepare_params(params)

    B = 2
    z = jax.random.normal(kz, (B, LATENT_DIM), jnp.float32)

    img = jax.block_until_ready(generator_forward(z, prepared))
    ref = generator_forward_ref(z, prepared)

    assert img.shape == (B, CHANNELS, IMG_SIZE, IMG_SIZE)
    assert bool(jnp.all(jnp.isfinite(img)))
    # Mirror-reference check (identical math); tolerance covers one bf16 ulp plus
    # EUP-vs-XLA tanh/rsqrt implementation differences.
    assert jnp.allclose(img, ref, atol=2e-2, rtol=0), \
        float(jnp.max(jnp.abs(img - ref)))

    print("KERNEL_OK")
</pallas_src>

<mosaic_0001>
module attributes {stable_mosaic.version = 11 : i64} {
  func.func @generator_kernel(%arg0: memref<2x128xf32, #tpu.memory_space<vmem>>, %arg1: memref<128x128xi8, #tpu.memory_space<vmem>>, %arg2: memref<128x256xi8, #tpu.memory_space<vmem>>, %arg3: memref<256x512xi8, #tpu.memory_space<vmem>>, %arg4: memref<512x1024xi8, #tpu.memory_space<any>>, %arg5: memref<1024x896xi8, #tpu.memory_space<any>>, %arg6: memref<1x9216xf32, #tpu.memory_space<vmem>>, %arg7: memref<2x896xbf16, #tpu.memory_space<vmem>>, %arg8: memref<512x1024xi8, #tpu.memory_space<vmem>>, %arg9: memref<1024x896xi8, #tpu.memory_space<vmem>>, %arg10: memref<2x!tpu.dma_semaphore, #tpu.memory_space<semaphore_mem>>) attributes {dimension_semantics = [], scalar_prefetch = 0 : i64, scratch_operands = 3 : i64, tpu.core_type = #tpu.core_type<tc>} {
    %c0_i32 = arith.constant 0 : i32
    %0 = tpu.memref_slice %arg10[%c0_i32] : memref<2x!tpu.dma_semaphore, #tpu.memory_space<semaphore_mem>> -> memref<1x!tpu.dma_semaphore, #tpu.memory_space<semaphore_mem>>
    %1 = tpu.memref_squeeze %0 : memref<1x!tpu.dma_semaphore, #tpu.memory_space<semaphore_mem>> -> memref<!tpu.dma_semaphore, #tpu.memory_space<semaphore_mem>>
    tpu.enqueue_dma source(%arg4 : memref<512x1024xi8, #tpu.memory_space<any>>) target(%arg8 : memref<512x1024xi8, #tpu.memory_space<vmem>>) target_semaphore(%1 : memref<!tpu.dma_semaphore, #tpu.memory_space<semaphore_mem>>)
    %c1_i32 = arith.constant 1 : i32
    %2 = tpu.memref_slice %arg10[%c1_i32] : memref<2x!tpu.dma_semaphore, #tpu.memory_space<semaphore_mem>> -> memref<1x!tpu.dma_semaphore, #tpu.memory_space<semaphore_mem>>
    %3 = tpu.memref_squeeze %2 : memref<1x!tpu.dma_semaphore, #tpu.memory_space<semaphore_mem>> -> memref<!tpu.dma_semaphore, #tpu.memory_space<semaphore_mem>>
    tpu.enqueue_dma source(%arg5 : memref<1024x896xi8, #tpu.memory_space<any>>) target(%arg9 : memref<1024x896xi8, #tpu.memory_space<vmem>>) target_semaphore(%3 : memref<!tpu.dma_semaphore, #tpu.memory_space<semaphore_mem>>)
    %c0 = arith.constant 0 : index
    %c0_0 = arith.constant 0 : index
    %4 = vector.load %arg0[%c0, %c0_0] : memref<2x128xf32, #tpu.memory_space<vmem>>, vector<2x128xf32>
    %c0_1 = arith.constant 0 : index
    %c0_2 = arith.constant 0 : index
    %5 = vector.load %arg1[%c0_1, %c0_2] : memref<128x128xi8, #tpu.memory_space<vmem>>, vector<128x128xi8>
    %6 = arith.sitofp %5 : vector<128x128xi8> to vector<128x128xf32>
    %7 = arith.truncf %6 : vector<128x128xf32> to vector<128x128xbf16>
    %8 = arith.truncf %4 : vector<2x128xf32> to vector<2x128xbf16>
    %cst = arith.constant dense<0.000000e+00> : vector<2x128xf32>
    %9 = tpu.matmul %8, %7, %cst {dimension_numbers = #tpu.dot_dimension_numbers<[1], [0], [0], [1], [0, 0, 1, 1], [], []>} : vector<2x128xbf16>, vector<128x128xbf16>, vector<2x128xf32> -> vector<2x128xf32>
    %c0_3 = arith.constant 0 : index
    %c0_4 = arith.constant 0 : index
    %10 = vector.load %arg6[%c0_3, %c0_4] : memref<1x9216xf32, #tpu.memory_space<vmem>>, vector<1x128xf32>
    %11 = vector.broadcast %10 : vector<1x128xf32> to vector<2x128xf32>
    %12 = arith.mulf %9, %11 : vector<2x128xf32>
    %c0_5 = arith.constant 0 : index
    %c128 = arith.constant 128 : index
    %13 = vector.load %arg6[%c0_5, %c128] : memref<1x9216xf32, #tpu.memory_space<vmem>>, vector<1x128xf32>
    %14 = vector.broadcast %13 : vector<1x128xf32> to vector<2x128xf32>
    %15 = arith.addf %12, %14 : vector<2x128xf32>
    %cst_6 = arith.constant 0.000000e+00 : f32
    %16 = vector.broadcast %cst_6 : f32 to vector<2x128xf32>
    %17 = arith.cmpf ogt, %15, %16 : vector<2x128xf32>
    %cst_7 = arith.constant 2.000000e-01 : f32
    %18 = vector.broadcast %cst_7 : f32 to vector<2x128xf32>
    %19 = arith.mulf %18, %15 : vector<2x128xf32>
    %20 = arith.select %17, %15, %19 : vector<2x128xi1>, vector<2x128xf32>
    %c0_8 = arith.constant 0 : index
    %c0_9 = arith.constant 0 : index
    %21 = vector.load %arg2[%c0_8, %c0_9] : memref<128x256xi8, #tpu.memory_space<vmem>>, vector<128x256xi8>
    %22 = arith.sitofp %21 : vector<128x256xi8> to vector<128x256xf32>
    %23 = arith.truncf %22 : vector<128x256xf32> to vector<128x256xbf16>
    %24 = arith.truncf %20 : vector<2x128xf32> to vector<2x128xbf16>
    %cst_10 = arith.constant dense<0.000000e+00> : vector<2x256xf32>
    %25 = tpu.matmul %24, %23, %cst_10 {dimension_numbers = #tpu.dot_dimension_numbers<[1], [0], [0], [1], [0, 0, 1, 1], [], []>} : vector<2x128xbf16>, vector<128x256xbf16>, vector<2x256xf32> -> vector<2x256xf32>
    %c0_11 = arith.constant 0 : index
    %c256 = arith.constant 256 : index
    %26 = vector.load %arg6[%c0_11, %c256] : memref<1x9216xf32, #tpu.memory_space<vmem>>, vector<1x256xf32>
    %27 = vector.broadcast %26 : vector<1x256xf32> to vector<2x256xf32>
    %28 = arith.mulf %25, %27 : vector<2x256xf32>
    %c0_12 = arith.constant 0 : index
    %c512 = arith.constant 512 : index
    %29 = vector.load %arg6[%c0_12, %c512] : memref<1x9216xf32, #tpu.memory_space<vmem>>, vector<1x256xf32>
    %30 = vector.broadcast %29 : vector<1x256xf32> to vector<2x256xf32>
    %31 = arith.addf %28, %30 : vector<2x256xf32>
    %cst_13 = arith.constant dense<0.000000e+00> : vector<256xf32>
    %32 = vector.multi_reduction <add>, %31, %cst_13 [0] : vector<2x256xf32> to vector<256xf32>
    %33 = vector.shape_cast %32 : vector<256xf32> to vector<1x256xf32>
    %cst_14 = arith.constant 2.000000e+00 : f32
    %34 = vector.broadcast %cst_14 : f32 to vector<1x256xf32>
    %35 = arith.divf %33, %34 : vector<1x256xf32>
    %36 = arith.mulf %31, %31 : vector<2x256xf32>
    %cst_15 = arith.constant dense<0.000000e+00> : vector<256xf32>
    %37 = vector.multi_reduction <add>, %36, %cst_15 [0] : vector<2x256xf32> to vector<256xf32>
    %38 = vector.shape_cast %37 : vector<256xf32> to vector<1x256xf32>
    %cst_16 = arith.constant 2.000000e+00 : f32
    %39 = vector.broadcast %cst_16 : f32 to vector<1x256xf32>
    %40 = arith.divf %38, %39 : vector<1x256xf32>
    %41 = arith.mulf %35, %35 : vector<1x256xf32>
    %42 = arith.subf %40, %41 : vector<1x256xf32>
    %cst_17 = arith.constant 0.000000e+00 : f32
    %43 = vector.broadcast %cst_17 : f32 to vector<1x256xf32>
    %44 = arith.maximumf %42, %43 : vector<1x256xf32>
    %c0_18 = arith.constant 0 : index
    %c768 = arith.constant 768 : index
    %45 = vector.load %arg6[%c0_18, %c768] : memref<1x9216xf32, #tpu.memory_space<vmem>>, vector<1x256xf32>
    %cst_19 = arith.constant 9.99999974E-6 : f32
    %46 = vector.broadcast %cst_19 : f32 to vector<1x256xf32>
    %47 = arith.addf %44, %46 : vector<1x256xf32>
    %48 = math.rsqrt %47 : vector<1x256xf32>
    %49 = arith.mulf %45, %48 : vector<1x256xf32>
    %c0_20 = arith.constant 0 : index
    %c1024 = arith.constant 1024 : index
    %50 = vector.load %arg6[%c0_20, %c1024] : memref<1x9216xf32, #tpu.memory_space<vmem>>, vector<1x256xf32>
    %51 = arith.mulf %35, %49 : vector<1x256xf32>
    %52 = arith.subf %50, %51 : vector<1x256xf32>
    %53 = vector.broadcast %49 : vector<1x256xf32> to vector<2x256xf32>
    %54 = arith.mulf %31, %53 : vector<2x256xf32>
    %55 = vector.broadcast %52 : vector<1x256xf32> to vector<2x256xf32>
    %56 = arith.addf %54, %55 : vector<2x256xf32>
    %cst_21 = arith.constant 0.000000e+00 : f32
    %57 = vector.broadcast %cst_21 : f32 to vector<2x256xf32>
    %58 = arith.cmpf ogt, %56, %57 : vector<2x256xf32>
    %cst_22 = arith.constant 2.000000e-01 : f32
    %59 = vector.broadcast %cst_22 : f32 to vector<2x256xf32>
    %60 = arith.mulf %59, %56 : vector<2x256xf32>
    %61 = arith.select %58, %56, %60 : vector<2x256xi1>, vector<2x256xf32>
    %c0_23 = arith.constant 0 : index
    %c0_24 = arith.constant 0 : index
    %62 = vector.load %arg3[%c0_23, %c0_24] : memref<256x512xi8, #tpu.memory_space<vmem>>, vector<256x512xi8>
    %63 = arith.sitofp %62 : vector<256x512xi8> to vector<256x512xf32>
    %64 = arith.truncf %63 : vector<256x512xf32> to vector<256x512xbf16>
    %65 = arith.truncf %61 : vector<2x256xf32> to vector<2x256xbf16>
    %cst_25 = arith.constant dense<0.000000e+00> : vector<2x512xf32>
    %66 = tpu.matmul %65, %64, %cst_25 {dimension_numbers = #tpu.dot_dimension_numbers<[1], [0], [0], [1], [0, 0, 1, 1], [], []>} : vector<2x256xbf16>, vector<256x512xbf16>, vector<2x512xf32> -> vector<2x512xf32>
    %c0_26 = arith.constant 0 : index
    %c1280 = arith.constant 1280 : index
    %67 = vector.load %arg6[%c0_26, %c1280] : memref<1x9216xf32, #tpu.memory_space<vmem>>, vector<1x512xf32>
    %68 = vector.broadcast %67 : vector<1x512xf32> to vector<2x512xf32>
    %69 = arith.mulf %66, %68 : vector<2x512xf32>
    %c0_27 = arith.constant 0 : index
    %c1792 = arith.constant 1792 : index
    %70 = vector.load %arg6[%c0_27, %c1792] : memref<1x9216xf32, #tpu.memory_space<vmem>>, vector<1x512xf32>
    %71 = vector.broadcast %70 : vector<1x512xf32> to vector<2x512xf32>
    %72 = arith.addf %69, %71 : vector<2x512xf32>
    %cst_28 = arith.constant dense<0.000000e+00> : vector<512xf32>
    %73 = vector.multi_reduction <add>, %72, %cst_28 [0] : vector<2x512xf32> to vector<512xf32>
    %74 = vector.shape_cast %73 : vector<512xf32> to vector<1x512xf32>
    %cst_29 = arith.constant 2.000000e+00 : f32
    %75 = vector.broadcast %cst_29 : f32 to vector<1x512xf32>
    %76 = arith.divf %74, %75 : vector<1x512xf32>
    %77 = arith.mulf %72, %72 : vector<2x512xf32>
    %cst_30 = arith.constant dense<0.000000e+00> : vector<512xf32>
    %78 = vector.multi_reduction <add>, %77, %cst_30 [0] : vector<2x512xf32> to vector<512xf32>
    %79 = vector.shape_cast %78 : vector<512xf32> to vector<1x512xf32>
    %cst_31 = arith.constant 2.000000e+00 : f32
    %80 = vector.broadcast %cst_31 : f32 to vector<1x512xf32>
    %81 = arith.divf %79, %80 : vector<1x512xf32>
    %82 = arith.mulf %76, %76 : vector<1x512xf32>
    %83 = arith.subf %81, %82 : vector<1x512xf32>
    %cst_32 = arith.constant 0.000000e+00 : f32
    %84 = vector.broadcast %cst_32 : f32 to vector<1x512xf32>
    %85 = arith.maximumf %83, %84 : vector<1x512xf32>
    %c0_33 = arith.constant 0 : index
    %c2304 = arith.constant 2304 : index
    %86 = vector.load %arg6[%c0_33, %c2304] : memref<1x9216xf32, #tpu.memory_space<vmem>>, vector<1x512xf32>
    %cst_34 = arith.constant 9.99999974E-6 : f32
    %87 = vector.broadcast %cst_34 : f32 to vector<1x512xf32>
    %88 = arith.addf %85, %87 : vector<1x512xf32>
    %89 = math.rsqrt %88 : vector<1x512xf32>
    %90 = arith.mulf %86, %89 : vector<1x512xf32>
    %c0_35 = arith.constant 0 : index
    %c2816 = arith.constant 2816 : index
    %91 = vector.load %arg6[%c0_35, %c2816] : memref<1x9216xf32, #tpu.memory_space<vmem>>, vector<1x512xf32>
    %92 = arith.mulf %76, %90 : vector<1x512xf32>
    %93 = arith.subf %91, %92 : vector<1x512xf32>
    %94 = vector.broadcast %90 : vector<1x512xf32> to vector<2x512xf32>
    %95 = arith.mulf %72, %94 : vector<2x512xf32>
    %96 = vector.broadcast %93 : vector<1x512xf32> to vector<2x512xf32>
    %97 = arith.addf %95, %96 : vector<2x512xf32>
    %cst_36 = arith.constant 0.000000e+00 : f32
    %98 = vector.broadcast %cst_36 : f32 to vector<2x512xf32>
    %99 = arith.cmpf ogt, %97, %98 : vector<2x512xf32>
    %cst_37 = arith.constant 2.000000e-01 : f32
    %100 = vector.broadcast %cst_37 : f32 to vector<2x512xf32>
    %101 = arith.mulf %100, %97 : vector<2x512xf32>
    %102 = arith.select %99, %97, %101 : vector<2x512xi1>, vector<2x512xf32>
    %c0_i32_38 = arith.constant 0 : i32
    %103 = tpu.memref_slice %arg10[%c0_i32_38] : memref<2x!tpu.dma_semaphore, #tpu.memory_space<semaphore_mem>> -> memref<1x!tpu.dma_semaphore, #tpu.memory_space<semaphore_mem>>
    %104 = tpu.memref_squeeze %103 : memref<1x!tpu.dma_semaphore, #tpu.memory_space<semaphore_mem>> -> memref<!tpu.dma_semaphore, #tpu.memory_space<semaphore_mem>>
    tpu.wait_dma2 semaphore(%104 : memref<!tpu.dma_semaphore, #tpu.memory_space<semaphore_mem>>) src(%arg4 : memref<512x1024xi8, #tpu.memory_space<any>>) dst(%arg8 : memref<512x1024xi8, #tpu.memory_space<vmem>>)
    %c0_39 = arith.constant 0 : index
    %c0_40 = arith.constant 0 : index
    %105 = vector.load %arg8[%c0_39, %c0_40] : memref<512x1024xi8, #tpu.memory_space<vmem>>, vector<512x1024xi8>
    %106 = arith.sitofp %105 : vector<512x1024xi8> to vector<512x1024xf32>
    %107 = arith.truncf %106 : vector<512x1024xf32> to vector<512x1024xbf16>
    %108 = arith.truncf %102 : vector<2x512xf32> to vector<2x512xbf16>
    %cst_41 = arith.constant dense<0.000000e+00> : vector<2x1024xf32>
    %109 = tpu.matmul %108, %107, %cst_41 {dimension_numbers = #tpu.dot_dimension_numbers<[1], [0], [0], [1], [0, 0, 1, 1], [], []>} : vector<2x512xbf16>, vector<512x1024xbf16>, vector<2x1024xf32> -> vector<2x1024xf32>
    %c0_42 = arith.constant 0 : index
    %c3328 = arith.constant 3328 : index
    %110 = vector.load %arg6[%c0_42, %c3328] : memref<1x9216xf32, #tpu.memory_space<vmem>>, vector<1x1024xf32>
    %111 = vector.broadcast %110 : vector<1x1024xf32> to vector<2x1024xf32>
    %112 = arith.mulf %109, %111 : vector<2x1024xf32>
    %c0_43 = arith.constant 0 : index
    %c4352 = arith.constant 4352 : index
    %113 = vector.load %arg6[%c0_43, %c4352] : memref<1x9216xf32, #tpu.memory_space<vmem>>, vector<1x1024xf32>
    %114 = vector.broadcast %113 : vector<1x1024xf32> to vector<2x1024xf32>
    %115 = arith.addf %112, %114 : vector<2x1024xf32>
    %cst_44 = arith.constant dense<0.000000e+00> : vector<1024xf32>
    %116 = vector.multi_reduction <add>, %115, %cst_44 [0] : vector<2x1024xf32> to vector<1024xf32>
    %117 = vector.shape_cast %116 : vector<1024xf32> to vector<1x1024xf32>
    %cst_45 = arith.constant 2.000000e+00 : f32
    %118 = vector.broadcast %cst_45 : f32 to vector<1x1024xf32>
    %119 = arith.divf %117, %118 : vector<1x1024xf32>
    %120 = arith.mulf %115, %115 : vector<2x1024xf32>
    %cst_46 = arith.constant dense<0.000000e+00> : vector<1024xf32>
    %121 = vector.multi_reduction <add>, %120, %cst_46 [0] : vector<2x1024xf32> to vector<1024xf32>
    %122 = vector.shape_cast %121 : vector<1024xf32> to vector<1x1024xf32>
    %cst_47 = arith.constant 2.000000e+00 : f32
    %123 = vector.broadcast %cst_47 : f32 to vector<1x1024xf32>
    %124 = arith.divf %122, %123 : vector<1x1024xf32>
    %125 = arith.mulf %119, %119 : vector<1x1024xf32>
    %126 = arith.subf %124, %125 : vector<1x1024xf32>
    %cst_48 = arith.constant 0.000000e+00 : f32
    %127 = vector.broadcast %cst_48 : f32 to vector<1x1024xf32>
    %128 = arith.maximumf %126, %127 : vector<1x1024xf32>
    %c0_49 = arith.constant 0 : index
    %c5376 = arith.constant 5376 : index
    %129 = vector.load %arg6[%c0_49, %c5376] : memref<1x9216xf32, #tpu.memory_space<vmem>>, vector<1x1024xf32>
    %cst_50 = arith.constant 9.99999974E-6 : f32
    %130 = vector.broadcast %cst_50 : f32 to vector<1x1024xf32>
    %131 = arith.addf %128, %130 : vector<1x1024xf32>
    %132 = math.rsqrt %131 : vector<1x1024xf32>
    %133 = arith.mulf %129, %132 : vector<1x1024xf32>
    %c0_51 = arith.constant 0 : index
    %c6400 = arith.constant 6400 : index
    %134 = vector.load %arg6[%c0_51, %c6400] : memref<1x9216xf32, #tpu.memory_space<vmem>>, vector<1x1024xf32>
    %135 = arith.mulf %119, %133 : vector<1x1024xf32>
    %136 = arith.subf %134, %135 : vector<1x1024xf32>
    %137 = vector.broadcast %133 : vector<1x1024xf32> to vector<2x1024xf32>
    %138 = arith.mulf %115, %137 : vector<2x1024xf32>
    %139 = vector.broadcast %136 : vector<1x1024xf32> to vector<2x1024xf32>
    %140 = arith.addf %138, %139 : vector<2x1024xf32>
    %cst_52 = arith.constant 0.000000e+00 : f32
    %141 = vector.broadcast %cst_52 : f32 to vector<2x1024xf32>
    %142 = arith.cmpf ogt, %140, %141 : vector<2x1024xf32>
    %cst_53 = arith.constant 2.000000e-01 : f32
    %143 = vector.broadcast %cst_53 : f32 to vector<2x1024xf32>
    %144 = arith.mulf %143, %140 : vector<2x1024xf32>
    %145 = arith.select %142, %140, %144 : vector<2x1024xi1>, vector<2x1024xf32>
    %c1_i32_54 = arith.constant 1 : i32
    %146 = tpu.memref_slice %arg10[%c1_i32_54] : memref<2x!tpu.dma_semaphore, #tpu.memory_space<semaphore_mem>> -> memref<1x!tpu.dma_semaphore, #tpu.memory_space<semaphore_mem>>
    %147 = tpu.memref_squeeze %146 : memref<1x!tpu.dma_semaphore, #tpu.memory_space<semaphore_mem>> -> memref<!tpu.dma_semaphore, #tpu.memory_space<semaphore_mem>>
    tpu.wait_dma2 semaphore(%147 : memref<!tpu.dma_semaphore, #tpu.memory_space<semaphore_mem>>) src(%arg5 : memref<1024x896xi8, #tpu.memory_space<any>>) dst(%arg9 : memref<1024x896xi8, #tpu.memory_space<vmem>>)
    %c0_55 = arith.constant 0 : index
    %c0_56 = arith.constant 0 : index
    %148 = vector.load %arg9[%c0_55, %c0_56] : memref<1024x896xi8, #tpu.memory_space<vmem>>, vector<1024x896xi8>
    %149 = arith.sitofp %148 : vector<1024x896xi8> to vector<1024x896xf32>
    %150 = arith.truncf %149 : vector<1024x896xf32> to vector<1024x896xbf16>
    %151 = arith.truncf %145 : vector<2x1024xf32> to vector<2x1024xbf16>
    %cst_57 = arith.constant dense<0.000000e+00> : vector<2x896xf32>
    %152 = tpu.matmul %151, %150, %cst_57 {dimension_numbers = #tpu.dot_dimension_numbers<[1], [0], [0], [1], [0, 0, 1, 1], [], []>} : vector<2x1024xbf16>, vector<1024x896xbf16>, vector<2x896xf32> -> vector<2x896xf32>
    %c0_58 = arith.constant 0 : index
    %c7424 = arith.constant 7424 : index
    %153 = vector.load %arg6[%c0_58, %c7424] : memref<1x9216xf32, #tpu.memory_space<vmem>>, vector<1x896xf32>
    %154 = vector.broadcast %153 : vector<1x896xf32> to vector<2x896xf32>
    %155 = arith.mulf %152, %154 : vector<2x896xf32>
    %c0_59 = arith.constant 0 : index
    %c8320 = arith.constant 8320 : index
    %156 = vector.load %arg6[%c0_59, %c8320] : memref<1x9216xf32, #tpu.memory_space<vmem>>, vector<1x896xf32>
    %157 = vector.broadcast %156 : vector<1x896xf32> to vector<2x896xf32>
    %158 = arith.addf %155, %157 : vector<2x896xf32>
    %159 = math.tanh %158 : vector<2x896xf32>
    %160 = arith.truncf %159 : vector<2x896xf32> to vector<2x896xbf16>
    %c0_60 = arith.constant 0 : index
    %c0_61 = arith.constant 0 : index
    %161 = vector.load %arg7[%c0_60, %c0_61] : memref<2x896xbf16, #tpu.memory_space<vmem>>, vector<2x896xbf16>
    tpu.vector_store %arg7[%c0_60, %c0_61], %160 {strides = array<i32>} : memref<2x896xbf16, #tpu.memory_space<vmem>>, vector<2x896xbf16>,
    return
  }
}

</mosaic_0001>

<llo_original>
// kernel: tpu_custom_call.1
$region0: #{tpu_custom_call.1}
  #allocation0 [shape = 'u32[]', space=smem, size = 0x4, offset = 0x4, fixed_abs, tag = 'smem constant byte address 0x4 - core index']
  #allocation1 [shape = 'u32[144,128]{1,0:T(1,128)}', space=vmem, size = 0x12000, scoped, tag = 'internal scratch']
  #allocation2 [shape = 's8[512,1024]{1,0:T(32,128)(4,1)}', space=vmem, size = 0x80000, scoped, tag = 'scratch operand']
  #allocation3 [shape = 's8[1024,896]{1,0:T(32,128)(4,1)}', space=vmem, size = 0xe0000, scoped, tag = 'scratch operand']
  #allocation4 [shape = 's32[2]{0}', space=sflag, size = 0x8, scoped, tag = 'scratch operand']
  #allocation15 [shape = 's32[]', space=sflag, size = 0x4, offset = 0, fixed_abs, tag = 'sflag constant byte address 0x0 - dummy sync flag']
  #allocation16 [shape = 's32[]', space=sflag, size = 0x4, offset = 0, fixed_abs, tag = 'sflag constant byte address 0x0 - dummy sync flag']
  #allocation17 [shape = 'u32[]', space=smem, size = 0x4, offset = 0x44, fixed_abs, tag = 'smem constant byte address 0x44 - assertion arg 0']
  #allocation18 [shape = 'u32[]', space=smem, size = 0x4, offset = 0x48, fixed_abs, tag = 'smem constant byte address 0x48 - assertion arg 1']
  #allocation19 [shape = 's32[]', space=sflag, size = 0x4, offset = 0, fixed_abs, tag = 'sflag constant byte address 0x0 - dummy sync flag']
  #allocation20 [shape = 's32[]', space=sflag, size = 0x4, offset = 0, fixed_abs, tag = 'sflag constant byte address 0x0 - dummy sync flag']
  %s0 = inlined_call_operand.hbm [shape: f32[2,128], index: 0, kind: input, shape index: {}]
  %s1 = inlined_call_operand.hbm [shape: s8[128,128], index: 1, kind: input, shape index: {}]
  %s2 = inlined_call_operand.hbm [shape: s8[128,256], index: 2, kind: input, shape index: {}]
  %s3 = inlined_call_operand.hbm [shape: s8[256,512], index: 3, kind: input, shape index: {}]
  %s4 = inlined_call_operand.hbm [shape: s8[512,1024], index: 4, kind: input, shape index: {}]
  %s5 = inlined_call_operand.hbm [shape: s8[1024,896], index: 5, kind: input, shape index: {}]
  %s6 = inlined_call_operand.hbm [shape: f32[1,9216], index: 6, kind: input, shape index: {}]
  %s7 = inlined_call_operand.hbm [shape: bf16[2,896], index: 7, kind: output, shape index: {}]
  %s8 = sld [smem:[#allocation0]]
  $region58: #{tpu_custom_call.1} parent=0
    _
  %s10 = ssub.s32 1, %s8
  %s11 = scalar_select 0, %s10, %s8
  $region1: #{tpu_custom_call.1} parent=0
    #allocation5 [shape = 'u8[1024]{0}', space=vmem, size = 0x400, scoped, tag = 'input window, operand 0, single buffered']
    #allocation6 [shape = 's32[1]{0}', space=sflag, size = 0x4, scoped, tag = 'scoped memory for tpu_custom_call.1']
    #allocation7 [shape = 's32[1]{0}', space=sflag, size = 0x4, scoped, tag = 'scoped memory for tpu_custom_call.1']
    #allocation8 [shape = 'u8[16384]{0}', space=vmem, size = 0x4000, scoped, tag = 'input window, operand 1, single buffered']
    #allocation9 [shape = 's32[1]{0}', space=sflag, size = 0x4, scoped, tag = 'scoped memory for tpu_custom_call.1']
    #allocation10 [shape = 'u8[32768]{0}', space=vmem, size = 0x8000, scoped, tag = 'input window, operand 2, single buffered']
    #allocation11 [shape = 'u8[131072]{0}', space=vmem, size = 0x20000, scoped, tag = 'input window, operand 3, single buffered']
    #allocation12 [shape = 's32[1]{0}', space=sflag, size = 0x4, scoped, tag = 'scoped memory for tpu_custom_call.1']
    #allocation13 [shape = 'u8[36864]{0}', space=vmem, size = 0x9000, scoped, tag = 'input window, operand 6, single buffered']
    #allocation14 [shape = 'u8[3584]{0}', space=vmem, size = 0x1000, scoped, tag = 'output window, operand 0, single buffered']
    %12 = vsyncpa [#allocation6], 0
    %13 = vsyncpa [#allocation9], 0
    %14 = vsyncpa [#allocation12], 0
    %15 = vsyncpa [#allocation7], 0
    // Predicated region
    $region2: #{tpu_custom_call.1} parent=1 // pred_check
      _
    $region3: #{tpu_custom_call.1} parent=1 // pred_check_branch
      %17 = sbr.rel (0) target = $region5
    $region4: #{tpu_custom_call.1} parent=1 // pred_region
      %s19 = ssub.s32 32, 32
      %20 = vsyncadd [#allocation6], %s19
      %s22 = sshll.u32 [#allocation5], 4
      %s23 = int_to_ptr.vmem [resolvable:$true] %s22
      %25 = dma.hbm_to_vmem [thread:$0]  %s0, 32, %s23, [#allocation6]
    $region5: #{tpu_custom_call.1} parent=1 // pred_fallthru
      _
    // Predicated region
    $region6: #{tpu_custom_call.1} parent=1 // pred_check
      _
    $region7: #{tpu_custom_call.1} parent=1 // pred_check_branch
      %27 = sbr.rel (0) target = $region9
    $region8: #{tpu_custom_call.1} parent=1 // pred_region
      %s29 = ssub.s32 512, 512
      %30 = vsyncadd [#allocation9], %s29
      %s31 = sshll.u32 [#allocation8], 4
      %s32 = int_to_ptr.vmem [resolvable:$true] %s31
      %37 = dma.hbm_to_vmem [thread:$0]  %s1, 512, %s32, [#allocation9], 128, 128, 8
    $region9: #{tpu_custom_call.1} parent=1 // pred_fallthru
      _
    // Predicated region
    $region10: #{tpu_custom_call.1} parent=1 // pred_check
      _
    $region11: #{tpu_custom_call.1} parent=1 // pred_check_branch
      %39 = sbr.rel (0) target = $region13
    $region12: #{tpu_custom_call.1} parent=1 // pred_region
      %s41 = ssub.s32 1024, 1024
      %42 = vsyncadd [#allocation9], %s41
      %s43 = sshll.u32 [#allocation10], 4
      %s44 = int_to_ptr.vmem [resolvable:$true] %s43
      %49 = dma.hbm_to_vmem [thread:$0]  %s2, 1024, %s44, [#allocation9], 256, 256, 16
    $region13: #{tpu_custom_call.1} parent=1 // pred_fallthru
      _
    // Predicated region
    $region14: #{tpu_custom_call.1} parent=1 // pred_check
      _
    $region15: #{tpu_custom_call.1} parent=1 // pred_check_branch
      %51 = sbr.rel (0) target = $region17
    $region16: #{tpu_custom_call.1} parent=1 // pred_region
      %s53 = ssub.s32 4096, 4096
      %54 = vsyncadd [#allocation12], %s53
      %s55 = sshll.u32 [#allocation11], 4
      %s56 = int_to_ptr.vmem [resolvable:$true] %s55
      %61 = dma.hbm_to_vmem [thread:$0]  %s3, 4096, %s56, [#allocation12], 512, 512, 32
    $region17: #{tpu_custom_call.1} parent=1 // pred_fallthru
      _
    // Predicated region
    $region18: #{tpu_custom_call.1} parent=1 // pred_check
      _
    $region19: #{tpu_custom_call.1} parent=1 // pred_check_branch
      %63 = sbr.rel (0) target = $region21
    $region20: #{tpu_custom_call.1} parent=1 // pred_region
      %s65 = ssub.s32 1152, 1152
      %66 = vsyncadd [#allocation12], %s65
      %s68 = sshll.u32 [#allocation13], 4
      %s69 = int_to_ptr.vmem [resolvable:$true] %s68
      %71 = dma.hbm_to_vmem [thread:$0]  %s6, 1152, %s69, [#allocation12]
    $region21: #{tpu_custom_call.1} parent=1 // pred_fallthru
      _
    // Predicated region
    $region22: #{tpu_custom_call.1} parent=1 // pred_check
      _
    $region23: #{tpu_custom_call.1} parent=1 // pred_check_branch
      %73 = sbr.rel (0) target = $region25
    $region24: #{tpu_custom_call.1} parent=1 // pred_region
      %74 = dma.done [#allocation6], 32
    $region25: #{tpu_custom_call.1} parent=1 // pred_fallthru
      _
    // Predicated region
    $region26: #{tpu_custom_call.1} parent=1 // pred_check
      _
    $region27: #{tpu_custom_call.1} parent=1 // pred_check_branch
      %76 = sbr.rel (0) target = $region29
    $region28: #{tpu_custom_call.1} parent=1 // pred_region
      %77 = dma.done [#allocation9], 512
    $region29: #{tpu_custom_call.1} parent=1 // pred_fallthru
      _
    // Predicated region
    $region30: #{tpu_custom_call.1} parent=1 // pred_check
      _
    $region31: #{tpu_custom_call.1} parent=1 // pred_check_branch
      %79 = sbr.rel (0) target = $region33
    $region32: #{tpu_custom_call.1} parent=1 // pred_region
      %80 = dma.done [#allocation9], 1024
    $region33: #{tpu_custom_call.1} parent=1 // pred_fallthru
      _
    // Predicated region
    $region34: #{tpu_custom_call.1} parent=1 // pred_check
      _
    $region35: #{tpu_custom_call.1} parent=1 // pred_check_branch
      %82 = sbr.rel (0) target = $region37
    $region36: #{tpu_custom_call.1} parent=1 // pred_region
      %83 = dma.done [#allocation12], 4096
    $region37: #{tpu_custom_call.1} parent=1 // pred_fallthru
      _
    // Predicated region
    $region38: #{tpu_custom_call.1} parent=1 // pred_check
      _
    $region39: #{tpu_custom_call.1} parent=1 // pred_check_branch
      %85 = sbr.rel (0) target = $region41
    $region40: #{tpu_custom_call.1} parent=1 // pred_region
      %86 = dma.done [#allocation12], 1152
    $region41: #{tpu_custom_call.1} parent=1 // pred_fallthru
      _
    // Predicated region
    $region42: #{tpu_custom_call.1} parent=1 // pred_check
      _
    $region43: #{tpu_custom_call.1} parent=1 // pred_check_branch
      %89 = sbr.rel target = $region45
    $region44: #{tpu_custom_call.1} parent=1 // pred_region
      %90 = sst [smem:[#allocation17]] [#allocation16]
      %91 = sst [smem:[#allocation18]] [#allocation15]
    $region45: #{tpu_custom_call.1} parent=1 // pred_fallthru
      _
    %93 = shalt.err (0)
    %s95 = sshll.u32 [#allocation2], 4
    %s96 = int_to_ptr.vmem [resolvable:$true] %s95
    %98 = dma.hbm_to_vmem [thread:$0]  %s4, 16384, %s96, [#allocation4]
    %s99 = scalar_lea.sflag [#allocation4], 1
    // Predicated region
    $region46: #{tpu_custom_call.1} parent=1 // pred_check
      _
    $region47: #{tpu_custom_call.1} parent=1 // pred_check_branch
      %101 = sbr.rel target = $region49
    $region48: #{tpu_custom_call.1} parent=1 // pred_region
      %102 = sst [smem:[#allocation17]] [#allocation20]
      %103 = sst [smem:[#allocation18]] [#allocation19]
    $region49: #{tpu_custom_call.1} parent=1 // pred_fallthru
      _
    %105 = shalt.err (0)
    %s107 = sshll.u32 [#allocation3], 4
    %s108 = int_to_ptr.vmem [resolvable:$true] %s107
    %110 = dma.hbm_to_vmem [thread:$0]  %s5, 28672, %s108, %s99
    %v111 = vld [vmem:[#allocation5] sm:$0x3]
    %v112 = vld [vmem:[#allocation8] sm:$0xff]
    %v113 = vld [vmem:[#allocation8 + $0x8] sm:$0xff]
    %v114 = vld [vmem:[#allocation8 + $0x10] sm:$0xff]
    %v115 = vld [vmem:[#allocation8 + $0x18] sm:$0xff]
    %v116 = vunpack.c.l.s8.bf16 %v112
    %v117 = vunpack.c.h.s8.bf16 %v112
    %v118 = vunpack.c.l.s8.bf16 %v113
    %v119 = vunpack.c.h.s8.bf16 %v113
    %v120 = vunpack.c.l.s8.bf16 %v114
    %v121 = vunpack.c.h.s8.bf16 %v114
    %v122 = vunpack.c.l.s8.bf16 %v115
    %v123 = vunpack.c.h.s8.bf16 %v115
    %v124 = vpack.c.bf16 %v111, %v111
    %125 = vmatprep.subr.bf16.mxu0 0
    %126 = vmatpush1.bf16.msra.mxu0 %v116
    %127 = vmatprep.subr.bf16.mxu0 0
    %128 = vmatpush1.bf16.msra.mxu0 %v117
    %129 = vmatprep.subr.bf16.mxu0 0
    %130 = vmatpush1.bf16.msra.mxu0 %v118
    %131 = vmatprep.subr.bf16.mxu0 0
    %132 = vmatpush1.bf16.msra.mxu0 %v119
    %133 = vmatprep.subr.bf16.mxu0 0
    %134 = vmatpush1.bf16.msra.mxu0 %v120
    %135 = vmatprep.subr.bf16.mxu0 0
    %136 = vmatpush1.bf16.msra.mxu0 %v121
    %137 = vmatprep.subr.bf16.mxu0 0
    %138 = vmatpush1.bf16.msra.mxu0 %v122
    %139 = vmatprep.subr.bf16.mxu0 0
    %140 = vmatpush1.bf16.msra.mxu0 %v123
    %141 = vmatprep.subr.bf16.mxu0 0
    %142 = vmatpush1.bf16.msra.mxu0 0
    %143 = vmatprep.subr.bf16.mxu0 0
    %144 = vmatpush1.bf16.msra.mxu0 0
    %145 = vmatprep.subr.bf16.mxu0 0
    %146 = vmatpush1.bf16.msra.mxu0 0
    %147 = vmatprep.subr.bf16.mxu0 0
    %148 = vmatpush1.bf16.msra.mxu0 0
    %149 = vmatprep.subr.bf16.mxu0 0
    %150 = vmatpush1.bf16.msra.mxu0 0
    %151 = vmatprep.subr.bf16.mxu0 0
    %152 = vmatpush1.bf16.msra.mxu0 0
    %153 = vmatprep.subr.bf16.mxu0 0
    %154 = vmatpush1.bf16.msra.mxu0 0
    %155 = vmatprep.subr.bf16.mxu0 0
    %156 = vmatpush1.bf16.msra.mxu0 0
    %157 = vmatprep.mubr.bf16.mxu0 0
    %158 = vmatmul.mubr.bf16.gmra.mrb[0].mxu0 %v124
    %v159 = vpop.f32.mrb[0].mxu0
    %v160 = vadd.f32 0.0, %v159
    %v161 = vpop.f32.mrb[0].mxu0
    %v162 = vpop.f32.mrb[0].mxu0
    %v163 = vpop.f32.mrb[0].mxu0
    %164 = vdwg.mxu0
    %v165 = vld [vmem:[#allocation13] sm:$0x1]
    %v167 = vlaneseq
    %v168 = vshrl.u32 %v167, 7
    %v169 = vsub.s32 0, %v168
    %v170 = vrot.slane %v165, %v169
    %v172 = vmul.f32 %v160, %v170
    %v173 = vld [vmem:[#allocation13 + $0x1] sm:$0x1]
    %v175 = vlaneseq
    %v176 = vshrl.u32 %v175, 7
    %v177 = vsub.s32 0, %v176
    %v178 = vrot.slane %v173, %v177
    %v180 = vadd.f32 %v172, %v178
    %vm181 = vcmp.gt.f32.partialorder %v180, 0.0
    %v182 = vmul.f32 %v180, 0.2
    %v183 = vsel %vm181, %v180, %v182
    %v184 = vld [vmem:[#allocation10] sm:$0xff]
    %v185 = vld [vmem:[#allocation10 + $0x8] sm:$0xff]
    %v186 = vld [vmem:[#allocation10 + $0x10] sm:$0xff]
    %v187 = vld [vmem:[#allocation10 + $0x18] sm:$0xff]
    %v188 = vld [vmem:[#allocation10 + $0x20] sm:$0xff]
    %v189 = vld [vmem:[#allocation10 + $0x28] sm:$0xff]
    %v190 = vld [vmem:[#allocation10 + $0x30] sm:$0xff]
    %v191 = vld [vmem:[#allocation10 + $0x38] sm:$0xff]
    %v192 = vunpack.c.l.s8.bf16 %v184
    %v193 = vunpack.c.l.s8.bf16 %v185
    %v194 = vunpack.c.h.s8.bf16 %v184
    %v195 = vunpack.c.h.s8.bf16 %v185
    %v196 = vunpack.c.l.s8.bf16 %v186
    %v197 = vunpack.c.l.s8.bf16 %v187
    %v198 = vunpack.c.h.s8.bf16 %v186
    %v199 = vunpack.c.h.s8.bf16 %v187
    %v200 = vunpack.c.l.s8.bf16 %v188
    %v201 = vunpack.c.l.s8.bf16 %v189
    %v202 = vunpack.c.h.s8.bf16 %v188
    %v203 = vunpack.c.h.s8.bf16 %v189
    %v204 = vunpack.c.l.s8.bf16 %v190
    %v205 = vunpack.c.l.s8.bf16 %v191
    %v206 = vunpack.c.h.s8.bf16 %v190
    %v207 = vunpack.c.h.s8.bf16 %v191
    %v208 = vpack.c.bf16 %v183, %v183
    %209 = vmatprep.subr.bf16.mxu0 %v193
    %210 = vmatpush1.bf16.msra.mxu0 %v192
    %211 = vmatprep.subr.bf16.mxu0 %v195
    %212 = vmatpush1.bf16.msra.mxu0 %v194
    %213 = vmatprep.subr.bf16.mxu0 %v197
    %214 = vmatpush1.bf16.msra.mxu0 %v196
    %215 = vmatprep.subr.bf16.mxu0 %v199
    %216 = vmatpush1.bf16.msra.mxu0 %v198
    %217 = vmatprep.subr.bf16.mxu0 %v201
    %218 = vmatpush1.bf16.msra.mxu0 %v200
    %219 = vmatprep.subr.bf16.mxu0 %v203
    %220 = vmatpush1.bf16.msra.mxu0 %v202
    %221 = vmatprep.subr.bf16.mxu0 %v205
    %222 = vmatpush1.bf16.msra.mxu0 %v204
    %223 = vmatprep.subr.bf16.mxu0 %v207
    %224 = vmatpush1.bf16.msra.mxu0 %v206
    %225 = vmatprep.subr.bf16.mxu0 0
    %226 = vmatpush1.bf16.msra.mxu0 0
    %227 = vmatprep.subr.bf16.mxu0 0
    %228 = vmatpush1.bf16.msra.mxu0 0
    %229 = vmatprep.subr.bf16.mxu0 0
    %230 = vmatpush1.bf16.msra.mxu0 0
    %231 = vmatprep.subr.bf16.mxu0 0
    %232 = vmatpush1.bf16.msra.mxu0 0
    %233 = vmatprep.subr.bf16.mxu0 0
    %234 = vmatpush1.bf16.msra.mxu0 0
    %235 = vmatprep.subr.bf16.mxu0 0
    %236 = vmatpush1.bf16.msra.mxu0 0
    %237 = vmatprep.subr.bf16.mxu0 0
    %238 = vmatpush1.bf16.msra.mxu0 0
    %239 = vmatprep.subr.bf16.mxu0 0
    %240 = vmatpush1.bf16.msra.mxu0 0
    %241 = vmatprep.mubr.bf16.mxu0 0
    %242 = vmatmul.mubr.bf16.gmra.mrb[0].mxu0 %v208
    %v243 = vpop.f32.mrb[0].mxu0
    %v244 = vadd.f32 0.0, %v243
    %v245 = vpop.f32.mrb[0].mxu0
    %v246 = vadd.f32 0.0, %v245
    %v247 = vpop.f32.mrb[0].mxu0
    %v248 = vpop.f32.mrb[0].mxu0
    %249 = vdwg.mxu0
    %v250 = vld [vmem:[#allocation13 + $0x2] sm:$0x3]
    %v252 = vlaneseq
    %v253 = vshrl.u32 %v252, 7
    %v254 = vsub.s32 0, %v253
    %v255 = vrot.slane %v250, %v254
    %v256 = vlaneseq
    %v257 = vshrl.u32 %v256, 7
    %v258 = vsub.s32 1, %v257
    %v259 = vrot.slane %v250, %v258
    %v262 = vmul.f32 %v244, %v255
    %v263 = vmul.f32 %v246, %v259
    %v264 = vld [vmem:[#allocation13 + $0x4] sm:$0x3]
    %v266 = vlaneseq
    %v267 = vshrl.u32 %v266, 7
    %v268 = vsub.s32 0, %v267
    %v269 = vrot.slane %v264, %v268
    %v270 = vlaneseq
    %v271 = vshrl.u32 %v270, 7
    %v272 = vsub.s32 1, %v271
    %v273 = vrot.slane %v264, %v272
    %v276 = vadd.f32 %v262, %v269
    %v277 = vadd.f32 %v263, %v273
    %vm278 = vcmask 1041408
    %v279 = vsel %vm278, %v276, 0.0
    %v280 = vrot.slane %v279, 4
    %v281 = vadd.f32 %v279, %v280
    %v282 = vrot.slane %v281, 2
    %v283 = vadd.f32 %v281, %v282
    %v284 = vrot.slane %v283, 1
    %v285 = vadd.f32 %v283, %v284
    %v286 = vsel %vm278, %v277, 0.0
    %v287 = vrot.slane %v286, 4
    %v288 = vadd.f32 %v286, %v287
    %v289 = vrot.slane %v288, 2
    %v290 = vadd.f32 %v288, %v289
    %v291 = vrot.slane %v290, 1
    %v292 = vadd.f32 %v290, %v291
    %v293 = vrcp.pop 2.0
    %v294 = vmul.f32 %v285, %v293
    %v295 = vmul.f32 %v292, %v293
    %v296 = vmul.f32 %v276, %v276
    %v297 = vmul.f32 %v277, %v277
    %v298 = vsel %vm278, %v296, 0.0
    %v299 = vrot.slane %v298, 4
    %v300 = vadd.f32 %v298, %v299
    %v301 = vrot.slane %v300, 2
    %v302 = vadd.f32 %v300, %v301
    %v303 = vrot.slane %v302, 1
    %v304 = vadd.f32 %v302, %v303
    %v305 = vsel %vm278, %v297, 0.0
    %v306 = vrot.slane %v305, 4
    %v307 = vadd.f32 %v305, %v306
    %v308 = vrot.slane %v307, 2
    %v309 = vadd.f32 %v307, %v308
    %v310 = vrot.slane %v309, 1
    %v311 = vadd.f32 %v309, %v310
    %v312 = vmul.f32 %v304, %v293
    %v313 = vmul.f32 %v311, %v293
    %v314 = vmul.f32 %v294, %v294
    %v315 = vmul.f32 %v295, %v295
    %v316 = vsub.f32 %v312, %v314
    %v317 = vsub.f32 %v313, %v315
    %v318 = vmax.f32 %v316, 0.0
    %v319 = vmax.f32 %v317, 0.0
    %v320 = vld [vmem:[#allocation13 + $0x6] sm:$0x3]
    %v321 = vadd.f32 %v318, 1e-05
    %v322 = vadd.f32 %v319, 1e-05
    %v323 = vrsqrt.pop %v321
    %v324 = vrsqrt.pop %v322
    %v327 = vcombine.low %v323, %v324
    %v329 = vunpack.c.l.s4 1966171168
    %v330 = vunpack.c.0.s8 %v329
    %v331 = vlaneseq
    %v332 = vshrl.u32 %v331, 7
    %v333 = vsub.s32 %v330, %v332
    %v334 = vrot.slane %v327, %v333
    %v336 = vunpack.c.l.s4 1966171168
    %v337 = vunpack.c.0.s8 %v336
    %v338 = vlaneseq
    %v339 = vshrl.u32 %v338, 7
    %v340 = vsub.s32 %v337, %v339
    %v341 = vrot.slane %v334, %v340
    %v343 = vmul.f32 %v320, %v341
    %v344 = vld [vmem:[#allocation13 + $0x8] sm:$0x3]
    %v346 = vlaneseq
    %v347 = vshrl.u32 %v346, 7
    %v348 = vsub.s32 0, %v347
    %v349 = vrot.slane %v343, %v348
    %v350 = vlaneseq
    %v351 = vshrl.u32 %v350, 7
    %v352 = vsub.s32 1, %v351
    %v353 = vrot.slane %v343, %v352
    %v356 = vmul.f32 %v294, %v349
    %v357 = vmul.f32 %v295, %v353
    %v360 = vcombine.low %v356, %v357
    %v362 = vunpack.c.l.s4 1966171168
    %v363 = vunpack.c.0.s8 %v362
    %v364 = vlaneseq
    %v365 = vshrl.u32 %v364, 7
    %v366 = vsub.s32 %v363, %v365
    %v367 = vrot.slane %v360, %v366
    %v369 = vunpack.c.l.s4 1966171168
    %v370 = vunpack.c.0.s8 %v369
    %v371 = vlaneseq
    %v372 = vshrl.u32 %v371, 7
    %v373 = vsub.s32 %v370, %v372
    %v374 = vrot.slane %v367, %v373
    %v376 = vsub.f32 %v344, %v374
    %v377 = vmul.f32 %v276, %v349
    %v378 = vmul.f32 %v277, %v353
    %v380 = vlaneseq
    %v381 = vshrl.u32 %v380, 7
    %v382 = vsub.s32 0, %v381
    %v383 = vrot.slane %v376, %v382
    %v384 = vlaneseq
    %v385 = vshrl.u32 %v384, 7
    %v386 = vsub.s32 1, %v385
    %v387 = vrot.slane %v376, %v386
    %v390 = vadd.f32 %v377, %v383
    %v391 = vadd.f32 %v378, %v387
    %vm392 = vcmp.gt.f32.partialorder %v390, 0.0
    %vm393 = vcmp.gt.f32.partialorder %v391, 0.0
    %v394 = vmul.f32 %v390, 0.2
    %v395 = vmul.f32 %v391, 0.2
    %v396 = vsel %vm392, %v390, %v394
    %v397 = vsel %vm393, %v391, %v395
    %v398 = vld [vmem:[#allocation11] sm:$0xff]
    %v399 = vld [vmem:[#allocation11 + $0x8] sm:$0xff]
    %v400 = vld [vmem:[#allocation11 + $0x10] sm:$0xff]
    %v401 = vld [vmem:[#allocation11 + $0x18] sm:$0xff]
    %v402 = vld [vmem:[#allocation11 + $0x20] sm:$0xff]
    %v403 = vld [vmem:[#allocation11 + $0x28] sm:$0xff]
    %v404 = vld [vmem:[#allocation11 + $0x30] sm:$0xff]
    %v405 = vld [vmem:[#allocation11 + $0x38] sm:$0xff]
    %v406 = vld [vmem:[#allocation11 + $0x40] sm:$0xff]
    %v407 = vld [vmem:[#allocation11 + $0x48] sm:$0xff]
    %v408 = vld [vmem:[#allocation11 + $0x50] sm:$0xff]
    %v409 = vld [vmem:[#allocation11 + $0x58] sm:$0xff]
    %v410 = vld [vmem:[#allocation11 + $0x60] sm:$0xff]
    %v411 = vld [vmem:[#allocation11 + $0x68] sm:$0xff]
    %v412 = vld [vmem:[#allocation11 + $0x70] sm:$0xff]
    %v413 = vld [vmem:[#allocation11 + $0x78] sm:$0xff]
    %v414 = vld [vmem:[#allocation11 + $0x80] sm:$0xff]
    %v415 = vld [vmem:[#allocation11 + $0x88] sm:$0xff]
    %v416 = vld [vmem:[#allocation11 + $0x90] sm:$0xff]
    %v417 = vld [vmem:[#allocation11 + $0x98] sm:$0xff]
    %v418 = vld [vmem:[#allocation11 + $0xa0] sm:$0xff]
    %v419 = vld [vmem:[#allocation11 + $0xa8] sm:$0xff]
    %v420 = vld [vmem:[#allocation11 + $0xb0] sm:$0xff]
    %v421 = vld [vmem:[#allocation11 + $0xb8] sm:$0xff]
    %v422 = vld [vmem:[#allocation11 + $0xc0] sm:$0xff]
    %v423 = vld [vmem:[#allocation11 + $0xc8] sm:$0xff]
    %v424 = vld [vmem:[#allocation11 + $0xd0] sm:$0xff]
    %v425 = vld [vmem:[#allocation11 + $0xd8] sm:$0xff]
    %v426 = vld [vmem:[#allocation11 + $0xe0] sm:$0xff]
    %v427 = vld [vmem:[#allocation11 + $0xe8] sm:$0xff]
    %v428 = vld [vmem:[#allocation11 + $0xf0] sm:$0xff]
    %v429 = vld [vmem:[#allocation11 + $0xf8] sm:$0xff]
    %v430 = vunpack.c.l.s8.bf16 %v398
    %v431 = vunpack.c.l.s8.bf16 %v399
    %v432 = vunpack.c.l.s8.bf16 %v400
    %v433 = vunpack.c.l.s8.bf16 %v401
    %v434 = vunpack.c.h.s8.bf16 %v398
    %v435 = vunpack.c.h.s8.bf16 %v399
    %v436 = vunpack.c.h.s8.bf16 %v400
    %v437 = vunpack.c.h.s8.bf16 %v401
    %v438 = vunpack.c.l.s8.bf16 %v402
    %v439 = vunpack.c.l.s8.bf16 %v403
    %v440 = vunpack.c.l.s8.bf16 %v404
    %v441 = vunpack.c.l.s8.bf16 %v405
    %v442 = vunpack.c.h.s8.bf16 %v402
    %v443 = vunpack.c.h.s8.bf16 %v403
    %v444 = vunpack.c.h.s8.bf16 %v404
    %v445 = vunpack.c.h.s8.bf16 %v405
    %v446 = vunpack.c.l.s8.bf16 %v406
    %v447 = vunpack.c.l.s8.bf16 %v407
    %v448 = vunpack.c.l.s8.bf16 %v408
    %v449 = vunpack.c.l.s8.bf16 %v409
    %v450 = vunpack.c.h.s8.bf16 %v406
    %v451 = vunpack.c.h.s8.bf16 %v407
    %v452 = vunpack.c.h.s8.bf16 %v408
    %v453 = vunpack.c.h.s8.bf16 %v409
    %v454 = vunpack.c.l.s8.bf16 %v410
    %v455 = vunpack.c.l.s8.bf16 %v411
    %v456 = vunpack.c.l.s8.bf16 %v412
    %v457 = vunpack.c.l.s8.bf16 %v413
    %v458 = vunpack.c.h.s8.bf16 %v410
    %v459 = vunpack.c.h.s8.bf16 %v411
    %v460 = vunpack.c.h.s8.bf16 %v412
    %v461 = vunpack.c.h.s8.bf16 %v413
    %v462 = vunpack.c.l.s8.bf16 %v414
    %v463 = vunpack.c.l.s8.bf16 %v415
    %v464 = vunpack.c.l.s8.bf16 %v416
    %v465 = vunpack.c.l.s8.bf16 %v417
    %v466 = vunpack.c.h.s8.bf16 %v414
    %v467 = vunpack.c.h.s8.bf16 %v415
    %v468 = vunpack.c.h.s8.bf16 %v416
    %v469 = vunpack.c.h.s8.bf16 %v417
    %v470 = vunpack.c.l.s8.bf16 %v418
    %v471 = vunpack.c.l.s8.bf16 %v419
    %v472 = vunpack.c.l.s8.bf16 %v420
    %v473 = vunpack.c.l.s8.bf16 %v421
    %v474 = vunpack.c.h.s8.bf16 %v418
    %v475 = vunpack.c.h.s8.bf16 %v419
    %v476 = vunpack.c.h.s8.bf16 %v420
    %v477 = vunpack.c.h.s8.bf16 %v421
    %v478 = vunpack.c.l.s8.bf16 %v422
    %v479 = vunpack.c.l.s8.bf16 %v423
    %v480 = vunpack.c.l.s8.bf16 %v424
    %v481 = vunpack.c.l.s8.bf16 %v425
    %v482 = vunpack.c.h.s8.bf16 %v422
    %v483 = vunpack.c.h.s8.bf16 %v423
    %v484 = vunpack.c.h.s8.bf16 %v424
    %v485 = vunpack.c.h.s8.bf16 %v425
    %v486 = vunpack.c.l.s8.bf16 %v426
    %v487 = vunpack.c.l.s8.bf16 %v427
    %v488 = vunpack.c.l.s8.bf16 %v428
    %v489 = vunpack.c.l.s8.bf16 %v429
    %v490 = vunpack.c.h.s8.bf16 %v426
    %v491 = vunpack.c.h.s8.bf16 %v427
    %v492 = vunpack.c.h.s8.bf16 %v428
    %v493 = vunpack.c.h.s8.bf16 %v429
    %v494 = vpack.c.bf16 %v396, %v396
    %v495 = vpack.c.bf16 %v397, %v397
    %496 = vmatprep.subr.bf16.mxu0 %v431
    %497 = vmatpush1.bf16.msra.mxu0 %v430
    %498 = vmatprep.subr.bf16.mxu0 %v435
    %499 = vmatpush1.bf16.msra.mxu0 %v434
    %500 = vmatprep.subr.bf16.mxu0 %v439
    %501 = vmatpush1.bf16.msra.mxu0 %v438
    %502 = vmatprep.subr.bf16.mxu0 %v443
    %503 = vmatpush1.bf16.msra.mxu0 %v442
    %504 = vmatprep.subr.bf16.mxu0 %v447
    %505 = vmatpush1.bf16.msra.mxu0 %v446
    %506 = vmatprep.subr.bf16.mxu0 %v451
    %507 = vmatpush1.bf16.msra.mxu0 %v450
    %508 = vmatprep.subr.bf16.mxu0 %v455
    %509 = vmatpush1.bf16.msra.mxu0 %v454
    %510 = vmatprep.subr.bf16.mxu0 %v459
    %511 = vmatpush1.bf16.msra.mxu0 %v458
    %512 = vmatprep.subr.bf16.mxu0 %v463
    %513 = vmatpush1.bf16.msra.mxu0 %v462
    %514 = vmatprep.subr.bf16.mxu0 %v467
    %515 = vmatpush1.bf16.msra.mxu0 %v466
    %516 = vmatprep.subr.bf16.mxu0 %v471
    %517 = vmatpush1.bf16.msra.mxu0 %v470
    %518 = vmatprep.subr.bf16.mxu0 %v475
    %519 = vmatpush1.bf16.msra.mxu0 %v474
    %520 = vmatprep.subr.bf16.mxu0 %v479
    %521 = vmatpush1.bf16.msra.mxu0 %v478
    %522 = vmatprep.subr.bf16.mxu0 %v483
    %523 = vmatpush1.bf16.msra.mxu0 %v482
    %524 = vmatprep.subr.bf16.mxu0 %v487
    %525 = vmatpush1.bf16.msra.mxu0 %v486
    %526 = vmatprep.subr.bf16.mxu0 %v491
    %527 = vmatpush1.bf16.msra.mxu0 %v490
    %528 = vmatprep.mubr.bf16.mxu0 %v495
    %529 = vmatmul.mubr.bf16.gmra.mrb[0].mxu0 %v494
    %v530 = vpop.f32.mrb[0].mxu0
    %v531 = vadd.f32 0.0, %v530
    %v532 = vpop.f32.mrb[0].mxu0
    %v533 = vadd.f32 0.0, %v532
    %v534 = vpop.f32.mrb[0].mxu0
    %v535 = vpop.f32.mrb[0].mxu0
    %536 = vdwg.mxu0
    %537 = vmatprep.subr.bf16.mxu0 %v433
    %538 = vmatpush1.bf16.msra.mxu0 %v432
    %539 = vmatprep.subr.bf16.mxu0 %v437
    %540 = vmatpush1.bf16.msra.mxu0 %v436
    %541 = vmatprep.subr.bf16.mxu0 %v441
    %542 = vmatpush1.bf16.msra.mxu0 %v440
    %543 = vmatprep.subr.bf16.mxu0 %v445
    %544 = vmatpush1.bf16.msra.mxu0 %v444
    %545 = vmatprep.subr.bf16.mxu0 %v449
    %546 = vmatpush1.bf16.msra.mxu0 %v448
    %547 = vmatprep.subr.bf16.mxu0 %v453
    %548 = vmatpush1.bf16.msra.mxu0 %v452
    %549 = vmatprep.subr.bf16.mxu0 %v457
    %550 = vmatpush1.bf16.msra.mxu0 %v456
    %551 = vmatprep.subr.bf16.mxu0 %v461
    %552 = vmatpush1.bf16.msra.mxu0 %v460
    %553 = vmatprep.subr.bf16.mxu0 %v465
    %554 = vmatpush1.bf16.msra.mxu0 %v464
    %555 = vmatprep.subr.bf16.mxu0 %v469
    %556 = vmatpush1.bf16.msra.mxu0 %v468
    %557 = vmatprep.subr.bf16.mxu0 %v473
    %558 = vmatpush1.bf16.msra.mxu0 %v472
    %559 = vmatprep.subr.bf16.mxu0 %v477
    %560 = vmatpush1.bf16.msra.mxu0 %v476
    %561 = vmatprep.subr.bf16.mxu0 %v481
    %562 = vmatpush1.bf16.msra.mxu0 %v480
    %563 = vmatprep.subr.bf16.mxu0 %v485
    %564 = vmatpush1.bf16.msra.mxu0 %v484
    %565 = vmatprep.subr.bf16.mxu0 %v489
    %566 = vmatpush1.bf16.msra.mxu0 %v488
    %567 = vmatprep.subr.bf16.mxu0 %v493
    %568 = vmatpush1.bf16.msra.mxu0 %v492
    %569 = vmatprep.mubr.bf16.mxu0 %v495
    %570 = vmatmul.mubr.bf16.gmra.mrb[0].mxu0 %v494
    %v571 = vpop.f32.mrb[0].mxu0
    %v572 = vadd.f32 0.0, %v571
    %v573 = vpop.f32.mrb[0].mxu0
    %v574 = vadd.f32 0.0, %v573
    %v575 = vpop.f32.mrb[0].mxu0
    %v576 = vpop.f32.mrb[0].mxu0
    %577 = vdwg.mxu0
    %v578 = vld [vmem:[#allocation13 + $0xa] sm:$0xf]
    %v580 = vlaneseq
    %v581 = vshrl.u32 %v580, 7
    %v582 = vsub.s32 0, %v581
    %v583 = vrot.slane %v578, %v582
    %v584 = vlaneseq
    %v585 = vshrl.u32 %v584, 7
    %v586 = vsub.s32 1, %v585
    %v587 = vrot.slane %v578, %v586
    %v588 = vlaneseq
    %v589 = vshrl.u32 %v588, 7
    %v590 = vsub.s32 2, %v589
    %v591 = vrot.slane %v578, %v590
    %v592 = vlaneseq
    %v593 = vshrl.u32 %v592, 7
    %v594 = vsub.s32 3, %v593
    %v595 = vrot.slane %v578, %v594
    %v600 = vmul.f32 %v531, %v583
    %v601 = vmul.f32 %v533, %v587
    %v602 = vmul.f32 %v572, %v591
    %v603 = vmul.f32 %v574, %v595
    %v604 = vld [vmem:[#allocation13 + $0xe] sm:$0xf]
    %v606 = vlaneseq
    %v607 = vshrl.u32 %v606, 7
    %v608 = vsub.s32 0, %v607
    %v609 = vrot.slane %v604, %v608
    %v610 = vlaneseq
    %v611 = vshrl.u32 %v610, 7
    %v612 = vsub.s32 1, %v611
    %v613 = vrot.slane %v604, %v612
    %v614 = vlaneseq
    %v615 = vshrl.u32 %v614, 7
    %v616 = vsub.s32 2, %v615
    %v617 = vrot.slane %v604, %v616
    %v618 = vlaneseq
    %v619 = vshrl.u32 %v618, 7
    %v620 = vsub.s32 3, %v619
    %v621 = vrot.slane %v604, %v620
    %v626 = vadd.f32 %v600, %v609
    %v627 = vadd.f32 %v601, %v613
    %v628 = vadd.f32 %v602, %v617
    %v629 = vadd.f32 %v603, %v621
    %v630 = vsel %vm278, %v626, 0.0
    %v631 = vrot.slane %v630, 4
    %v632 = vadd.f32 %v630, %v631
    %v633 = vrot.slane %v632, 2
    %v634 = vadd.f32 %v632, %v633
    %v635 = vrot.slane %v634, 1
    %v636 = vadd.f32 %v634, %v635
    %v637 = vsel %vm278, %v627, 0.0
    %v638 = vrot.slane %v637, 4
    %v639 = vadd.f32 %v637, %v638
    %v640 = vrot.slane %v639, 2
    %v641 = vadd.f32 %v639, %v640
    %v642 = vrot.slane %v641, 1
    %v643 = vadd.f32 %v641, %v642
    %v644 = vsel %vm278, %v628, 0.0
    %v645 = vrot.slane %v644, 4
    %v646 = vadd.f32 %v644, %v645
    %v647 = vrot.slane %v646, 2
    %v648 = vadd.f32 %v646, %v647
    %v649 = vrot.slane %v648, 1
    %v650 = vadd.f32 %v648, %v649
    %v651 = vsel %vm278, %v629, 0.0
    %v652 = vrot.slane %v651, 4
    %v653 = vadd.f32 %v651, %v652
    %v654 = vrot.slane %v653, 2
    %v655 = vadd.f32 %v653, %v654
    %v656 = vrot.slane %v655, 1
    %v657 = vadd.f32 %v655, %v656
    %v658 = vmul.f32 %v636, %v293
    %v659 = vmul.f32 %v643, %v293
    %v660 = vmul.f32 %v650, %v293
    %v661 = vmul.f32 %v657, %v293
    %v662 = vmul.f32 %v626, %v626
    %v663 = vmul.f32 %v627, %v627
    %v664 = vmul.f32 %v628, %v628
    %v665 = vmul.f32 %v629, %v629
    %v666 = vsel %vm278, %v662, 0.0
    %v667 = vrot.slane %v666, 4
    %v668 = vadd.f32 %v666, %v667
    %v669 = vrot.slane %v668, 2
    %v670 = vadd.f32 %v668, %v669
    %v671 = vrot.slane %v670, 1
    %v672 = vadd.f32 %v670, %v671
    %v673 = vsel %vm278, %v663, 0.0
    %v674 = vrot.slane %v673, 4
    %v675 = vadd.f32 %v673, %v674
    %v676 = vrot.slane %v675, 2
    %v677 = vadd.f32 %v675, %v676
    %v678 = vrot.slane %v677, 1
    %v679 = vadd.f32 %v677, %v678
    %v680 = vsel %vm278, %v664, 0.0
    %v681 = vrot.slane %v680, 4
    %v682 = vadd.f32 %v680, %v681
    %v683 = vrot.slane %v682, 2
    %v684 = vadd.f32 %v682, %v683
    %v685 = vrot.slane %v684, 1
    %v686 = vadd.f32 %v684, %v685
    %v687 = vsel %vm278, %v665, 0.0
    %v688 = vrot.slane %v687, 4
    %v689 = vadd.f32 %v687, %v688
    %v690 = vrot.slane %v689, 2
    %v691 = vadd.f32 %v689, %v690
    %v692 = vrot.slane %v691, 1
    %v693 = vadd.f32 %v691, %v692
    %v694 = vmul.f32 %v672, %v293
    %v695 = vmul.f32 %v679, %v293
    %v696 = vmul.f32 %v686, %v293
    %v697 = vmul.f32 %v693, %v293
    %v698 = vmul.f32 %v658, %v658
    %v699 = vmul.f32 %v659, %v659
    %v700 = vmul.f32 %v660, %v660
    %v701 = vmul.f32 %v661, %v661
    %v702 = vsub.f32 %v694, %v698
    %v703 = vsub.f32 %v695, %v699
    %v704 = vsub.f32 %v696, %v700
    %v705 = vsub.f32 %v697, %v701
    %v706 = vmax.f32 %v702, 0.0
    %v707 = vmax.f32 %v703, 0.0
    %v708 = vmax.f32 %v704, 0.0
    %v709 = vmax.f32 %v705, 0.0
    %v710 = vld [vmem:[#allocation13 + $0x12] sm:$0xf]
    %v711 = vadd.f32 %v706, 1e-05
    %v712 = vadd.f32 %v707, 1e-05
    %v713 = vadd.f32 %v708, 1e-05
    %v714 = vadd.f32 %v709, 1e-05
    %v715 = vrsqrt.pop %v711
    %v716 = vrsqrt.pop %v712
    %v717 = vrsqrt.pop %v713
    %v718 = vrsqrt.pop %v714
    %v723 = vcombine.low %v715, %v716
    %v724 = vcombine.low %v717, %v718
    %v726 = vunpack.c.l.s4 1966171168
    %v727 = vunpack.c.0.s8 %v726
    %v728 = vlaneseq
    %v729 = vshrl.u32 %v728, 7
    %v730 = vsub.s32 %v727, %v729
    %v731 = vrot.slane %v723, %v730
    %v733 = vunpack.c.l.s4 1966171168
    %v734 = vunpack.c.0.s8 %v733
    %v735 = vlaneseq
    %v736 = vshrl.u32 %v735, 7
    %v737 = vsub.s32 %v734, %v736
    %v738 = vrot.slane %v724, %v737
    %v739 = vcombine.low %v731, %v738
    %v741 = vunpack.c.l.s4 1966171168
    %v742 = vunpack.c.0.s8 %v741
    %v743 = vlaneseq
    %v744 = vshrl.u32 %v743, 7
    %v745 = vsub.s32 %v742, %v744
    %v746 = vrot.slane %v739, %v745
    %v748 = vmul.f32 %v710, %v746
    %v749 = vld [vmem:[#allocation13 + $0x16] sm:$0xf]
    %v751 = vlaneseq
    %v752 = vshrl.u32 %v751, 7
    %v753 = vsub.s32 0, %v752
    %v754 = vrot.slane %v748, %v753
    %v755 = vlaneseq
    %v756 = vshrl.u32 %v755, 7
    %v757 = vsub.s32 1, %v756
    %v758 = vrot.slane %v748, %v757
    %v759 = vlaneseq
    %v760 = vshrl.u32 %v759, 7
    %v761 = vsub.s32 2, %v760
    %v762 = vrot.slane %v748, %v761
    %v763 = vlaneseq
    %v764 = vshrl.u32 %v763, 7
    %v765 = vsub.s32 3, %v764
    %v766 = vrot.slane %v748, %v765
    %v771 = vmul.f32 %v658, %v754
    %v772 = vmul.f32 %v659, %v758
    %v773 = vmul.f32 %v660, %v762
    %v774 = vmul.f32 %v661, %v766
    %v779 = vcombine.low %v771, %v772
    %v780 = vcombine.low %v773, %v774
    %v782 = vunpack.c.l.s4 1966171168
    %v783 = vunpack.c.0.s8 %v782
    %v784 = vlaneseq
    %v785 = vshrl.u32 %v784, 7
    %v786 = vsub.s32 %v783, %v785
    %v787 = vrot.slane %v779, %v786
    %v789 = vunpack.c.l.s4 1966171168
    %v790 = vunpack.c.0.s8 %v789
    %v791 = vlaneseq
    %v792 = vshrl.u32 %v791, 7
    %v793 = vsub.s32 %v790, %v792
    %v794 = vrot.slane %v780, %v793
    %v795 = vcombine.low %v787, %v794
    %v797 = vunpack.c.l.s4 1966171168
    %v798 = vunpack.c.0.s8 %v797
    %v799 = vlaneseq
    %v800 = vshrl.u32 %v799, 7
    %v801 = vsub.s32 %v798, %v800
    %v802 = vrot.slane %v795, %v801
    %v804 = vsub.f32 %v749, %v802
    %v805 = vmul.f32 %v626, %v754
    %v806 = vmul.f32 %v627, %v758
    %v807 = vmul.f32 %v628, %v762
    %v808 = vmul.f32 %v629, %v766
    %v810 = vlaneseq
    %v811 = vshrl.u32 %v810, 7
    %v812 = vsub.s32 0, %v811
    %v813 = vrot.slane %v804, %v812
    %v814 = vlaneseq
    %v815 = vshrl.u32 %v814, 7
    %v816 = vsub.s32 1, %v815
    %v817 = vrot.slane %v804, %v816
    %v818 = vlaneseq
    %v819 = vshrl.u32 %v818, 7
    %v820 = vsub.s32 2, %v819
    %v821 = vrot.slane %v804, %v820
    %v822 = vlaneseq
    %v823 = vshrl.u32 %v822, 7
    %v824 = vsub.s32 3, %v823
    %v825 = vrot.slane %v804, %v824
    %v830 = vadd.f32 %v805, %v813
    %v831 = vadd.f32 %v806, %v817
    %v832 = vadd.f32 %v807, %v821
    %v833 = vadd.f32 %v808, %v825
    %vm834 = vcmp.gt.f32.partialorder %v830, 0.0
    %vm835 = vcmp.gt.f32.partialorder %v831, 0.0
    %vm836 = vcmp.gt.f32.partialorder %v832, 0.0
    %vm837 = vcmp.gt.f32.partialorder %v833, 0.0
    %v838 = vmul.f32 %v830, 0.2
    %v839 = vmul.f32 %v831, 0.2
    %v840 = vmul.f32 %v832, 0.2
    %v841 = vmul.f32 %v833, 0.2
    %v842 = vsel %vm834, %v830, %v838
    %v843 = vsel %vm835, %v831, %v839
    %v844 = vsel %vm836, %v832, %v840
    %v845 = vsel %vm837, %v833, %v841
    %s846 = smul.u32 2, 64
    %s847 = smul.u32 %s846, 8
    %s848 = sshll.u32 %s847, 4
    %849 = dma.done [#allocation4], %s848
    %v850 = vld [vmem:[#allocation2] sm:$0xff]
    %v851 = vld [vmem:[#allocation2 + $0x8] sm:$0xff]
    %v852 = vld [vmem:[#allocation2 + $0x10] sm:$0xff]
    %v853 = vld [vmem:[#allocation2 + $0x18] sm:$0xff]
    %v854 = vld [vmem:[#allocation2 + $0x20] sm:$0xff]
    %v855 = vld [vmem:[#allocation2 + $0x28] sm:$0xff]
    %v856 = vld [vmem:[#allocation2 + $0x30] sm:$0xff]
    %v857 = vld [vmem:[#allocation2 + $0x38] sm:$0xff]
    %v858 = vld [vmem:[#allocation2 + $0x40] sm:$0xff]
    %v859 = vld [vmem:[#allocation2 + $0x48] sm:$0xff]
    %v860 = vld [vmem:[#allocation2 + $0x50] sm:$0xff]
    %v861 = vld [vmem:[#allocation2 + $0x58] sm:$0xff]
    %v862 = vld [vmem:[#allocation2 + $0x60] sm:$0xff]
    %v863 = vld [vmem:[#allocation2 + $0x68] sm:$0xff]
    %v864 = vld [vmem:[#allocation2 + $0x70] sm:$0xff]
    %v865 = vld [vmem:[#allocation2 + $0x78] sm:$0xff]
    %v866 = vld [vmem:[#allocation2 + $0x80] sm:$0xff]
    %v867 = vld [vmem:[#allocation2 + $0x88] sm:$0xff]
    %v868 = vld [vmem:[#allocation2 + $0x90] sm:$0xff]
    %v869 = vld [vmem:[#allocation2 + $0x98] sm:$0xff]
    %v870 = vld [vmem:[#allocation2 + $0xa0] sm:$0xff]
    %v871 = vld [vmem:[#allocation2 + $0xa8] sm:$0xff]
    %v872 = vld [vmem:[#allocation2 + $0xb0] sm:$0xff]
    %v873 = vld [vmem:[#allocation2 + $0xb8] sm:$0xff]
    %v874 = vld [vmem:[#allocation2 + $0xc0] sm:$0xff]
    %v875 = vld [vmem:[#allocation2 + $0xc8] sm:$0xff]
    %v876 = vld [vmem:[#allocation2 + $0xd0] sm:$0xff]
    %v877 = vld [vmem:[#allocation2 + $0xd8] sm:$0xff]
    %v878 = vld [vmem:[#allocation2 + $0xe0] sm:$0xff]
    %v879 = vld [vmem:[#allocation2 + $0xe8] sm:$0xff]
    %v880 = vld [vmem:[#allocation2 + $0xf0] sm:$0xff]
    %v881 = vld [vmem:[#allocation2 + $0xf8] sm:$0xff]
    %v882 = vld [vmem:[#allocation2 + $0x100] sm:$0xff]
    %v883 = vld [vmem:[#allocation2 + $0x108] sm:$0xff]
    %v884 = vld [vmem:[#allocation2 + $0x110] sm:$0xff]
    %v885 = vld [vmem:[#allocation2 + $0x118] sm:$0xff]
    %v886 = vld [vmem:[#allocation2 + $0x120] sm:$0xff]
    %v887 = vld [vmem:[#allocation2 + $0x128] sm:$0xff]
    %v888 = vld [vmem:[#allocation2 + $0x130] sm:$0xff]
    %v889 = vld [vmem:[#allocation2 + $0x138] sm:$0xff]
    %v890 = vld [vmem:[#allocation2 + $0x140] sm:$0xff]
    %v891 = vld [vmem:[#allocation2 + $0x148] sm:$0xff]
    %v892 = vld [vmem:[#allocation2 + $0x150] sm:$0xff]
    %v893 = vld [vmem:[#allocation2 + $0x158] sm:$0xff]
    %v894 = vld [vmem:[#allocation2 + $0x160] sm:$0xff]
    %v895 = vld [vmem:[#allocation2 + $0x168] sm:$0xff]
    %v896 = vld [vmem:[#allocation2 + $0x170] sm:$0xff]
    %v897 = vld [vmem:[#allocation2 + $0x178] sm:$0xff]
    %v898 = vld [vmem:[#allocation2 + $0x180] sm:$0xff]
    %v899 = vld [vmem:[#allocation2 + $0x188] sm:$0xff]
    %v900 = vld [vmem:[#allocation2 + $0x190] sm:$0xff]
    %v901 = vld [vmem:[#allocation2 + $0x198] sm:$0xff]
    %v902 = vld [vmem:[#allocation2 + $0x1a0] sm:$0xff]
    %v903 = vld [vmem:[#allocation2 + $0x1a8] sm:$0xff]
    %v904 = vld [vmem:[#allocation2 + $0x1b0] sm:$0xff]
    %v905 = vld [vmem:[#allocation2 + $0x1b8] sm:$0xff]
    %v906 = vld [vmem:[#allocation2 + $0x1c0] sm:$0xff]
    %v907 = vld [vmem:[#allocation2 + $0x1c8] sm:$0xff]
    %v908 = vld [vmem:[#allocation2 + $0x1d0] sm:$0xff]
    %v909 = vld [vmem:[#allocation2 + $0x1d8] sm:$0xff]
    %v910 = vld [vmem:[#allocation2 + $0x1e0] sm:$0xff]
    %v911 = vld [vmem:[#allocation2 + $0x1e8] sm:$0xff]
    %v912 = vld [vmem:[#allocation2 + $0x1f0] sm:$0xff]
    %v913 = vld [vmem:[#allocation2 + $0x1f8] sm:$0xff]
    %v914 = vld [vmem:[#allocation2 + $0x200] sm:$0xff]
    %v915 = vld [vmem:[#allocation2 + $0x208] sm:$0xff]
    %v916 = vld [vmem:[#allocation2 + $0x210] sm:$0xff]
    %v917 = vld [vmem:[#allocation2 + $0x218] sm:$0xff]
    %v918 = vld [vmem:[#allocation2 + $0x220] sm:$0xff]
    %v919 = vld [vmem:[#allocation2 + $0x228] sm:$0xff]
    %v920 = vld [vmem:[#allocation2 + $0x230] sm:$0xff]
    %v921 = vld [vmem:[#allocation2 + $0x238] sm:$0xff]
    %v922 = vld [vmem:[#allocation2 + $0x240] sm:$0xff]
    %v923 = vld [vmem:[#allocation2 + $0x248] sm:$0xff]
    %v924 = vld [vmem:[#allocation2 + $0x250] sm:$0xff]
    %v925 = vld [vmem:[#allocation2 + $0x258] sm:$0xff]
    %v926 = vld [vmem:[#allocation2 + $0x260] sm:$0xff]
    %v927 = vld [vmem:[#allocation2 + $0x268] sm:$0xff]
    %v928 = vld [vmem:[#allocation2 + $0x270] sm:$0xff]
    %v929 = vld [vmem:[#allocation2 + $0x278] sm:$0xff]
    %v930 = vld [vmem:[#allocation2 + $0x280] sm:$0xff]
    %v931 = vld [vmem:[#allocation2 + $0x288] sm:$0xff]
    %v932 = vld [vmem:[#allocation2 + $0x290] sm:$0xff]
    %v933 = vld [vmem:[#allocation2 + $0x298] sm:$0xff]
    %v934 = vld [vmem:[#allocation2 + $0x2a0] sm:$0xff]
    %v935 = vld [vmem:[#allocation2 + $0x2a8] sm:$0xff]
    %v936 = vld [vmem:[#allocation2 + $0x2b0] sm:$0xff]
    %v937 = vld [vmem:[#allocation2 + $0x2b8] sm:$0xff]
    %v938 = vld [vmem:[#allocation2 + $0x2c0] sm:$0xff]
    %v939 = vld [vmem:[#allocation2 + $0x2c8] sm:$0xff]
    %v940 = vld [vmem:[#allocation2 + $0x2d0] sm:$0xff]
    %v941 = vld [vmem:[#allocation2 + $0x2d8] sm:$0xff]
    %v942 = vld [vmem:[#allocation2 + $0x2e0] sm:$0xff]
    %v943 = vld [vmem:[#allocation2 + $0x2e8] sm:$0xff]
    %v944 = vld [vmem:[#allocation2 + $0x2f0] sm:$0xff]
    %v945 = vld [vmem:[#allocation2 + $0x2f8] sm:$0xff]
    %v946 = vld [vmem:[#allocation2 + $0x300] sm:$0xff]
    %v947 = vld [vmem:[#allocation2 + $0x308] sm:$0xff]
    %v948 = vld [vmem:[#allocation2 + $0x310] sm:$0xff]
    %v949 = vld [vmem:[#allocation2 + $0x318] sm:$0xff]
    %v950 = vld [vmem:[#allocation2 + $0x320] sm:$0xff]
    %v951 = vld [vmem:[#allocation2 + $0x328] sm:$0xff]
    %v952 = vld [vmem:[#allocation2 + $0x330] sm:$0xff]
    %v953 = vld [vmem:[#allocation2 + $0x338] sm:$0xff]
    %v954 = vld [vmem:[#allocation2 + $0x340] sm:$0xff]
    %v955 = vld [vmem:[#allocation2 + $0x348] sm:$0xff]
    %v956 = vld [vmem:[#allocation2 + $0x350] sm:$0xff]
    %v957 = vld [vmem:[#allocation2 + $0x358] sm:$0xff]
    %v958 = vld [vmem:[#allocation2 + $0x360] sm:$0xff]
    %v959 = vld [vmem:[#allocation2 + $0x368] sm:$0xff]
    %v960 = vld [vmem:[#allocation2 + $0x370] sm:$0xff]
    %v961 = vld [vmem:[#allocation2 + $0x378] sm:$0xff]
    %v962 = vld [vmem:[#allocation2 + $0x380] sm:$0xff]
    %v963 = vld [vmem:[#allocation2 + $0x388] sm:$0xff]
    %v964 = vld [vmem:[#allocation2 + $0x390] sm:$0xff]
    %v965 = vld [vmem:[#allocation2 + $0x398] sm:$0xff]
    %v966 = vld [vmem:[#allocation2 + $0x3a0] sm:$0xff]
    %v967 = vld [vmem:[#allocation2 + $0x3a8] sm:$0xff]
    %v968 = vld [vmem:[#allocation2 + $0x3b0] sm:$0xff]
    %v969 = vld [vmem:[#allocation2 + $0x3b8] sm:$0xff]
    %v970 = vld [vmem:[#allocation2 + $0x3c0] sm:$0xff]
    %v971 = vld [vmem:[#allocation2 + $0x3c8] sm:$0xff]
    %v972 = vld [vmem:[#allocation2 + $0x3d0] sm:$0xff]
    %v973 = vld [vmem:[#allocation2 + $0x3d8] sm:$0xff]
    %v974 = vld [vmem:[#allocation2 + $0x3e0] sm:$0xff]
    %v975 = vld [vmem:[#allocation2 + $0x3e8] sm:$0xff]
    %v976 = vld [vmem:[#allocation2 + $0x3f0] sm:$0xff]
    %v977 = vld [vmem:[#allocation2 + $0x3f8] sm:$0xff]
    %v978 = vunpack.c.l.s8.bf16 %v850
    %v979 = vunpack.c.l.s8.bf16 %v851
    %v980 = vunpack.c.l.s8.bf16 %v852
    %v981 = vunpack.c.l.s8.bf16 %v853
    %v982 = vunpack.c.l.s8.bf16 %v854
    %v983 = vunpack.c.l.s8.bf16 %v855
    %v984 = vunpack.c.l.s8.bf16 %v856
    %v985 = vunpack.c.l.s8.bf16 %v857
    %v986 = vunpack.c.h.s8.bf16 %v850
    %v987 = vunpack.c.h.s8.bf16 %v851
    %v988 = vunpack.c.h.s8.bf16 %v852
    %v989 = vunpack.c.h.s8.bf16 %v853
    %v990 = vunpack.c.h.s8.bf16 %v854
    %v991 = vunpack.c.h.s8.bf16 %v855
    %v992 = vunpack.c.h.s8.bf16 %v856
    %v993 = vunpack.c.h.s8.bf16 %v857
    %v994 = vunpack.c.l.s8.bf16 %v858
    %v995 = vunpack.c.l.s8.bf16 %v859
    %v996 = vunpack.c.l.s8.bf16 %v860
    %v997 = vunpack.c.l.s8.bf16 %v861
    %v998 = vunpack.c.l.s8.bf16 %v862
    %v999 = vunpack.c.l.s8.bf16 %v863
    %v1000 = vunpack.c.l.s8.bf16 %v864
    %v1001 = vunpack.c.l.s8.bf16 %v865
    %v1002 = vunpack.c.h.s8.bf16 %v858
    %v1003 = vunpack.c.h.s8.bf16 %v859
    %v1004 = vunpack.c.h.s8.bf16 %v860
    %v1005 = vunpack.c.h.s8.bf16 %v861
    %v1006 = vunpack.c.h.s8.bf16 %v862
    %v1007 = vunpack.c.h.s8.bf16 %v863
    %v1008 = vunpack.c.h.s8.bf16 %v864
    %v1009 = vunpack.c.h.s8.bf16 %v865
    %v1010 = vunpack.c.l.s8.bf16 %v866
    %v1011 = vunpack.c.l.s8.bf16 %v867
    %v1012 = vunpack.c.l.s8.bf16 %v868
    %v1013 = vunpack.c.l.s8.bf16 %v869
    %v1014 = vunpack.c.l.s8.bf16 %v870
    %v1015 = vunpack.c.l.s8.bf16 %v871
    %v1016 = vunpack.c.l.s8.bf16 %v872
    %v1017 = vunpack.c.l.s8.bf16 %v873
    %v1018 = vunpack.c.h.s8.bf16 %v866
    %v1019 = vunpack.c.h.s8.bf16 %v867
    %v1020 = vunpack.c.h.s8.bf16 %v868
    %v1021 = vunpack.c.h.s8.bf16 %v869
    %v1022 = vunpack.c.h.s8.bf16 %v870
    %v1023 = vunpack.c.h.s8.bf16 %v871
    %v1024 = vunpack.c.h.s8.bf16 %v872
    %v1025 = vunpack.c.h.s8.bf16 %v873
    %v1026 = vunpack.c.l.s8.bf16 %v874
    %v1027 = vunpack.c.l.s8.bf16 %v875
    %v1028 = vunpack.c.l.s8.bf16 %v876
    %v1029 = vunpack.c.l.s8.bf16 %v877
    %v1030 = vunpack.c.l.s8.bf16 %v878
    %v1031 = vunpack.c.l.s8.bf16 %v879
    %v1032 = vunpack.c.l.s8.bf16 %v880
    %v1033 = vunpack.c.l.s8.bf16 %v881
    %v1034 = vunpack.c.h.s8.bf16 %v874
    %v1035 = vunpack.c.h.s8.bf16 %v875
    %v1036 = vunpack.c.h.s8.bf16 %v876
    %v1037 = vunpack.c.h.s8.bf16 %v877
    %v1038 = vunpack.c.h.s8.bf16 %v878
    %v1039 = vunpack.c.h.s8.bf16 %v879
    %v1040 = vunpack.c.h.s8.bf16 %v880
    %v1041 = vunpack.c.h.s8.bf16 %v881
    %v1042 = vunpack.c.l.s8.bf16 %v882
    %v1043 = vunpack.c.l.s8.bf16 %v883
    %v1044 = vunpack.c.l.s8.bf16 %v884
    %v1045 = vunpack.c.l.s8.bf16 %v885
    %v1046 = vunpack.c.l.s8.bf16 %v886
    %v1047 = vunpack.c.l.s8.bf16 %v887
    %v1048 = vunpack.c.l.s8.bf16 %v888
    %v1049 = vunpack.c.l.s8.bf16 %v889
    %v1050 = vunpack.c.h.s8.bf16 %v882
    %v1051 = vunpack.c.h.s8.bf16 %v883
    %v1052 = vunpack.c.h.s8.bf16 %v884
    %v1053 = vunpack.c.h.s8.bf16 %v885
    %v1054 = vunpack.c.h.s8.bf16 %v886
    %v1055 = vunpack.c.h.s8.bf16 %v887
    %v1056 = vunpack.c.h.s8.bf16 %v888
    %v1057 = vunpack.c.h.s8.bf16 %v889
    %v1058 = vunpack.c.l.s8.bf16 %v890
    %v1059 = vunpack.c.l.s8.bf16 %v891
    %v1060 = vunpack.c.l.s8.bf16 %v892
    %v1061 = vunpack.c.l.s8.bf16 %v893
    %v1062 = vunpack.c.l.s8.bf16 %v894
    %v1063 = vunpack.c.l.s8.bf16 %v895
    %v1064 = vunpack.c.l.s8.bf16 %v896
    %v1065 = vunpack.c.l.s8.bf16 %v897
    %v1066 = vunpack.c.h.s8.bf16 %v890
    %v1067 = vunpack.c.h.s8.bf16 %v891
    %v1068 = vunpack.c.h.s8.bf16 %v892
    %v1069 = vunpack.c.h.s8.bf16 %v893
    %v1070 = vunpack.c.h.s8.bf16 %v894
    %v1071 = vunpack.c.h.s8.bf16 %v895
    %v1072 = vunpack.c.h.s8.bf16 %v896
    %v1073 = vunpack.c.h.s8.bf16 %v897
    %v1074 = vunpack.c.l.s8.bf16 %v898
    %v1075 = vunpack.c.l.s8.bf16 %v899
    %v1076 = vunpack.c.l.s8.bf16 %v900
    %v1077 = vunpack.c.l.s8.bf16 %v901
    %v1078 = vunpack.c.l.s8.bf16 %v902
    %v1079 = vunpack.c.l.s8.bf16 %v903
    %v1080 = vunpack.c.l.s8.bf16 %v904
    %v1081 = vunpack.c.l.s8.bf16 %v905
    %v1082 = vunpack.c.h.s8.bf16 %v898
    %v1083 = vunpack.c.h.s8.bf16 %v899
    %v1084 = vunpack.c.h.s8.bf16 %v900
    %v1085 = vunpack.c.h.s8.bf16 %v901
    %v1086 = vunpack.c.h.s8.bf16 %v902
    %v1087 = vunpack.c.h.s8.bf16 %v903
    %v1088 = vunpack.c.h.s8.bf16 %v904
    %v1089 = vunpack.c.h.s8.bf16 %v905
    %v1090 = vunpack.c.l.s8.bf16 %v906
    %v1091 = vunpack.c.l.s8.bf16 %v907
    %v1092 = vunpack.c.l.s8.bf16 %v908
    %v1093 = vunpack.c.l.s8.bf16 %v909
    %v1094 = vunpack.c.l.s8.bf16 %v910
    %v1095 = vunpack.c.l.s8.bf16 %v911
    %v1096 = vunpack.c.l.s8.bf16 %v912
    %v1097 = vunpack.c.l.s8.bf16 %v913
    %v1098 = vunpack.c.h.s8.bf16 %v906
    %v1099 = vunpack.c.h.s8.bf16 %v907
    %v1100 = vunpack.c.h.s8.bf16 %v908
    %v1101 = vunpack.c.h.s8.bf16 %v909
    %v1102 = vunpack.c.h.s8.bf16 %v910
    %v1103 = vunpack.c.h.s8.bf16 %v911
    %v1104 = vunpack.c.h.s8.bf16 %v912
    %v1105 = vunpack.c.h.s8.bf16 %v913
    %v1106 = vunpack.c.l.s8.bf16 %v914
    %v1107 = vunpack.c.l.s8.bf16 %v915
    %v1108 = vunpack.c.l.s8.bf16 %v916
    %v1109 = vunpack.c.l.s8.bf16 %v917
    %v1110 = vunpack.c.l.s8.bf16 %v918
    %v1111 = vunpack.c.l.s8.bf16 %v919
    %v1112 = vunpack.c.l.s8.bf16 %v920
    %v1113 = vunpack.c.l.s8.bf16 %v921
    %v1114 = vunpack.c.h.s8.bf16 %v914
    %v1115 = vunpack.c.h.s8.bf16 %v915
    %v1116 = vunpack.c.h.s8.bf16 %v916
    %v1117 = vunpack.c.h.s8.bf16 %v917
    %v1118 = vunpack.c.h.s8.bf16 %v918
    %v1119 = vunpack.c.h.s8.bf16 %v919
    %v1120 = vunpack.c.h.s8.bf16 %v920
    %v1121 = vunpack.c.h.s8.bf16 %v921
    %v1122 = vunpack.c.l.s8.bf16 %v922
    %v1123 = vunpack.c.l.s8.bf16 %v923
    %v1124 = vunpack.c.l.s8.bf16 %v924
    %v1125 = vunpack.c.l.s8.bf16 %v925
    %v1126 = vunpack.c.l.s8.bf16 %v926
    %v1127 = vunpack.c.l.s8.bf16 %v927
    %v1128 = vunpack.c.l.s8.bf16 %v928
    %v1129 = vunpack.c.l.s8.bf16 %v929
    %v1130 = vunpack.c.h.s8.bf16 %v922
    %v1131 = vunpack.c.h.s8.bf16 %v923
    %v1132 = vunpack.c.h.s8.bf16 %v924
    %v1133 = vunpack.c.h.s8.bf16 %v925
    %v1134 = vunpack.c.h.s8.bf16 %v926
    %v1135 = vunpack.c.h.s8.bf16 %v927
    %v1136 = vunpack.c.h.s8.bf16 %v928
    %v1137 = vunpack.c.h.s8.bf16 %v929
    %v1138 = vunpack.c.l.s8.bf16 %v930
    %v1139 = vunpack.c.l.s8.bf16 %v931
    %v1140 = vunpack.c.l.s8.bf16 %v932
    %v1141 = vunpack.c.l.s8.bf16 %v933
    %v1142 = vunpack.c.l.s8.bf16 %v934
    %v1143 = vunpack.c.l.s8.bf16 %v935
    %v1144 = vunpack.c.l.s8.bf16 %v936
    %v1145 = vunpack.c.l.s8.bf16 %v937
    %v1146 = vunpack.c.h.s8.bf16 %v930
    %v1147 = vunpack.c.h.s8.bf16 %v931
    %v1148 = vunpack.c.h.s8.bf16 %v932
    %v1149 = vunpack.c.h.s8.bf16 %v933
    %v1150 = vunpack.c.h.s8.bf16 %v934
    %v1151 = vunpack.c.h.s8.bf16 %v935
    %v1152 = vunpack.c.h.s8.bf16 %v936
    %v1153 = vunpack.c.h.s8.bf16 %v937
    %v1154 = vunpack.c.l.s8.bf16 %v938
    %v1155 = vunpack.c.l.s8.bf16 %v939
    %v1156 = vunpack.c.l.s8.bf16 %v940
    %v1157 = vunpack.c.l.s8.bf16 %v941
    %v1158 = vunpack.c.l.s8.bf16 %v942
    %v1159 = vunpack.c.l.s8.bf16 %v943
    %v1160 = vunpack.c.l.s8.bf16 %v944
    %v1161 = vunpack.c.l.s8.bf16 %v945
    %v1162 = vunpack.c.h.s8.bf16 %v938
    %v1163 = vunpack.c.h.s8.bf16 %v939
    %v1164 = vunpack.c.h.s8.bf16 %v940
    %v1165 = vunpack.c.h.s8.bf16 %v941
    %v1166 = vunpack.c.h.s8.bf16 %v942
    %v1167 = vunpack.c.h.s8.bf16 %v943
    %v1168 = vunpack.c.h.s8.bf16 %v944
    %v1169 = vunpack.c.h.s8.bf16 %v945
    %v1170 = vunpack.c.l.s8.bf16 %v946
    %v1171 = vunpack.c.l.s8.bf16 %v947
    %v1172 = vunpack.c.l.s8.bf16 %v948
    %v1173 = vunpack.c.l.s8.bf16 %v949
    %v1174 = vunpack.c.l.s8.bf16 %v950
    %v1175 = vunpack.c.l.s8.bf16 %v951
    %v1176 = vunpack.c.l.s8.bf16 %v952
    %v1177 = vunpack.c.l.s8.bf16 %v953
    %v1178 = vunpack.c.h.s8.bf16 %v946
    %v1179 = vunpack.c.h.s8.bf16 %v947
    %v1180 = vunpack.c.h.s8.bf16 %v948
    %v1181 = vunpack.c.h.s8.bf16 %v949
    %v1182 = vunpack.c.h.s8.bf16 %v950
    %v1183 = vunpack.c.h.s8.bf16 %v951
    %v1184 = vunpack.c.h.s8.bf16 %v952
    %v1185 = vunpack.c.h.s8.bf16 %v953
    %v1186 = vunpack.c.l.s8.bf16 %v954
    %v1187 = vunpack.c.l.s8.bf16 %v955
    %v1188 = vunpack.c.l.s8.bf16 %v956
    %v1189 = vunpack.c.l.s8.bf16 %v957
    %v1190 = vunpack.c.l.s8.bf16 %v958
    %v1191 = vunpack.c.l.s8.bf16 %v959
    %v1192 = vunpack.c.l.s8.bf16 %v960
    %v1193 = vunpack.c.l.s8.bf16 %v961
    %v1194 = vunpack.c.h.s8.bf16 %v954
    %v1195 = vunpack.c.h.s8.bf16 %v955
    %v1196 = vunpack.c.h.s8.bf16 %v956
    %v1197 = vunpack.c.h.s8.bf16 %v957
    %v1198 = vunpack.c.h.s8.bf16 %v958
    %v1199 = vunpack.c.h.s8.bf16 %v959
    %v1200 = vunpack.c.h.s8.bf16 %v960
    %v1201 = vunpack.c.h.s8.bf16 %v961
    %v1202 = vunpack.c.l.s8.bf16 %v962
    %v1203 = vunpack.c.l.s8.bf16 %v963
    %v1204 = vunpack.c.l.s8.bf16 %v964
    %v1205 = vunpack.c.l.s8.bf16 %v965
    %v1206 = vunpack.c.l.s8.bf16 %v966
    %v1207 = vunpack.c.l.s8.bf16 %v967
    %v1208 = vunpack.c.l.s8.bf16 %v968
    %v1209 = vunpack.c.l.s8.bf16 %v969
    %v1210 = vunpack.c.h.s8.bf16 %v962
    %v1211 = vunpack.c.h.s8.bf16 %v963
    %v1212 = vunpack.c.h.s8.bf16 %v964
    %v1213 = vunpack.c.h.s8.bf16 %v965
    %v1214 = vunpack.c.h.s8.bf16 %v966
    %v1215 = vunpack.c.h.s8.bf16 %v967
    %v1216 = vunpack.c.h.s8.bf16 %v968
    %v1217 = vunpack.c.h.s8.bf16 %v969
    %v1218 = vunpack.c.l.s8.bf16 %v970
    %v1219 = vunpack.c.l.s8.bf16 %v971
    %v1220 = vunpack.c.l.s8.bf16 %v972
    %v1221 = vunpack.c.l.s8.bf16 %v973
    %v1222 = vunpack.c.l.s8.bf16 %v974
    %v1223 = vunpack.c.l.s8.bf16 %v975
    %v1224 = vunpack.c.l.s8.bf16 %v976
    %v1225 = vunpack.c.l.s8.bf16 %v977
    %v1226 = vunpack.c.h.s8.bf16 %v970
    %v1227 = vunpack.c.h.s8.bf16 %v971
    %v1228 = vunpack.c.h.s8.bf16 %v972
    %v1229 = vunpack.c.h.s8.bf16 %v973
    %v1230 = vunpack.c.h.s8.bf16 %v974
    %v1231 = vunpack.c.h.s8.bf16 %v975
    %v1232 = vunpack.c.h.s8.bf16 %v976
    %v1233 = vunpack.c.h.s8.bf16 %v977
    %v1234 = vpack.c.bf16 %v842, %v842
    %v1235 = vpack.c.bf16 %v843, %v843
    %v1236 = vpack.c.bf16 %v844, %v844
    %v1237 = vpack.c.bf16 %v845, %v845
    %1238 = vmatprep.subr.bf16.mxu0 %v979
    %1239 = vmatpush1.bf16.msra.mxu0 %v978
    %1240 = vmatprep.subr.bf16.mxu0 %v987
    %1241 = vmatpush1.bf16.msra.mxu0 %v986
    %1242 = vmatprep.subr.bf16.mxu0 %v995
    %1243 = vmatpush1.bf16.msra.mxu0 %v994
    %1244 = vmatprep.subr.bf16.mxu0 %v1003
    %1245 = vmatpush1.bf16.msra.mxu0 %v1002
    %1246 = vmatprep.subr.bf16.mxu0 %v1011
    %1247 = vmatpush1.bf16.msra.mxu0 %v1010
    %1248 = vmatprep.subr.bf16.mxu0 %v1019
    %1249 = vmatpush1.bf16.msra.mxu0 %v1018
    %1250 = vmatprep.subr.bf16.mxu0 %v1027
    %1251 = vmatpush1.bf16.msra.mxu0 %v1026
    %1252 = vmatprep.subr.bf16.mxu0 %v1035
    %1253 = vmatpush1.bf16.msra.mxu0 %v1034
    %1254 = vmatprep.subr.bf16.mxu0 %v1043
    %1255 = vmatpush1.bf16.msra.mxu0 %v1042
    %1256 = vmatprep.subr.bf16.mxu0 %v1051
    %1257 = vmatpush1.bf16.msra.mxu0 %v1050
    %1258 = vmatprep.subr.bf16.mxu0 %v1059
    %1259 = vmatpush1.bf16.msra.mxu0 %v1058
    %1260 = vmatprep.subr.bf16.mxu0 %v1067
    %1261 = vmatpush1.bf16.msra.mxu0 %v1066
    %1262 = vmatprep.subr.bf16.mxu0 %v1075
    %1263 = vmatpush1.bf16.msra.mxu0 %v1074
    %1264 = vmatprep.subr.bf16.mxu0 %v1083
    %1265 = vmatpush1.bf16.msra.mxu0 %v1082
    %1266 = vmatprep.subr.bf16.mxu0 %v1091
    %1267 = vmatpush1.bf16.msra.mxu0 %v1090
    %1268 = vmatprep.subr.bf16.mxu0 %v1099
    %1269 = vmatpush1.bf16.msra.mxu0 %v1098
    %1270 = vmatprep.mubr.bf16.mxu0 %v1235
    %1271 = vmatmul.mubr.bf16.gmra.mrb[0].mxu0 %v1234
    %v1272 = vpop.f32.mrb[0].mxu0
    %v1273 = vadd.f32 0.0, %v1272
    %v1274 = vpop.f32.mrb[0].mxu0
    %v1275 = vadd.f32 0.0, %v1274
    %v1276 = vpop.f32.mrb[0].mxu0
    %v1277 = vpop.f32.mrb[0].mxu0
    %1278 = vdwg.mxu0
    %1279 = vmatprep.subr.bf16.mxu0 %v1107
    %1280 = vmatpush1.bf16.msra.mxu0 %v1106
    %1281 = vmatprep.subr.bf16.mxu0 %v1115
    %1282 = vmatpush1.bf16.msra.mxu0 %v1114
    %1283 = vmatprep.subr.bf16.mxu0 %v1123
    %1284 = vmatpush1.bf16.msra.mxu0 %v1122
    %1285 = vmatprep.subr.bf16.mxu0 %v1131
    %1286 = vmatpush1.bf16.msra.mxu0 %v1130
    %1287 = vmatprep.subr.bf16.mxu0 %v1139
    %1288 = vmatpush1.bf16.msra.mxu0 %v1138
    %1289 = vmatprep.subr.bf16.mxu0 %v1147
    %1290 = vmatpush1.bf16.msra.mxu0 %v1146
    %1291 = vmatprep.subr.bf16.mxu0 %v1155
    %1292 = vmatpush1.bf16.msra.mxu0 %v1154
    %1293 = vmatprep.subr.bf16.mxu0 %v1163
    %1294 = vmatpush1.bf16.msra.mxu0 %v1162
    %1295 = vmatprep.subr.bf16.mxu0 %v1171
    %1296 = vmatpush1.bf16.msra.mxu0 %v1170
    %1297 = vmatprep.subr.bf16.mxu0 %v1179
    %1298 = vmatpush1.bf16.msra.mxu0 %v1178
    %1299 = vmatprep.subr.bf16.mxu0 %v1187
    %1300 = vmatpush1.bf16.msra.mxu0 %v1186
    %1301 = vmatprep.subr.bf16.mxu0 %v1195
    %1302 = vmatpush1.bf16.msra.mxu0 %v1194
    %1303 = vmatprep.subr.bf16.mxu0 %v1203
    %1304 = vmatpush1.bf16.msra.mxu0 %v1202
    %1305 = vmatprep.subr.bf16.mxu0 %v1211
    %1306 = vmatpush1.bf16.msra.mxu0 %v1210
    %1307 = vmatprep.subr.bf16.mxu0 %v1219
    %1308 = vmatpush1.bf16.msra.mxu0 %v1218
    %1309 = vmatprep.subr.bf16.mxu0 %v1227
    %1310 = vmatpush1.bf16.msra.mxu0 %v1226
    %1311 = vmatprep.mubr.bf16.mxu0 %v1237
    %1312 = vmatmul.mubr.bf16.gmra.mrb[0].mxu0 %v1236
    %v1313 = vpop.f32.mrb[0].mxu0
    %v1314 = vadd.f32 %v1273, %v1313
    %v1315 = vpop.f32.mrb[0].mxu0
    %v1316 = vadd.f32 %v1275, %v1315
    %v1317 = vpop.f32.mrb[0].mxu0
    %v1318 = vpop.f32.mrb[0].mxu0
    %1319 = vdwg.mxu0
    %1320 = vmatprep.subr.bf16.mxu0 %v981
    %1321 = vmatpush1.bf16.msra.mxu0 %v980
    %1322 = vmatprep.subr.bf16.mxu0 %v989
    %1323 = vmatpush1.bf16.msra.mxu0 %v988
    %1324 = vmatprep.subr.bf16.mxu0 %v997
    %1325 = vmatpush1.bf16.msra.mxu0 %v996
    %1326 = vmatprep.subr.bf16.mxu0 %v1005
    %1327 = vmatpush1.bf16.msra.mxu0 %v1004
    %1328 = vmatprep.subr.bf16.mxu0 %v1013
    %1329 = vmatpush1.bf16.msra.mxu0 %v1012
    %1330 = vmatprep.subr.bf16.mxu0 %v1021
    %1331 = vmatpush1.bf16.msra.mxu0 %v1020
    %1332 = vmatprep.subr.bf16.mxu0 %v1029
    %1333 = vmatpush1.bf16.msra.mxu0 %v1028
    %1334 = vmatprep.subr.bf16.mxu0 %v1037
    %1335 = vmatpush1.bf16.msra.mxu0 %v1036
    %1336 = vmatprep.subr.bf16.mxu0 %v1045
    %1337 = vmatpush1.bf16.msra.mxu0 %v1044
    %1338 = vmatprep.subr.bf16.mxu0 %v1053
    %1339 = vmatpush1.bf16.msra.mxu0 %v1052
    %1340 = vmatprep.subr.bf16.mxu0 %v1061
    %1341 = vmatpush1.bf16.msra.mxu0 %v1060
    %1342 = vmatprep.subr.bf16.mxu0 %v1069
    %1343 = vmatpush1.bf16.msra.mxu0 %v1068
    %1344 = vmatprep.subr.bf16.mxu0 %v1077
    %1345 = vmatpush1.bf16.msra.mxu0 %v1076
    %1346 = vmatprep.subr.bf16.mxu0 %v1085
    %1347 = vmatpush1.bf16.msra.mxu0 %v1084
    %1348 = vmatprep.subr.bf16.mxu0 %v1093
    %1349 = vmatpush1.bf16.msra.mxu0 %v1092
    %1350 = vmatprep.subr.bf16.mxu0 %v1101
    %1351 = vmatpush1.bf16.msra.mxu0 %v1100
    %1352 = vmatprep.mubr.bf16.mxu0 %v1235
    %1353 = vmatmul.mubr.bf16.gmra.mrb[0].mxu0 %v1234
    %v1354 = vpop.f32.mrb[0].mxu0
    %v1355 = vadd.f32 0.0, %v1354
    %v1356 = vpop.f32.mrb[0].mxu0
    %v1357 = vadd.f32 0.0, %v1356
    %v1358 = vpop.f32.mrb[0].mxu0
    %v1359 = vpop.f32.mrb[0].mxu0
    %1360 = vdwg.mxu0
    %1361 = vmatprep.subr.bf16.mxu0 %v1109
    %1362 = vmatpush1.bf16.msra.mxu0 %v1108
    %1363 = vmatprep.subr.bf16.mxu0 %v1117
    %1364 = vmatpush1.bf16.msra.mxu0 %v1116
    %1365 = vmatprep.subr.bf16.mxu0 %v1125
    %1366 = vmatpush1.bf16.msra.mxu0 %v1124
    %1367 = vmatprep.subr.bf16.mxu0 %v1133
    %1368 = vmatpush1.bf16.msra.mxu0 %v1132
    %1369 = vmatprep.subr.bf16.mxu0 %v1141
    %1370 = vmatpush1.bf16.msra.mxu0 %v1140
    %1371 = vmatprep.subr.bf16.mxu0 %v1149
    %1372 = vmatpush1.bf16.msra.mxu0 %v1148
    %1373 = vmatprep.subr.bf16.mxu0 %v1157
    %1374 = vmatpush1.bf16.msra.mxu0 %v1156
    %1375 = vmatprep.subr.bf16.mxu0 %v1165
    %1376 = vmatpush1.bf16.msra.mxu0 %v1164
    %1377 = vmatprep.subr.bf16.mxu0 %v1173
    %1378 = vmatpush1.bf16.msra.mxu0 %v1172
    %1379 = vmatprep.subr.bf16.mxu0 %v1181
    %1380 = vmatpush1.bf16.msra.mxu0 %v1180
    %1381 = vmatprep.subr.bf16.mxu0 %v1189
    %1382 = vmatpush1.bf16.msra.mxu0 %v1188
    %1383 = vmatprep.subr.bf16.mxu0 %v1197
    %1384 = vmatpush1.bf16.msra.mxu0 %v1196
    %1385 = vmatprep.subr.bf16.mxu0 %v1205
    %1386 = vmatpush1.bf16.msra.mxu0 %v1204
    %1387 = vmatprep.subr.bf16.mxu0 %v1213
    %1388 = vmatpush1.bf16.msra.mxu0 %v1212
    %1389 = vmatprep.subr.bf16.mxu0 %v1221
    %1390 = vmatpush1.bf16.msra.mxu0 %v1220
    %1391 = vmatprep.subr.bf16.mxu0 %v1229
    %1392 = vmatpush1.bf16.msra.mxu0 %v1228
    %1393 = vmatprep.mubr.bf16.mxu0 %v1237
    %1394 = vmatmul.mubr.bf16.gmra.mrb[0].mxu0 %v1236
    %v1395 = vpop.f32.mrb[0].mxu0
    %v1396 = vadd.f32 %v1355, %v1395
    %v1397 = vpop.f32.mrb[0].mxu0
    %v1398 = vadd.f32 %v1357, %v1397
    %v1399 = vpop.f32.mrb[0].mxu0
    %v1400 = vpop.f32.mrb[0].mxu0
    %1401 = vdwg.mxu0
    %1402 = vmatprep.subr.bf16.mxu0 %v983
    %1403 = vmatpush1.bf16.msra.mxu0 %v982
    %1404 = vmatprep.subr.bf16.mxu0 %v991
    %1405 = vmatpush1.bf16.msra.mxu0 %v990
    %1406 = vmatprep.subr.bf16.mxu0 %v999
    %1407 = vmatpush1.bf16.msra.mxu0 %v998
    %1408 = vmatprep.subr.bf16.mxu0 %v1007
    %1409 = vmatpush1.bf16.msra.mxu0 %v1006
    %1410 = vmatprep.subr.bf16.mxu0 %v1015
    %1411 = vmatpush1.bf16.msra.mxu0 %v1014
    %1412 = vmatprep.subr.bf16.mxu0 %v1023
    %1413 = vmatpush1.bf16.msra.mxu0 %v1022
    %1414 = vmatprep.subr.bf16.mxu0 %v1031
    %1415 = vmatpush1.bf16.msra.mxu0 %v1030
    %1416 = vmatprep.subr.bf16.mxu0 %v1039
    %1417 = vmatpush1.bf16.msra.mxu0 %v1038
    %1418 = vmatprep.subr.bf16.mxu0 %v1047
    %1419 = vmatpush1.bf16.msra.mxu0 %v1046
    %1420 = vmatprep.subr.bf16.mxu0 %v1055
    %1421 = vmatpush1.bf16.msra.mxu0 %v1054
    %1422 = vmatprep.subr.bf16.mxu0 %v1063
    %1423 = vmatpush1.bf16.msra.mxu0 %v1062
    %1424 = vmatprep.subr.bf16.mxu0 %v1071
    %1425 = vmatpush1.bf16.msra.mxu0 %v1070
    %1426 = vmatprep.subr.bf16.mxu0 %v1079
    %1427 = vmatpush1.bf16.msra.mxu0 %v1078
    %1428 = vmatprep.subr.bf16.mxu0 %v1087
    %1429 = vmatpush1.bf16.msra.mxu0 %v1086
    %1430 = vmatprep.subr.bf16.mxu0 %v1095
    %1431 = vmatpush1.bf16.msra.mxu0 %v1094
    %1432 = vmatprep.subr.bf16.mxu0 %v1103
    %1433 = vmatpush1.bf16.msra.mxu0 %v1102
    %1434 = vmatprep.mubr.bf16.mxu0 %v1235
    %1435 = vmatmul.mubr.bf16.gmra.mrb[0].mxu0 %v1234
    %v1436 = vpop.f32.mrb[0].mxu0
    %v1437 = vadd.f32 0.0, %v1436
    %v1438 = vpop.f32.mrb[0].mxu0
    %v1439 = vadd.f32 0.0, %v1438
    %v1440 = vpop.f32.mrb[0].mxu0
    %v1441 = vpop.f32.mrb[0].mxu0
    %1442 = vdwg.mxu0
    %1443 = vmatprep.subr.bf16.mxu0 %v1111
    %1444 = vmatpush1.bf16.msra.mxu0 %v1110
    %1445 = vmatprep.subr.bf16.mxu0 %v1119
    %1446 = vmatpush1.bf16.msra.mxu0 %v1118
    %1447 = vmatprep.subr.bf16.mxu0 %v1127
    %1448 = vmatpush1.bf16.msra.mxu0 %v1126
    %1449 = vmatprep.subr.bf16.mxu0 %v1135
    %1450 = vmatpush1.bf16.msra.mxu0 %v1134
    %1451 = vmatprep.subr.bf16.mxu0 %v1143
    %1452 = vmatpush1.bf16.msra.mxu0 %v1142
    %1453 = vmatprep.subr.bf16.mxu0 %v1151
    %1454 = vmatpush1.bf16.msra.mxu0 %v1150
    %1455 = vmatprep.subr.bf16.mxu0 %v1159
    %1456 = vmatpush1.bf16.msra.mxu0 %v1158
    %1457 = vmatprep.subr.bf16.mxu0 %v1167
    %1458 = vmatpush1.bf16.msra.mxu0 %v1166
    %1459 = vmatprep.subr.bf16.mxu0 %v1175
    %1460 = vmatpush1.bf16.msra.mxu0 %v1174
    %1461 = vmatprep.subr.bf16.mxu0 %v1183
    %1462 = vmatpush1.bf16.msra.mxu0 %v1182
    %1463 = vmatprep.subr.bf16.mxu0 %v1191
    %1464 = vmatpush1.bf16.msra.mxu0 %v1190
    %1465 = vmatprep.subr.bf16.mxu0 %v1199
    %1466 = vmatpush1.bf16.msra.mxu0 %v1198
    %1467 = vmatprep.subr.bf16.mxu0 %v1207
    %1468 = vmatpush1.bf16.msra.mxu0 %v1206
    %1469 = vmatprep.subr.bf16.mxu0 %v1215
    %1470 = vmatpush1.bf16.msra.mxu0 %v1214
    %1471 = vmatprep.subr.bf16.mxu0 %v1223
    %1472 = vmatpush1.bf16.msra.mxu0 %v1222
    %1473 = vmatprep.subr.bf16.mxu0 %v1231
    %1474 = vmatpush1.bf16.msra.mxu0 %v1230
    %1475 = vmatprep.mubr.bf16.mxu0 %v1237
    %1476 = vmatmul.mubr.bf16.gmra.mrb[0].mxu0 %v1236
    %v1477 = vpop.f32.mrb[0].mxu0
    %v1478 = vadd.f32 %v1437, %v1477
    %v1479 = vpop.f32.mrb[0].mxu0
    %v1480 = vadd.f32 %v1439, %v1479
    %v1481 = vpop.f32.mrb[0].mxu0
    %v1482 = vpop.f32.mrb[0].mxu0
    %1483 = vdwg.mxu0
    %1484 = vmatprep.subr.bf16.mxu0 %v985
    %1485 = vmatpush1.bf16.msra.mxu0 %v984
    %1486 = vmatprep.subr.bf16.mxu0 %v993
    %1487 = vmatpush1.bf16.msra.mxu0 %v992
    %1488 = vmatprep.subr.bf16.mxu0 %v1001
    %1489 = vmatpush1.bf16.msra.mxu0 %v1000
    %1490 = vmatprep.subr.bf16.mxu0 %v1009
    %1491 = vmatpush1.bf16.msra.mxu0 %v1008
    %1492 = vmatprep.subr.bf16.mxu0 %v1017
    %1493 = vmatpush1.bf16.msra.mxu0 %v1016
    %1494 = vmatprep.subr.bf16.mxu0 %v1025
    %1495 = vmatpush1.bf16.msra.mxu0 %v1024
    %1496 = vmatprep.subr.bf16.mxu0 %v1033
    %1497 = vmatpush1.bf16.msra.mxu0 %v1032
    %1498 = vmatprep.subr.bf16.mxu0 %v1041
    %1499 = vmatpush1.bf16.msra.mxu0 %v1040
    %1500 = vmatprep.subr.bf16.mxu0 %v1049
    %1501 = vmatpush1.bf16.msra.mxu0 %v1048
    %1502 = vmatprep.subr.bf16.mxu0 %v1057
    %1503 = vmatpush1.bf16.msra.mxu0 %v1056
    %1504 = vmatprep.subr.bf16.mxu0 %v1065
    %1505 = vmatpush1.bf16.msra.mxu0 %v1064
    %1506 = vmatprep.subr.bf16.mxu0 %v1073
    %1507 = vmatpush1.bf16.msra.mxu0 %v1072
    %1508 = vmatprep.subr.bf16.mxu0 %v1081
    %1509 = vmatpush1.bf16.msra.mxu0 %v1080
    %1510 = vmatprep.subr.bf16.mxu0 %v1089
    %1511 = vmatpush1.bf16.msra.mxu0 %v1088
    %1512 = vmatprep.subr.bf16.mxu0 %v1097
    %1513 = vmatpush1.bf16.msra.mxu0 %v1096
    %1514 = vmatprep.subr.bf16.mxu0 %v1105
    %1515 = vmatpush1.bf16.msra.mxu0 %v1104
    %1516 = vmatprep.mubr.bf16.mxu0 %v1235
    %1517 = vmatmul.mubr.bf16.gmra.mrb[0].mxu0 %v1234
    %v1518 = vpop.f32.mrb[0].mxu0
    %v1519 = vadd.f32 0.0, %v1518
    %v1520 = vpop.f32.mrb[0].mxu0
    %v1521 = vadd.f32 0.0, %v1520
    %v1522 = vpop.f32.mrb[0].mxu0
    %v1523 = vpop.f32.mrb[0].mxu0
    %1524 = vdwg.mxu0
    %1525 = vmatprep.subr.bf16.mxu0 %v1113
    %1526 = vmatpush1.bf16.msra.mxu0 %v1112
    %1527 = vmatprep.subr.bf16.mxu0 %v1121
    %1528 = vmatpush1.bf16.msra.mxu0 %v1120
    %1529 = vmatprep.subr.bf16.mxu0 %v1129
    %1530 = vmatpush1.bf16.msra.mxu0 %v1128
    %1531 = vmatprep.subr.bf16.mxu0 %v1137
    %1532 = vmatpush1.bf16.msra.mxu0 %v1136
    %1533 = vmatprep.subr.bf16.mxu0 %v1145
    %1534 = vmatpush1.bf16.msra.mxu0 %v1144
    %1535 = vmatprep.subr.bf16.mxu0 %v1153
    %1536 = vmatpush1.bf16.msra.mxu0 %v1152
    %1537 = vmatprep.subr.bf16.mxu0 %v1161
    %1538 = vmatpush1.bf16.msra.mxu0 %v1160
    %1539 = vmatprep.subr.bf16.mxu0 %v1169
    %1540 = vmatpush1.bf16.msra.mxu0 %v1168
    %1541 = vmatprep.subr.bf16.mxu0 %v1177
    %1542 = vmatpush1.bf16.msra.mxu0 %v1176
    %1543 = vmatprep.subr.bf16.mxu0 %v1185
    %1544 = vmatpush1.bf16.msra.mxu0 %v1184
    %1545 = vmatprep.subr.bf16.mxu0 %v1193
    %1546 = vmatpush1.bf16.msra.mxu0 %v1192
    %1547 = vmatprep.subr.bf16.mxu0 %v1201
    %1548 = vmatpush1.bf16.msra.mxu0 %v1200
    %1549 = vmatprep.subr.bf16.mxu0 %v1209
    %1550 = vmatpush1.bf16.msra.mxu0 %v1208
    %1551 = vmatprep.subr.bf16.mxu0 %v1217
    %1552 = vmatpush1.bf16.msra.mxu0 %v1216
    %1553 = vmatprep.subr.bf16.mxu0 %v1225
    %1554 = vmatpush1.bf16.msra.mxu0 %v1224
    %1555 = vmatprep.subr.bf16.mxu0 %v1233
    %1556 = vmatpush1.bf16.msra.mxu0 %v1232
    %1557 = vmatprep.mubr.bf16.mxu0 %v1237
    %1558 = vmatmul.mubr.bf16.gmra.mrb[0].mxu0 %v1236
    %v1559 = vpop.f32.mrb[0].mxu0
    %v1560 = vadd.f32 %v1519, %v1559
    %v1561 = vpop.f32.mrb[0].mxu0
    %v1562 = vadd.f32 %v1521, %v1561
    %v1563 = vpop.f32.mrb[0].mxu0
    %v1564 = vpop.f32.mrb[0].mxu0
    %1565 = vdwg.mxu0
    %v1566 = vld [vmem:[#allocation13 + $0x1a] sm:$0xff]
    %v1568 = vlaneseq
    %v1569 = vshrl.u32 %v1568, 7
    %v1570 = vsub.s32 0, %v1569
    %v1571 = vrot.slane %v1566, %v1570
    %v1572 = vlaneseq
    %v1573 = vshrl.u32 %v1572, 7
    %v1574 = vsub.s32 1, %v1573
    %v1575 = vrot.slane %v1566, %v1574
    %v1576 = vlaneseq
    %v1577 = vshrl.u32 %v1576, 7
    %v1578 = vsub.s32 2, %v1577
    %v1579 = vrot.slane %v1566, %v1578
    %v1580 = vlaneseq
    %v1581 = vshrl.u32 %v1580, 7
    %v1582 = vsub.s32 3, %v1581
    %v1583 = vrot.slane %v1566, %v1582
    %v1584 = vlaneseq
    %v1585 = vshrl.u32 %v1584, 7
    %v1586 = vsub.s32 4, %v1585
    %v1587 = vrot.slane %v1566, %v1586
    %v1588 = vlaneseq
    %v1589 = vshrl.u32 %v1588, 7
    %v1590 = vsub.s32 5, %v1589
    %v1591 = vrot.slane %v1566, %v1590
    %v1592 = vlaneseq
    %v1593 = vshrl.u32 %v1592, 7
    %v1594 = vsub.s32 6, %v1593
    %v1595 = vrot.slane %v1566, %v1594
    %v1596 = vlaneseq
    %v1597 = vshrl.u32 %v1596, 7
    %v1598 = vsub.s32 7, %v1597
    %v1599 = vrot.slane %v1566, %v1598
    %v1608 = vmul.f32 %v1314, %v1571
    %v1609 = vmul.f32 %v1316, %v1575
    %v1610 = vmul.f32 %v1396, %v1579
    %v1611 = vmul.f32 %v1398, %v1583
    %v1612 = vmul.f32 %v1478, %v1587
    %v1613 = vmul.f32 %v1480, %v1591
    %v1614 = vmul.f32 %v1560, %v1595
    %v1615 = vmul.f32 %v1562, %v1599
    %v1616 = vld [vmem:[#allocation13 + $0x22] sm:$0xff]
    %v1618 = vlaneseq
    %v1619 = vshrl.u32 %v1618, 7
    %v1620 = vsub.s32 0, %v1619
    %v1621 = vrot.slane %v1616, %v1620
    %v1622 = vlaneseq
    %v1623 = vshrl.u32 %v1622, 7
    %v1624 = vsub.s32 1, %v1623
    %v1625 = vrot.slane %v1616, %v1624
    %v1626 = vlaneseq
    %v1627 = vshrl.u32 %v1626, 7
    %v1628 = vsub.s32 2, %v1627
    %v1629 = vrot.slane %v1616, %v1628
    %v1630 = vlaneseq
    %v1631 = vshrl.u32 %v1630, 7
    %v1632 = vsub.s32 3, %v1631
    %v1633 = vrot.slane %v1616, %v1632
    %v1634 = vlaneseq
    %v1635 = vshrl.u32 %v1634, 7
    %v1636 = vsub.s32 4, %v1635
    %v1637 = vrot.slane %v1616, %v1636
    %v1638 = vlaneseq
    %v1639 = vshrl.u32 %v1638, 7
    %v1640 = vsub.s32 5, %v1639
    %v1641 = vrot.slane %v1616, %v1640
    %v1642 = vlaneseq
    %v1643 = vshrl.u32 %v1642, 7
    %v1644 = vsub.s32 6, %v1643
    %v1645 = vrot.slane %v1616, %v1644
    %v1646 = vlaneseq
    %v1647 = vshrl.u32 %v1646, 7
    %v1648 = vsub.s32 7, %v1647
    %v1649 = vrot.slane %v1616, %v1648
    %v1658 = vadd.f32 %v1608, %v1621
    %v1659 = vadd.f32 %v1609, %v1625
    %v1660 = vadd.f32 %v1610, %v1629
    %v1661 = vadd.f32 %v1611, %v1633
    %v1662 = vadd.f32 %v1612, %v1637
    %v1663 = vadd.f32 %v1613, %v1641
    %v1664 = vadd.f32 %v1614, %v1645
    %v1665 = vadd.f32 %v1615, %v1649
    %v1666 = vsel %vm278, %v1658, 0.0
    %v1667 = vrot.slane %v1666, 4
    %v1668 = vadd.f32 %v1666, %v1667
    %v1669 = vrot.slane %v1668, 2
    %v1670 = vadd.f32 %v1668, %v1669
    %v1671 = vrot.slane %v1670, 1
    %v1672 = vadd.f32 %v1670, %v1671
    %v1673 = vsel %vm278, %v1659, 0.0
    %v1674 = vrot.slane %v1673, 4
    %v1675 = vadd.f32 %v1673, %v1674
    %v1676 = vrot.slane %v1675, 2
    %v1677 = vadd.f32 %v1675, %v1676
    %v1678 = vrot.slane %v1677, 1
    %v1679 = vadd.f32 %v1677, %v1678
    %v1680 = vsel %vm278, %v1660, 0.0
    %v1681 = vrot.slane %v1680, 4
    %v1682 = vadd.f32 %v1680, %v1681
    %v1683 = vrot.slane %v1682, 2
    %v1684 = vadd.f32 %v1682, %v1683
    %v1685 = vrot.slane %v1684, 1
    %v1686 = vadd.f32 %v1684, %v1685
    %v1687 = vsel %vm278, %v1661, 0.0
    %v1688 = vrot.slane %v1687, 4
    %v1689 = vadd.f32 %v1687, %v1688
    %v1690 = vrot.slane %v1689, 2
    %v1691 = vadd.f32 %v1689, %v1690
    %v1692 = vrot.slane %v1691, 1
    %v1693 = vadd.f32 %v1691, %v1692
    %v1694 = vsel %vm278, %v1662, 0.0
    %v1695 = vrot.slane %v1694, 4
    %v1696 = vadd.f32 %v1694, %v1695
    %v1697 = vrot.slane %v1696, 2
    %v1698 = vadd.f32 %v1696, %v1697
    %v1699 = vrot.slane %v1698, 1
    %v1700 = vadd.f32 %v1698, %v1699
    %v1701 = vsel %vm278, %v1663, 0.0
    %v1702 = vrot.slane %v1701, 4
    %v1703 = vadd.f32 %v1701, %v1702
    %v1704 = vrot.slane %v1703, 2
    %v1705 = vadd.f32 %v1703, %v1704
    %v1706 = vrot.slane %v1705, 1
    %v1707 = vadd.f32 %v1705, %v1706
    %v1708 = vsel %vm278, %v1664, 0.0
    %v1709 = vrot.slane %v1708, 4
    %v1710 = vadd.f32 %v1708, %v1709
    %v1711 = vrot.slane %v1710, 2
    %v1712 = vadd.f32 %v1710, %v1711
    %v1713 = vrot.slane %v1712, 1
    %v1714 = vadd.f32 %v1712, %v1713
    %v1715 = vsel %vm278, %v1665, 0.0
    %v1716 = vrot.slane %v1715, 4
    %v1717 = vadd.f32 %v1715, %v1716
    %v1718 = vrot.slane %v1717, 2
    %v1719 = vadd.f32 %v1717, %v1718
    %v1720 = vrot.slane %v1719, 1
    %v1721 = vadd.f32 %v1719, %v1720
    %v1722 = vmul.f32 %v1672, %v293
    %v1723 = vmul.f32 %v1679, %v293
    %v1724 = vmul.f32 %v1686, %v293
    %v1725 = vmul.f32 %v1693, %v293
    %v1726 = vmul.f32 %v1700, %v293
    %v1727 = vmul.f32 %v1707, %v293
    %v1728 = vmul.f32 %v1714, %v293
    %v1729 = vmul.f32 %v1721, %v293
    %v1730 = vmul.f32 %v1658, %v1658
    %v1731 = vmul.f32 %v1659, %v1659
    %v1732 = vmul.f32 %v1660, %v1660
    %v1733 = vmul.f32 %v1661, %v1661
    %v1734 = vmul.f32 %v1662, %v1662
    %v1735 = vmul.f32 %v1663, %v1663
    %v1736 = vmul.f32 %v1664, %v1664
    %v1737 = vmul.f32 %v1665, %v1665
    %v1738 = vsel %vm278, %v1730, 0.0
    %v1739 = vrot.slane %v1738, 4
    %v1740 = vadd.f32 %v1738, %v1739
    %v1741 = vrot.slane %v1740, 2
    %v1742 = vadd.f32 %v1740, %v1741
    %v1743 = vrot.slane %v1742, 1
    %v1744 = vadd.f32 %v1742, %v1743
    %v1745 = vsel %vm278, %v1731, 0.0
    %v1746 = vrot.slane %v1745, 4
    %v1747 = vadd.f32 %v1745, %v1746
    %v1748 = vrot.slane %v1747, 2
    %v1749 = vadd.f32 %v1747, %v1748
    %v1750 = vrot.slane %v1749, 1
    %v1751 = vadd.f32 %v1749, %v1750
    %v1752 = vsel %vm278, %v1732, 0.0
    %v1753 = vrot.slane %v1752, 4
    %v1754 = vadd.f32 %v1752, %v1753
    %v1755 = vrot.slane %v1754, 2
    %v1756 = vadd.f32 %v1754, %v1755
    %v1757 = vrot.slane %v1756, 1
    %v1758 = vadd.f32 %v1756, %v1757
    %v1759 = vsel %vm278, %v1733, 0.0
    %v1760 = vrot.slane %v1759, 4
    %v1761 = vadd.f32 %v1759, %v1760
    %v1762 = vrot.slane %v1761, 2
    %v1763 = vadd.f32 %v1761, %v1762
    %v1764 = vrot.slane %v1763, 1
    %v1765 = vadd.f32 %v1763, %v1764
    %v1766 = vsel %vm278, %v1734, 0.0
    %v1767 = vrot.slane %v1766, 4
    %v1768 = vadd.f32 %v1766, %v1767
    %v1769 = vrot.slane %v1768, 2
    %v1770 = vadd.f32 %v1768, %v1769
    %v1771 = vrot.slane %v1770, 1
    %v1772 = vadd.f32 %v1770, %v1771
    %v1773 = vsel %vm278, %v1735, 0.0
    %v1774 = vrot.slane %v1773, 4
    %v1775 = vadd.f32 %v1773, %v1774
    %v1776 = vrot.slane %v1775, 2
    %v1777 = vadd.f32 %v1775, %v1776
    %v1778 = vrot.slane %v1777, 1
    %v1779 = vadd.f32 %v1777, %v1778
    %v1780 = vsel %vm278, %v1736, 0.0
    %v1781 = vrot.slane %v1780, 4
    %v1782 = vadd.f32 %v1780, %v1781
    %v1783 = vrot.slane %v1782, 2
    %v1784 = vadd.f32 %v1782, %v1783
    %v1785 = vrot.slane %v1784, 1
    %v1786 = vadd.f32 %v1784, %v1785
    %v1787 = vsel %vm278, %v1737, 0.0
    %v1788 = vrot.slane %v1787, 4
    %v1789 = vadd.f32 %v1787, %v1788
    %v1790 = vrot.slane %v1789, 2
    %v1791 = vadd.f32 %v1789, %v1790
    %v1792 = vrot.slane %v1791, 1
    %v1793 = vadd.f32 %v1791, %v1792
    %v1794 = vmul.f32 %v1744, %v293
    %v1795 = vmul.f32 %v1751, %v293
    %v1796 = vmul.f32 %v1758, %v293
    %v1797 = vmul.f32 %v1765, %v293
    %v1798 = vmul.f32 %v1772, %v293
    %v1799 = vmul.f32 %v1779, %v293
    %v1800 = vmul.f32 %v1786, %v293
    %v1801 = vmul.f32 %v1793, %v293
    %v1802 = vmul.f32 %v1722, %v1722
    %v1803 = vmul.f32 %v1723, %v1723
    %v1804 = vmul.f32 %v1724, %v1724
    %v1805 = vmul.f32 %v1725, %v1725
    %v1806 = vmul.f32 %v1726, %v1726
    %v1807 = vmul.f32 %v1727, %v1727
    %v1808 = vmul.f32 %v1728, %v1728
    %v1809 = vmul.f32 %v1729, %v1729
    %v1810 = vsub.f32 %v1794, %v1802
    %v1811 = vsub.f32 %v1795, %v1803
    %v1812 = vsub.f32 %v1796, %v1804
    %v1813 = vsub.f32 %v1797, %v1805
    %v1814 = vsub.f32 %v1798, %v1806
    %v1815 = vsub.f32 %v1799, %v1807
    %v1816 = vsub.f32 %v1800, %v1808
    %v1817 = vsub.f32 %v1801, %v1809
    %v1818 = vmax.f32 %v1810, 0.0
    %v1819 = vmax.f32 %v1811, 0.0
    %v1820 = vmax.f32 %v1812, 0.0
    %v1821 = vmax.f32 %v1813, 0.0
    %v1822 = vmax.f32 %v1814, 0.0
    %v1823 = vmax.f32 %v1815, 0.0
    %v1824 = vmax.f32 %v1816, 0.0
    %v1825 = vmax.f32 %v1817, 0.0
    %v1826 = vld [vmem:[#allocation13 + $0x2a] sm:$0xff]
    %v1827 = vadd.f32 %v1818, 1e-05
    %v1828 = vadd.f32 %v1819, 1e-05
    %v1829 = vadd.f32 %v1820, 1e-05
    %v1830 = vadd.f32 %v1821, 1e-05
    %v1831 = vadd.f32 %v1822, 1e-05
    %v1832 = vadd.f32 %v1823, 1e-05
    %v1833 = vadd.f32 %v1824, 1e-05
    %v1834 = vadd.f32 %v1825, 1e-05
    %v1835 = vrsqrt.pop %v1827
    %v1836 = vrsqrt.pop %v1828
    %v1837 = vrsqrt.pop %v1829
    %v1838 = vrsqrt.pop %v1830
    %v1839 = vrsqrt.pop %v1831
    %v1840 = vrsqrt.pop %v1832
    %v1841 = vrsqrt.pop %v1833
    %v1842 = vrsqrt.pop %v1834
    %v1851 = vcombine.low %v1835, %v1836
    %v1852 = vcombine.low %v1837, %v1838
    %v1853 = vcombine.low %v1839, %v1840
    %v1854 = vcombine.low %v1841, %v1842
    %v1856 = vunpack.c.l.s4 1966171168
    %v1857 = vunpack.c.0.s8 %v1856
    %v1858 = vlaneseq
    %v1859 = vshrl.u32 %v1858, 7
    %v1860 = vsub.s32 %v1857, %v1859
    %v1861 = vrot.slane %v1851, %v1860
    %v1863 = vunpack.c.l.s4 1966171168
    %v1864 = vunpack.c.0.s8 %v1863
    %v1865 = vlaneseq
    %v1866 = vshrl.u32 %v1865, 7
    %v1867 = vsub.s32 %v1864, %v1866
    %v1868 = vrot.slane %v1852, %v1867
    %v1870 = vunpack.c.l.s4 1966171168
    %v1871 = vunpack.c.0.s8 %v1870
    %v1872 = vlaneseq
    %v1873 = vshrl.u32 %v1872, 7
    %v1874 = vsub.s32 %v1871, %v1873
    %v1875 = vrot.slane %v1853, %v1874
    %v1877 = vunpack.c.l.s4 1966171168
    %v1878 = vunpack.c.0.s8 %v1877
    %v1879 = vlaneseq
    %v1880 = vshrl.u32 %v1879, 7
    %v1881 = vsub.s32 %v1878, %v1880
    %v1882 = vrot.slane %v1854, %v1881
    %v1883 = vcombine.low %v1861, %v1868
    %v1884 = vcombine.low %v1875, %v1882
    %v1886 = vunpack.c.l.s4 1966171168
    %v1887 = vunpack.c.0.s8 %v1886
    %v1888 = vlaneseq
    %v1889 = vshrl.u32 %v1888, 7
    %v1890 = vsub.s32 %v1887, %v1889
    %v1891 = vrot.slane %v1883, %v1890
    %v1893 = vunpack.c.l.s4 1966171168
    %v1894 = vunpack.c.0.s8 %v1893
    %v1895 = vlaneseq
    %v1896 = vshrl.u32 %v1895, 7
    %v1897 = vsub.s32 %v1894, %v1896
    %v1898 = vrot.slane %v1884, %v1897
    %v1899 = vcombine.low %v1891, %v1898
    %v1901 = vmul.f32 %v1826, %v1899
    %v1902 = vld [vmem:[#allocation13 + $0x32] sm:$0xff]
    %v1904 = vlaneseq
    %v1905 = vshrl.u32 %v1904, 7
    %v1906 = vsub.s32 0, %v1905
    %v1907 = vrot.slane %v1901, %v1906
    %v1908 = vlaneseq
    %v1909 = vshrl.u32 %v1908, 7
    %v1910 = vsub.s32 1, %v1909
    %v1911 = vrot.slane %v1901, %v1910
    %v1912 = vlaneseq
    %v1913 = vshrl.u32 %v1912, 7
    %v1914 = vsub.s32 2, %v1913
    %v1915 = vrot.slane %v1901, %v1914
    %v1916 = vlaneseq
    %v1917 = vshrl.u32 %v1916, 7
    %v1918 = vsub.s32 3, %v1917
    %v1919 = vrot.slane %v1901, %v1918
    %v1920 = vlaneseq
    %v1921 = vshrl.u32 %v1920, 7
    %v1922 = vsub.s32 4, %v1921
    %v1923 = vrot.slane %v1901, %v1922
    %v1924 = vlaneseq
    %v1925 = vshrl.u32 %v1924, 7
    %v1926 = vsub.s32 5, %v1925
    %v1927 = vrot.slane %v1901, %v1926
    %v1928 = vlaneseq
    %v1929 = vshrl.u32 %v1928, 7
    %v1930 = vsub.s32 6, %v1929
    %v1931 = vrot.slane %v1901, %v1930
    %v1932 = vlaneseq
    %v1933 = vshrl.u32 %v1932, 7
    %v1934 = vsub.s32 7, %v1933
    %v1935 = vrot.slane %v1901, %v1934
    %v1944 = vmul.f32 %v1722, %v1907
    %v1945 = vmul.f32 %v1723, %v1911
    %v1946 = vmul.f32 %v1724, %v1915
    %v1947 = vmul.f32 %v1725, %v1919
    %v1948 = vmul.f32 %v1726, %v1923
    %v1949 = vmul.f32 %v1727, %v1927
    %v1950 = vmul.f32 %v1728, %v1931
    %v1951 = vmul.f32 %v1729, %v1935
    %v1960 = vcombine.low %v1944, %v1945
    %v1961 = vcombine.low %v1946, %v1947
    %v1962 = vcombine.low %v1948, %v1949
    %v1963 = vcombine.low %v1950, %v1951
    %v1965 = vunpack.c.l.s4 1966171168
    %v1966 = vunpack.c.0.s8 %v1965
    %v1967 = vlaneseq
    %v1968 = vshrl.u32 %v1967, 7
    %v1969 = vsub.s32 %v1966, %v1968
    %v1970 = vrot.slane %v1960, %v1969
    %v1972 = vunpack.c.l.s4 1966171168
    %v1973 = vunpack.c.0.s8 %v1972
    %v1974 = vlaneseq
    %v1975 = vshrl.u32 %v1974, 7
    %v1976 = vsub.s32 %v1973, %v1975
    %v1977 = vrot.slane %v1961, %v1976
    %v1979 = vunpack.c.l.s4 1966171168
    %v1980 = vunpack.c.0.s8 %v1979
    %v1981 = vlaneseq
    %v1982 = vshrl.u32 %v1981, 7
    %v1983 = vsub.s32 %v1980, %v1982
    %v1984 = vrot.slane %v1962, %v1983
    %v1986 = vunpack.c.l.s4 1966171168
    %v1987 = vunpack.c.0.s8 %v1986
    %v1988 = vlaneseq
    %v1989 = vshrl.u32 %v1988, 7
    %v1990 = vsub.s32 %v1987, %v1989
    %v1991 = vrot.slane %v1963, %v1990
    %v1992 = vcombine.low %v1970, %v1977
    %v1993 = vcombine.low %v1984, %v1991
    %v1995 = vunpack.c.l.s4 1966171168
    %v1996 = vunpack.c.0.s8 %v1995
    %v1997 = vlaneseq
    %v1998 = vshrl.u32 %v1997, 7
    %v1999 = vsub.s32 %v1996, %v1998
    %v2000 = vrot.slane %v1992, %v1999
    %v2002 = vunpack.c.l.s4 1966171168
    %v2003 = vunpack.c.0.s8 %v2002
    %v2004 = vlaneseq
    %v2005 = vshrl.u32 %v2004, 7
    %v2006 = vsub.s32 %v2003, %v2005
    %v2007 = vrot.slane %v1993, %v2006
    %v2008 = vcombine.low %v2000, %v2007
    %v2010 = vsub.f32 %v1902, %v2008
    %v2011 = vmul.f32 %v1658, %v1907
    %v2012 = vmul.f32 %v1659, %v1911
    %v2013 = vmul.f32 %v1660, %v1915
    %v2014 = vmul.f32 %v1661, %v1919
    %v2015 = vmul.f32 %v1662, %v1923
    %v2016 = vmul.f32 %v1663, %v1927
    %v2017 = vmul.f32 %v1664, %v1931
    %v2018 = vmul.f32 %v1665, %v1935
    %v2020 = vlaneseq
    %v2021 = vshrl.u32 %v2020, 7
    %v2022 = vsub.s32 0, %v2021
    %v2023 = vrot.slane %v2010, %v2022
    %v2024 = vlaneseq
    %v2025 = vshrl.u32 %v2024, 7
    %v2026 = vsub.s32 1, %v2025
    %v2027 = vrot.slane %v2010, %v2026
    %v2028 = vlaneseq
    %v2029 = vshrl.u32 %v2028, 7
    %v2030 = vsub.s32 2, %v2029
    %v2031 = vrot.slane %v2010, %v2030
    %v2032 = vlaneseq
    %v2033 = vshrl.u32 %v2032, 7
    %v2034 = vsub.s32 3, %v2033
    %v2035 = vrot.slane %v2010, %v2034
    %v2036 = vlaneseq
    %v2037 = vshrl.u32 %v2036, 7
    %v2038 = vsub.s32 4, %v2037
    %v2039 = vrot.slane %v2010, %v2038
    %v2040 = vlaneseq
    %v2041 = vshrl.u32 %v2040, 7
    %v2042 = vsub.s32 5, %v2041
    %v2043 = vrot.slane %v2010, %v2042
    %v2044 = vlaneseq
    %v2045 = vshrl.u32 %v2044, 7
    %v2046 = vsub.s32 6, %v2045
    %v2047 = vrot.slane %v2010, %v2046
    %v2048 = vlaneseq
    %v2049 = vshrl.u32 %v2048, 7
    %v2050 = vsub.s32 7, %v2049
    %v2051 = vrot.slane %v2010, %v2050
    %v2060 = vadd.f32 %v2011, %v2023
    %v2061 = vadd.f32 %v2012, %v2027
    %v2062 = vadd.f32 %v2013, %v2031
    %v2063 = vadd.f32 %v2014, %v2035
    %v2064 = vadd.f32 %v2015, %v2039
    %v2065 = vadd.f32 %v2016, %v2043
    %v2066 = vadd.f32 %v2017, %v2047
    %v2067 = vadd.f32 %v2018, %v2051
    %vm2068 = vcmp.gt.f32.partialorder %v2060, 0.0
    %vm2069 = vcmp.gt.f32.partialorder %v2061, 0.0
    %vm2070 = vcmp.gt.f32.partialorder %v2062, 0.0
    %vm2071 = vcmp.gt.f32.partialorder %v2063, 0.0
    %vm2072 = vcmp.gt.f32.partialorder %v2064, 0.0
    %vm2073 = vcmp.gt.f32.partialorder %v2065, 0.0
    %vm2074 = vcmp.gt.f32.partialorder %v2066, 0.0
    %vm2075 = vcmp.gt.f32.partialorder %v2067, 0.0
    %v2076 = vmul.f32 %v2060, 0.2
    %v2077 = vmul.f32 %v2061, 0.2
    %v2078 = vmul.f32 %v2062, 0.2
    %v2079 = vmul.f32 %v2063, 0.2
    %v2080 = vmul.f32 %v2064, 0.2
    %v2081 = vmul.f32 %v2065, 0.2
    %v2082 = vmul.f32 %v2066, 0.2
    %v2083 = vmul.f32 %v2067, 0.2
    %v2084 = vsel %vm2068, %v2060, %v2076
    %v2085 = vsel %vm2069, %v2061, %v2077
    %v2086 = vsel %vm2070, %v2062, %v2078
    %v2087 = vsel %vm2071, %v2063, %v2079
    %v2088 = vsel %vm2072, %v2064, %v2080
    %v2089 = vsel %vm2073, %v2065, %v2081
    %v2090 = vsel %vm2074, %v2066, %v2082
    %v2091 = vsel %vm2075, %v2067, %v2083
    %s2092 = smul.u32 2, 128
    %s2093 = smul.u32 %s2092, 7
    %s2094 = sshll.u32 %s2093, 4
    %2095 = dma.done %s99, %s2094
    %v2096 = vld [vmem:[#allocation3] sm:$0xff]
    %v2097 = vld [vmem:[#allocation3 + $0x8] sm:$0xff]
    %v2098 = vld [vmem:[#allocation3 + $0x10] sm:$0xff]
    %v2099 = vld [vmem:[#allocation3 + $0x18] sm:$0xff]
    %v2100 = vld [vmem:[#allocation3 + $0x20] sm:$0xff]
    %v2101 = vld [vmem:[#allocation3 + $0x28] sm:$0xff]
    %v2102 = vld [vmem:[#allocation3 + $0x30] sm:$0xff]
    %v2103 = vld [vmem:[#allocation3 + $0x38] sm:$0xff]
    %v2104 = vld [vmem:[#allocation3 + $0x40] sm:$0xff]
    %v2105 = vld [vmem:[#allocation3 + $0x48] sm:$0xff]
    %v2106 = vld [vmem:[#allocation3 + $0x50] sm:$0xff]
    %v2107 = vld [vmem:[#allocation3 + $0x58] sm:$0xff]
    %v2108 = vld [vmem:[#allocation3 + $0x60] sm:$0xff]
    %v2109 = vld [vmem:[#allocation3 + $0x68] sm:$0xff]
    %v2110 = vld [vmem:[#allocation3 + $0x70] sm:$0xff]
    %v2111 = vld [vmem:[#allocation3 + $0x78] sm:$0xff]
    %v2112 = vld [vmem:[#allocation3 + $0x80] sm:$0xff]
    %v2113 = vld [vmem:[#allocation3 + $0x88] sm:$0xff]
    %v2114 = vld [vmem:[#allocation3 + $0x90] sm:$0xff]
    %v2115 = vld [vmem:[#allocation3 + $0x98] sm:$0xff]
    %v2116 = vld [vmem:[#allocation3 + $0xa0] sm:$0xff]
    %v2117 = vld [vmem:[#allocation3 + $0xa8] sm:$0xff]
    %v2118 = vld [vmem:[#allocation3 + $0xb0] sm:$0xff]
    %v2119 = vld [vmem:[#allocation3 + $0xb8] sm:$0xff]
    %v2120 = vld [vmem:[#allocation3 + $0xc0] sm:$0xff]
    %v2121 = vld [vmem:[#allocation3 + $0xc8] sm:$0xff]
    %v2122 = vld [vmem:[#allocation3 + $0xd0] sm:$0xff]
    %v2123 = vld [vmem:[#allocation3 + $0xd8] sm:$0xff]
    %v2124 = vld [vmem:[#allocation3 + $0xe0] sm:$0xff]
    %v2125 = vld [vmem:[#allocation3 + $0xe8] sm:$0xff]
    %v2126 = vld [vmem:[#allocation3 + $0xf0] sm:$0xff]
    %v2127 = vld [vmem:[#allocation3 + $0xf8] sm:$0xff]
    %v2128 = vld [vmem:[#allocation3 + $0x100] sm:$0xff]
    %v2129 = vld [vmem:[#allocation3 + $0x108] sm:$0xff]
    %v2130 = vld [vmem:[#allocation3 + $0x110] sm:$0xff]
    %v2131 = vld [vmem:[#allocation3 + $0x118] sm:$0xff]
    %v2132 = vld [vmem:[#allocation3 + $0x120] sm:$0xff]
    %v2133 = vld [vmem:[#allocation3 + $0x128] sm:$0xff]
    %v2134 = vld [vmem:[#allocation3 + $0x130] sm:$0xff]
    %v2135 = vld [vmem:[#allocation3 + $0x138] sm:$0xff]
    %v2136 = vld [vmem:[#allocation3 + $0x140] sm:$0xff]
    %v2137 = vld [vmem:[#allocation3 + $0x148] sm:$0xff]
    %v2138 = vld [vmem:[#allocation3 + $0x150] sm:$0xff]
    %v2139 = vld [vmem:[#allocation3 + $0x158] sm:$0xff]
    %v2140 = vld [vmem:[#allocation3 + $0x160] sm:$0xff]
    %v2141 = vld [vmem:[#allocation3 + $0x168] sm:$0xff]
    %v2142 = vld [vmem:[#allocation3 + $0x170] sm:$0xff]
    %v2143 = vld [vmem:[#allocation3 + $0x178] sm:$0xff]
    %v2144 = vld [vmem:[#allocation3 + $0x180] sm:$0xff]
    %v2145 = vld [vmem:[#allocation3 + $0x188] sm:$0xff]
    %v2146 = vld [vmem:[#allocation3 + $0x190] sm:$0xff]
    %v2147 = vld [vmem:[#allocation3 + $0x198] sm:$0xff]
    %v2148 = vld [vmem:[#allocation3 + $0x1a0] sm:$0xff]
    %v2149 = vld [vmem:[#allocation3 + $0x1a8] sm:$0xff]
    %v2150 = vld [vmem:[#allocation3 + $0x1b0] sm:$0xff]
    %v2151 = vld [vmem:[#allocation3 + $0x1b8] sm:$0xff]
    %v2152 = vld [vmem:[#allocation3 + $0x1c0] sm:$0xff]
    %v2153 = vld [vmem:[#allocation3 + $0x1c8] sm:$0xff]
    %v2154 = vld [vmem:[#allocation3 + $0x1d0] sm:$0xff]
    %v2155 = vld [vmem:[#allocation3 + $0x1d8] sm:$0xff]
    %v2156 = vld [vmem:[#allocation3 + $0x1e0] sm:$0xff]
    %v2157 = vld [vmem:[#allocation3 + $0x1e8] sm:$0xff]
    %v2158 = vld [vmem:[#allocation3 + $0x1f0] sm:$0xff]
    %v2159 = vld [vmem:[#allocation3 + $0x1f8] sm:$0xff]
    %v2160 = vld [vmem:[#allocation3 + $0x200] sm:$0xff]
    %v2161 = vld [vmem:[#allocation3 + $0x208] sm:$0xff]
    %v2162 = vld [vmem:[#allocation3 + $0x210] sm:$0xff]
    %v2163 = vld [vmem:[#allocation3 + $0x218] sm:$0xff]
    %v2164 = vld [vmem:[#allocation3 + $0x220] sm:$0xff]
    %v2165 = vld [vmem:[#allocation3 + $0x228] sm:$0xff]
    %v2166 = vld [vmem:[#allocation3 + $0x230] sm:$0xff]
    %v2167 = vld [vmem:[#allocation3 + $0x238] sm:$0xff]
    %v2168 = vld [vmem:[#allocation3 + $0x240] sm:$0xff]
    %v2169 = vld [vmem:[#allocation3 + $0x248] sm:$0xff]
    %v2170 = vld [vmem:[#allocation3 + $0x250] sm:$0xff]
    %v2171 = vld [vmem:[#allocation3 + $0x258] sm:$0xff]
    %v2172 = vld [vmem:[#allocation3 + $0x260] sm:$0xff]
    %v2173 = vld [vmem:[#allocation3 + $0x268] sm:$0xff]
    %v2174 = vld [vmem:[#allocation3 + $0x270] sm:$0xff]
    %v2175 = vld [vmem:[#allocation3 + $0x278] sm:$0xff]
    %v2176 = vld [vmem:[#allocation3 + $0x280] sm:$0xff]
    %v2177 = vld [vmem:[#allocation3 + $0x288] sm:$0xff]
    %v2178 = vld [vmem:[#allocation3 + $0x290] sm:$0xff]
    %v2179 = vld [vmem:[#allocation3 + $0x298] sm:$0xff]
    %v2180 = vld [vmem:[#allocation3 + $0x2a0] sm:$0xff]
    %v2181 = vld [vmem:[#allocation3 + $0x2a8] sm:$0xff]
    %v2182 = vld [vmem:[#allocation3 + $0x2b0] sm:$0xff]
    %v2183 = vld [vmem:[#allocation3 + $0x2b8] sm:$0xff]
    %v2184 = vld [vmem:[#allocation3 + $0x2c0] sm:$0xff]
    %v2185 = vld [vmem:[#allocation3 + $0x2c8] sm:$0xff]
    %v2186 = vld [vmem:[#allocation3 + $0x2d0] sm:$0xff]
    %v2187 = vld [vmem:[#allocation3 + $0x2d8] sm:$0xff]
    %v2188 = vld [vmem:[#allocation3 + $0x2e0] sm:$0xff]
    %v2189 = vld [vmem:[#allocation3 + $0x2e8] sm:$0xff]
    %v2190 = vld [vmem:[#allocation3 + $0x2f0] sm:$0xff]
    %v2191 = vld [vmem:[#allocation3 + $0x2f8] sm:$0xff]
    %v2192 = vld [vmem:[#allocation3 + $0x300] sm:$0xff]
    %v2193 = vld [vmem:[#allocation3 + $0x308] sm:$0xff]
    %v2194 = vld [vmem:[#allocation3 + $0x310] sm:$0xff]
    %v2195 = vld [vmem:[#allocation3 + $0x318] sm:$0xff]
    %v2196 = vld [vmem:[#allocation3 + $0x320] sm:$0xff]
    %v2197 = vld [vmem:[#allocation3 + $0x328] sm:$0xff]
    %v2198 = vld [vmem:[#allocation3 + $0x330] sm:$0xff]
    %v2199 = vld [vmem:[#allocation3 + $0x338] sm:$0xff]
    %v2200 = vld [vmem:[#allocation3 + $0x340] sm:$0xff]
    %v2201 = vld [vmem:[#allocation3 + $0x348] sm:$0xff]
    %v2202 = vld [vmem:[#allocation3 + $0x350] sm:$0xff]
    %v2203 = vld [vmem:[#allocation3 + $0x358] sm:$0xff]
    %v2204 = vld [vmem:[#allocation3 + $0x360] sm:$0xff]
    %v2205 = vld [vmem:[#allocation3 + $0x368] sm:$0xff]
    %v2206 = vld [vmem:[#allocation3 + $0x370] sm:$0xff]
    %v2207 = vld [vmem:[#allocation3 + $0x378] sm:$0xff]
    %v2208 = vld [vmem:[#allocation3 + $0x380] sm:$0xff]
    %v2209 = vld [vmem:[#allocation3 + $0x388] sm:$0xff]
    %v2210 = vld [vmem:[#allocation3 + $0x390] sm:$0xff]
    %v2211 = vld [vmem:[#allocation3 + $0x398] sm:$0xff]
    %v2212 = vld [vmem:[#allocation3 + $0x3a0] sm:$0xff]
    %v2213 = vld [vmem:[#allocation3 + $0x3a8] sm:$0xff]
    %v2214 = vld [vmem:[#allocation3 + $0x3b0] sm:$0xff]
    %v2215 = vld [vmem:[#allocation3 + $0x3b8] sm:$0xff]
    %v2216 = vld [vmem:[#allocation3 + $0x3c0] sm:$0xff]
    %v2217 = vld [vmem:[#allocation3 + $0x3c8] sm:$0xff]
    %v2218 = vld [vmem:[#allocation3 + $0x3d0] sm:$0xff]
    %v2219 = vld [vmem:[#allocation3 + $0x3d8] sm:$0xff]
    %v2220 = vld [vmem:[#allocation3 + $0x3e0] sm:$0xff]
    %v2221 = vld [vmem:[#allocation3 + $0x3e8] sm:$0xff]
    %v2222 = vld [vmem:[#allocation3 + $0x3f0] sm:$0xff]
    %v2223 = vld [vmem:[#allocation3 + $0x3f8] sm:$0xff]
    %v2224 = vld [vmem:[#allocation3 + $0x400] sm:$0xff]
    %v2225 = vld [vmem:[#allocation3 + $0x408] sm:$0xff]
    %v2226 = vld [vmem:[#allocation3 + $0x410] sm:$0xff]
    %v2227 = vld [vmem:[#allocation3 + $0x418] sm:$0xff]
    %v2228 = vld [vmem:[#allocation3 + $0x420] sm:$0xff]
    %v2229 = vld [vmem:[#allocation3 + $0x428] sm:$0xff]
    %v2230 = vld [vmem:[#allocation3 + $0x430] sm:$0xff]
    %v2231 = vld [vmem:[#allocation3 + $0x438] sm:$0xff]
    %v2232 = vld [vmem:[#allocation3 + $0x440] sm:$0xff]
    %v2233 = vld [vmem:[#allocation3 + $0x448] sm:$0xff]
    %v2234 = vld [vmem:[#allocation3 + $0x450] sm:$0xff]
    %v2235 = vld [vmem:[#allocation3 + $0x458] sm:$0xff]
    %v2236 = vld [vmem:[#allocation3 + $0x460] sm:$0xff]
    %v2237 = vld [vmem:[#allocation3 + $0x468] sm:$0xff]
    %v2238 = vld [vmem:[#allocation3 + $0x470] sm:$0xff]
    %v2239 = vld [vmem:[#allocation3 + $0x478] sm:$0xff]
    %v2240 = vld [vmem:[#allocation3 + $0x480] sm:$0xff]
    %v2241 = vld [vmem:[#allocation3 + $0x488] sm:$0xff]
    %v2242 = vld [vmem:[#allocation3 + $0x490] sm:$0xff]
    %v2243 = vld [vmem:[#allocation3 + $0x498] sm:$0xff]
    %v2244 = vld [vmem:[#allocation3 + $0x4a0] sm:$0xff]
    %v2245 = vld [vmem:[#allocation3 + $0x4a8] sm:$0xff]
    %v2246 = vld [vmem:[#allocation3 + $0x4b0] sm:$0xff]
    %v2247 = vld [vmem:[#allocation3 + $0x4b8] sm:$0xff]
    %v2248 = vld [vmem:[#allocation3 + $0x4c0] sm:$0xff]
    %v2249 = vld [vmem:[#allocation3 + $0x4c8] sm:$0xff]
    %v2250 = vld [vmem:[#allocation3 + $0x4d0] sm:$0xff]
    %v2251 = vld [vmem:[#allocation3 + $0x4d8] sm:$0xff]
    %v2252 = vld [vmem:[#allocation3 + $0x4e0] sm:$0xff]
    %v2253 = vld [vmem:[#allocation3 + $0x4e8] sm:$0xff]
    %v2254 = vld [vmem:[#allocation3 + $0x4f0] sm:$0xff]
    %v2255 = vld [vmem:[#allocation3 + $0x4f8] sm:$0xff]
    %v2256 = vld [vmem:[#allocation3 + $0x500] sm:$0xff]
    %v2257 = vld [vmem:[#allocation3 + $0x508] sm:$0xff]
    %v2258 = vld [vmem:[#allocation3 + $0x510] sm:$0xff]
    %v2259 = vld [vmem:[#allocation3 + $0x518] sm:$0xff]
    %v2260 = vld [vmem:[#allocation3 + $0x520] sm:$0xff]
    %v2261 = vld [vmem:[#allocation3 + $0x528] sm:$0xff]
    %v2262 = vld [vmem:[#allocation3 + $0x530] sm:$0xff]
    %v2263 = vld [vmem:[#allocation3 + $0x538] sm:$0xff]
    %v2264 = vld [vmem:[#allocation3 + $0x540] sm:$0xff]
    %v2265 = vld [vmem:[#allocation3 + $0x548] sm:$0xff]
    %v2266 = vld [vmem:[#allocation3 + $0x550] sm:$0xff]
    %v2267 = vld [vmem:[#allocation3 + $0x558] sm:$0xff]
    %v2268 = vld [vmem:[#allocation3 + $0x560] sm:$0xff]
    %v2269 = vld [vmem:[#allocation3 + $0x568] sm:$0xff]
    %v2270 = vld [vmem:[#allocation3 + $0x570] sm:$0xff]
    %v2271 = vld [vmem:[#allocation3 + $0x578] sm:$0xff]
    %v2272 = vld [vmem:[#allocation3 + $0x580] sm:$0xff]
    %v2273 = vld [vmem:[#allocation3 + $0x588] sm:$0xff]
    %v2274 = vld [vmem:[#allocation3 + $0x590] sm:$0xff]
    %v2275 = vld [vmem:[#allocation3 + $0x598] sm:$0xff]
    %v2276 = vld [vmem:[#allocation3 + $0x5a0] sm:$0xff]
    %v2277 = vld [vmem:[#allocation3 + $0x5a8] sm:$0xff]
    %v2278 = vld [vmem:[#allocation3 + $0x5b0] sm:$0xff]
    %v2279 = vld [vmem:[#allocation3 + $0x5b8] sm:$0xff]
    %v2280 = vld [vmem:[#allocation3 + $0x5c0] sm:$0xff]
    %v2281 = vld [vmem:[#allocation3 + $0x5c8] sm:$0xff]
    %v2282 = vld [vmem:[#allocation3 + $0x5d0] sm:$0xff]
    %v2283 = vld [vmem:[#allocation3 + $0x5d8] sm:$0xff]
    %v2284 = vld [vmem:[#allocation3 + $0x5e0] sm:$0xff]
    %v2285 = vld [vmem:[#allocation3 + $0x5e8] sm:$0xff]
    %v2286 = vld [vmem:[#allocation3 + $0x5f0] sm:$0xff]
    %v2287 = vld [vmem:[#allocation3 + $0x5f8] sm:$0xff]
    %v2288 = vld [vmem:[#allocation3 + $0x600] sm:$0xff]
    %v2289 = vld [vmem:[#allocation3 + $0x608] sm:$0xff]
    %v2290 = vld [vmem:[#allocation3 + $0x610] sm:$0xff]
    %v2291 = vld [vmem:[#allocation3 + $0x618] sm:$0xff]
    %v2292 = vld [vmem:[#allocation3 + $0x620] sm:$0xff]
    %v2293 = vld [vmem:[#allocation3 + $0x628] sm:$0xff]
    %v2294 = vld [vmem:[#allocation3 + $0x630] sm:$0xff]
    %v2295 = vld [vmem:[#allocation3 + $0x638] sm:$0xff]
    %v2296 = vld [vmem:[#allocation3 + $0x640] sm:$0xff]
    %v2297 = vld [vmem:[#allocation3 + $0x648] sm:$0xff]
    %v2298 = vld [vmem:[#allocation3 + $0x650] sm:$0xff]
    %v2299 = vld [vmem:[#allocation3 + $0x658] sm:$0xff]
    %v2300 = vld [vmem:[#allocation3 + $0x660] sm:$0xff]
    %v2301 = vld [vmem:[#allocation3 + $0x668] sm:$0xff]
    %v2302 = vld [vmem:[#allocation3 + $0x670] sm:$0xff]
    %v2303 = vld [vmem:[#allocation3 + $0x678] sm:$0xff]
    %v2304 = vld [vmem:[#allocation3 + $0x680] sm:$0xff]
    %v2305 = vld [vmem:[#allocation3 + $0x688] sm:$0xff]
    %v2306 = vld [vmem:[#allocation3 + $0x690] sm:$0xff]
    %v2307 = vld [vmem:[#allocation3 + $0x698] sm:$0xff]
    %v2308 = vld [vmem:[#allocation3 + $0x6a0] sm:$0xff]
    %v2309 = vld [vmem:[#allocation3 + $0x6a8] sm:$0xff]
    %v2310 = vld [vmem:[#allocation3 + $0x6b0] sm:$0xff]
    %v2311 = vld [vmem:[#allocation3 + $0x6b8] sm:$0xff]
    %v2312 = vld [vmem:[#allocation3 + $0x6c0] sm:$0xff]
    %v2313 = vld [vmem:[#allocation3 + $0x6c8] sm:$0xff]
    %v2314 = vld [vmem:[#allocation3 + $0x6d0] sm:$0xff]
    %v2315 = vld [vmem:[#allocation3 + $0x6d8] sm:$0xff]
    %v2316 = vld [vmem:[#allocation3 + $0x6e0] sm:$0xff]
    %v2317 = vld [vmem:[#allocation3 + $0x6e8] sm:$0xff]
    %v2318 = vld [vmem:[#allocation3 + $0x6f0] sm:$0xff]
    %v2319 = vld [vmem:[#allocation3 + $0x6f8] sm:$0xff]
    %v2320 = vunpack.c.l.s8.bf16 %v2096
    %v2321 = vunpack.c.l.s8.bf16 %v2097
    %v2322 = vunpack.c.l.s8.bf16 %v2098
    %v2323 = vunpack.c.l.s8.bf16 %v2099
    %v2324 = vunpack.c.l.s8.bf16 %v2100
    %v2325 = vunpack.c.l.s8.bf16 %v2101
    %v2326 = vunpack.c.l.s8.bf16 %v2102
    %v2327 = vunpack.c.h.s8.bf16 %v2096
    %v2328 = vunpack.c.h.s8.bf16 %v2097
    %v2329 = vunpack.c.h.s8.bf16 %v2098
    %v2330 = vunpack.c.h.s8.bf16 %v2099
    %v2331 = vunpack.c.h.s8.bf16 %v2100
    %v2332 = vunpack.c.h.s8.bf16 %v2101
    %v2333 = vunpack.c.h.s8.bf16 %v2102
    %v2334 = vunpack.c.l.s8.bf16 %v2103
    %v2335 = vunpack.c.l.s8.bf16 %v2104
    %v2336 = vunpack.c.l.s8.bf16 %v2105
    %v2337 = vunpack.c.l.s8.bf16 %v2106
    %v2338 = vunpack.c.l.s8.bf16 %v2107
    %v2339 = vunpack.c.l.s8.bf16 %v2108
    %v2340 = vunpack.c.l.s8.bf16 %v2109
    %v2341 = vunpack.c.h.s8.bf16 %v2103
    %v2342 = vunpack.c.h.s8.bf16 %v2104
    %v2343 = vunpack.c.h.s8.bf16 %v2105
    %v2344 = vunpack.c.h.s8.bf16 %v2106
    %v2345 = vunpack.c.h.s8.bf16 %v2107
    %v2346 = vunpack.c.h.s8.bf16 %v2108
    %v2347 = vunpack.c.h.s8.bf16 %v2109
    %v2348 = vunpack.c.l.s8.bf16 %v2110
    %v2349 = vunpack.c.l.s8.bf16 %v2111
    %v2350 = vunpack.c.l.s8.bf16 %v2112
    %v2351 = vunpack.c.l.s8.bf16 %v2113
    %v2352 = vunpack.c.l.s8.bf16 %v2114
    %v2353 = vunpack.c.l.s8.bf16 %v2115
    %v2354 = vunpack.c.l.s8.bf16 %v2116
    %v2355 = vunpack.c.h.s8.bf16 %v2110
    %v2356 = vunpack.c.h.s8.bf16 %v2111
    %v2357 = vunpack.c.h.s8.bf16 %v2112
    %v2358 = vunpack.c.h.s8.bf16 %v2113
    %v2359 = vunpack.c.h.s8.bf16 %v2114
    %v2360 = vunpack.c.h.s8.bf16 %v2115
    %v2361 = vunpack.c.h.s8.bf16 %v2116
    %v2362 = vunpack.c.l.s8.bf16 %v2117
    %v2363 = vunpack.c.l.s8.bf16 %v2118
    %v2364 = vunpack.c.l.s8.bf16 %v2119
    %v2365 = vunpack.c.l.s8.bf16 %v2120
    %v2366 = vunpack.c.l.s8.bf16 %v2121
    %v2367 = vunpack.c.l.s8.bf16 %v2122
    %v2368 = vunpack.c.l.s8.bf16 %v2123
    %v2369 = vunpack.c.h.s8.bf16 %v2117
    %v2370 = vunpack.c.h.s8.bf16 %v2118
    %v2371 = vunpack.c.h.s8.bf16 %v2119
    %v2372 = vunpack.c.h.s8.bf16 %v2120
    %v2373 = vunpack.c.h.s8.bf16 %v2121
    %v2374 = vunpack.c.h.s8.bf16 %v2122
    %v2375 = vunpack.c.h.s8.bf16 %v2123
    %v2376 = vunpack.c.l.s8.bf16 %v2124
    %v2377 = vunpack.c.l.s8.bf16 %v2125
    %v2378 = vunpack.c.l.s8.bf16 %v2126
    %v2379 = vunpack.c.l.s8.bf16 %v2127
    %v2380 = vunpack.c.l.s8.bf16 %v2128
    %v2381 = vunpack.c.l.s8.bf16 %v2129
    %v2382 = vunpack.c.l.s8.bf16 %v2130
    %v2383 = vunpack.c.h.s8.bf16 %v2124
    %v2384 = vunpack.c.h.s8.bf16 %v2125
    %v2385 = vunpack.c.h.s8.bf16 %v2126
    %v2386 = vunpack.c.h.s8.bf16 %v2127
    %v2387 = vunpack.c.h.s8.bf16 %v2128
    %v2388 = vunpack.c.h.s8.bf16 %v2129
    %v2389 = vunpack.c.h.s8.bf16 %v2130
    %v2390 = vunpack.c.l.s8.bf16 %v2131
    %v2391 = vunpack.c.l.s8.bf16 %v2132
    %v2392 = vunpack.c.l.s8.bf16 %v2133
    %v2393 = vunpack.c.l.s8.bf16 %v2134
    %v2394 = vunpack.c.l.s8.bf16 %v2135
    %v2395 = vunpack.c.l.s8.bf16 %v2136
    %v2396 = vunpack.c.l.s8.bf16 %v2137
    %v2397 = vunpack.c.h.s8.bf16 %v2131
    %v2398 = vunpack.c.h.s8.bf16 %v2132
    %v2399 = vunpack.c.h.s8.bf16 %v2133
    %v2400 = vunpack.c.h.s8.bf16 %v2134
    %v2401 = vunpack.c.h.s8.bf16 %v2135
    %v2402 = vunpack.c.h.s8.bf16 %v2136
    %v2403 = vunpack.c.h.s8.bf16 %v2137
    %v2404 = vunpack.c.l.s8.bf16 %v2138
    %v2405 = vunpack.c.l.s8.bf16 %v2139
    %v2406 = vunpack.c.l.s8.bf16 %v2140
    %v2407 = vunpack.c.l.s8.bf16 %v2141
    %v2408 = vunpack.c.l.s8.bf16 %v2142
    %v2409 = vunpack.c.l.s8.bf16 %v2143
    %v2410 = vunpack.c.l.s8.bf16 %v2144
    %v2411 = vunpack.c.h.s8.bf16 %v2138
    %v2412 = vunpack.c.h.s8.bf16 %v2139
    %v2413 = vunpack.c.h.s8.bf16 %v2140
    %v2414 = vunpack.c.h.s8.bf16 %v2141
    %v2415 = vunpack.c.h.s8.bf16 %v2142
    %v2416 = vunpack.c.h.s8.bf16 %v2143
    %v2417 = vunpack.c.h.s8.bf16 %v2144
    %v2418 = vunpack.c.l.s8.bf16 %v2145
    %v2419 = vunpack.c.l.s8.bf16 %v2146
    %v2420 = vunpack.c.l.s8.bf16 %v2147
    %v2421 = vunpack.c.l.s8.bf16 %v2148
    %v2422 = vunpack.c.l.s8.bf16 %v2149
    %v2423 = vunpack.c.l.s8.bf16 %v2150
    %v2424 = vunpack.c.l.s8.bf16 %v2151
    %v2425 = vunpack.c.h.s8.bf16 %v2145
    %v2426 = vunpack.c.h.s8.bf16 %v2146
    %v2427 = vunpack.c.h.s8.bf16 %v2147
    %v2428 = vunpack.c.h.s8.bf16 %v2148
    %v2429 = vunpack.c.h.s8.bf16 %v2149
    %v2430 = vunpack.c.h.s8.bf16 %v2150
    %v2431 = vunpack.c.h.s8.bf16 %v2151
    %v2432 = vunpack.c.l.s8.bf16 %v2152
    %v2433 = vunpack.c.l.s8.bf16 %v2153
    %v2434 = vunpack.c.l.s8.bf16 %v2154
    %v2435 = vunpack.c.l.s8.bf16 %v2155
    %v2436 = vunpack.c.l.s8.bf16 %v2156
    %v2437 = vunpack.c.l.s8.bf16 %v2157
    %v2438 = vunpack.c.l.s8.bf16 %v2158
    %v2439 = vunpack.c.h.s8.bf16 %v2152
    %v2440 = vunpack.c.h.s8.bf16 %v2153
    %v2441 = vunpack.c.h.s8.bf16 %v2154
    %v2442 = vunpack.c.h.s8.bf16 %v2155
    %v2443 = vunpack.c.h.s8.bf16 %v2156
    %v2444 = vunpack.c.h.s8.bf16 %v2157
    %v2445 = vunpack.c.h.s8.bf16 %v2158
    %v2446 = vunpack.c.l.s8.bf16 %v2159
    %v2447 = vunpack.c.l.s8.bf16 %v2160
    %v2448 = vunpack.c.l.s8.bf16 %v2161
    %v2449 = vunpack.c.l.s8.bf16 %v2162
    %v2450 = vunpack.c.l.s8.bf16 %v2163
    %v2451 = vunpack.c.l.s8.bf16 %v2164
    %v2452 = vunpack.c.l.s8.bf16 %v2165
    %v2453 = vunpack.c.h.s8.bf16 %v2159
    %v2454 = vunpack.c.h.s8.bf16 %v2160
    %v2455 = vunpack.c.h.s8.bf16 %v2161
    %v2456 = vunpack.c.h.s8.bf16 %v2162
    %v2457 = vunpack.c.h.s8.bf16 %v2163
    %v2458 = vunpack.c.h.s8.bf16 %v2164
    %v2459 = vunpack.c.h.s8.bf16 %v2165
    %v2460 = vunpack.c.l.s8.bf16 %v2166
    %v2461 = vunpack.c.l.s8.bf16 %v2167
    %v2462 = vunpack.c.l.s8.bf16 %v2168
    %v2463 = vunpack.c.l.s8.bf16 %v2169
    %v2464 = vunpack.c.l.s8.bf16 %v2170
    %v2465 = vunpack.c.l.s8.bf16 %v2171
    %v2466 = vunpack.c.l.s8.bf16 %v2172
    %v2467 = vunpack.c.h.s8.bf16 %v2166
    %v2468 = vunpack.c.h.s8.bf16 %v2167
    %v2469 = vunpack.c.h.s8.bf16 %v2168
    %v2470 = vunpack.c.h.s8.bf16 %v2169
    %v2471 = vunpack.c.h.s8.bf16 %v2170
    %v2472 = vunpack.c.h.s8.bf16 %v2171
    %v2473 = vunpack.c.h.s8.bf16 %v2172
    %v2474 = vunpack.c.l.s8.bf16 %v2173
    %v2475 = vunpack.c.l.s8.bf16 %v2174
    %v2476 = vunpack.c.l.s8.bf16 %v2175
    %v2477 = vunpack.c.l.s8.bf16 %v2176
    %v2478 = vunpack.c.l.s8.bf16 %v2177
    %v2479 = vunpack.c.l.s8.bf16 %v2178
    %v2480 = vunpack.c.l.s8.bf16 %v2179
    %v2481 = vunpack.c.h.s8.bf16 %v2173
    %v2482 = vunpack.c.h.s8.bf16 %v2174
    %v2483 = vunpack.c.h.s8.bf16 %v2175
    %v2484 = vunpack.c.h.s8.bf16 %v2176
    %v2485 = vunpack.c.h.s8.bf16 %v2177
    %v2486 = vunpack.c.h.s8.bf16 %v2178
    %v2487 = vunpack.c.h.s8.bf16 %v2179
    %v2488 = vunpack.c.l.s8.bf16 %v2180
    %v2489 = vunpack.c.l.s8.bf16 %v2181
    %v2490 = vunpack.c.l.s8.bf16 %v2182
    %v2491 = vunpack.c.l.s8.bf16 %v2183
    %v2492 = vunpack.c.l.s8.bf16 %v2184
    %v2493 = vunpack.c.l.s8.bf16 %v2185
    %v2494 = vunpack.c.l.s8.bf16 %v2186
    %v2495 = vunpack.c.h.s8.bf16 %v2180
    %v2496 = vunpack.c.h.s8.bf16 %v2181
    %v2497 = vunpack.c.h.s8.bf16 %v2182
    %v2498 = vunpack.c.h.s8.bf16 %v2183
    %v2499 = vunpack.c.h.s8.bf16 %v2184
    %v2500 = vunpack.c.h.s8.bf16 %v2185
    %v2501 = vunpack.c.h.s8.bf16 %v2186
    %v2502 = vunpack.c.l.s8.bf16 %v2187
    %v2503 = vunpack.c.l.s8.bf16 %v2188
    %v2504 = vunpack.c.l.s8.bf16 %v2189
    %v2505 = vunpack.c.l.s8.bf16 %v2190
    %v2506 = vunpack.c.l.s8.bf16 %v2191
    %v2507 = vunpack.c.l.s8.bf16 %v2192
    %v2508 = vunpack.c.l.s8.bf16 %v2193
    %v2509 = vunpack.c.h.s8.bf16 %v2187
    %v2510 = vunpack.c.h.s8.bf16 %v2188
    %v2511 = vunpack.c.h.s8.bf16 %v2189
    %v2512 = vunpack.c.h.s8.bf16 %v2190
    %v2513 = vunpack.c.h.s8.bf16 %v2191
    %v2514 = vunpack.c.h.s8.bf16 %v2192
    %v2515 = vunpack.c.h.s8.bf16 %v2193
    %v2516 = vunpack.c.l.s8.bf16 %v2194
    %v2517 = vunpack.c.l.s8.bf16 %v2195
    %v2518 = vunpack.c.l.s8.bf16 %v2196
    %v2519 = vunpack.c.l.s8.bf16 %v2197
    %v2520 = vunpack.c.l.s8.bf16 %v2198
    %v2521 = vunpack.c.l.s8.bf16 %v2199
    %v2522 = vunpack.c.l.s8.bf16 %v2200
    %v2523 = vunpack.c.h.s8.bf16 %v2194
    %v2524 = vunpack.c.h.s8.bf16 %v2195
    %v2525 = vunpack.c.h.s8.bf16 %v2196
    %v2526 = vunpack.c.h.s8.bf16 %v2197
    %v2527 = vunpack.c.h.s8.bf16 %v2198
    %v2528 = vunpack.c.h.s8.bf16 %v2199
    %v2529 = vunpack.c.h.s8.bf16 %v2200
    %v2530 = vunpack.c.l.s8.bf16 %v2201
    %v2531 = vunpack.c.l.s8.bf16 %v2202
    %v2532 = vunpack.c.l.s8.bf16 %v2203
    %v2533 = vunpack.c.l.s8.bf16 %v2204
    %v2534 = vunpack.c.l.s8.bf16 %v2205
    %v2535 = vunpack.c.l.s8.bf16 %v2206
    %v2536 = vunpack.c.l.s8.bf16 %v2207
    %v2537 = vunpack.c.h.s8.bf16 %v2201
    %v2538 = vunpack.c.h.s8.bf16 %v2202
    %v2539 = vunpack.c.h.s8.bf16 %v2203
    %v2540 = vunpack.c.h.s8.bf16 %v2204
    %v2541 = vunpack.c.h.s8.bf16 %v2205
    %v2542 = vunpack.c.h.s8.bf16 %v2206
    %v2543 = vunpack.c.h.s8.bf16 %v2207
    %v2544 = vunpack.c.l.s8.bf16 %v2208
    %v2545 = vunpack.c.l.s8.bf16 %v2209
    %v2546 = vunpack.c.l.s8.bf16 %v2210
    %v2547 = vunpack.c.l.s8.bf16 %v2211
    %v2548 = vunpack.c.l.s8.bf16 %v2212
    %v2549 = vunpack.c.l.s8.bf16 %v2213
    %v2550 = vunpack.c.l.s8.bf16 %v2214
    %v2551 = vunpack.c.h.s8.bf16 %v2208
    %v2552 = vunpack.c.h.s8.bf16 %v2209
    %v2553 = vunpack.c.h.s8.bf16 %v2210
    %v2554 = vunpack.c.h.s8.bf16 %v2211
    %v2555 = vunpack.c.h.s8.bf16 %v2212
    %v2556 = vunpack.c.h.s8.bf16 %v2213
    %v2557 = vunpack.c.h.s8.bf16 %v2214
    %v2558 = vunpack.c.l.s8.bf16 %v2215
    %v2559 = vunpack.c.l.s8.bf16 %v2216
    %v2560 = vunpack.c.l.s8.bf16 %v2217
    %v2561 = vunpack.c.l.s8.bf16 %v2218
    %v2562 = vunpack.c.l.s8.bf16 %v2219
    %v2563 = vunpack.c.l.s8.bf16 %v2220
    %v2564 = vunpack.c.l.s8.bf16 %v2221
    %v2565 = vunpack.c.h.s8.bf16 %v2215
    %v2566 = vunpack.c.h.s8.bf16 %v2216
    %v2567 = vunpack.c.h.s8.bf16 %v2217
    %v2568 = vunpack.c.h.s8.bf16 %v2218
    %v2569 = vunpack.c.h.s8.bf16 %v2219
    %v2570 = vunpack.c.h.s8.bf16 %v2220
    %v2571 = vunpack.c.h.s8.bf16 %v2221
    %v2572 = vunpack.c.l.s8.bf16 %v2222
    %v2573 = vunpack.c.l.s8.bf16 %v2223
    %v2574 = vunpack.c.l.s8.bf16 %v2224
    %v2575 = vunpack.c.l.s8.bf16 %v2225
    %v2576 = vunpack.c.l.s8.bf16 %v2226
    %v2577 = vunpack.c.l.s8.bf16 %v2227
    %v2578 = vunpack.c.l.s8.bf16 %v2228
    %v2579 = vunpack.c.h.s8.bf16 %v2222
    %v2580 = vunpack.c.h.s8.bf16 %v2223
    %v2581 = vunpack.c.h.s8.bf16 %v2224
    %v2582 = vunpack.c.h.s8.bf16 %v2225
    %v2583 = vunpack.c.h.s8.bf16 %v2226
    %v2584 = vunpack.c.h.s8.bf16 %v2227
    %v2585 = vunpack.c.h.s8.bf16 %v2228
    %v2586 = vunpack.c.l.s8.bf16 %v2229
    %v2587 = vunpack.c.l.s8.bf16 %v2230
    %v2588 = vunpack.c.l.s8.bf16 %v2231
    %v2589 = vunpack.c.l.s8.bf16 %v2232
    %v2590 = vunpack.c.l.s8.bf16 %v2233
    %v2591 = vunpack.c.l.s8.bf16 %v2234
    %v2592 = vunpack.c.l.s8.bf16 %v2235
    %v2593 = vunpack.c.h.s8.bf16 %v2229
    %v2594 = vunpack.c.h.s8.bf16 %v2230
    %v2595 = vunpack.c.h.s8.bf16 %v2231
    %v2596 = vunpack.c.h.s8.bf16 %v2232
    %v2597 = vunpack.c.h.s8.bf16 %v2233
    %v2598 = vunpack.c.h.s8.bf16 %v2234
    %v2599 = vunpack.c.h.s8.bf16 %v2235
    %v2600 = vunpack.c.l.s8.bf16 %v2236
    %v2601 = vunpack.c.l.s8.bf16 %v2237
    %v2602 = vunpack.c.l.s8.bf16 %v2238
    %v2603 = vunpack.c.l.s8.bf16 %v2239
    %v2604 = vunpack.c.l.s8.bf16 %v2240
    %v2605 = vunpack.c.l.s8.bf16 %v2241
    %v2606 = vunpack.c.l.s8.bf16 %v2242
    %v2607 = vunpack.c.h.s8.bf16 %v2236
    %v2608 = vunpack.c.h.s8.bf16 %v2237
    %v2609 = vunpack.c.h.s8.bf16 %v2238
    %v2610 = vunpack.c.h.s8.bf16 %v2239
    %v2611 = vunpack.c.h.s8.bf16 %v2240
    %v2612 = vunpack.c.h.s8.bf16 %v2241
    %v2613 = vunpack.c.h.s8.bf16 %v2242
    %v2614 = vunpack.c.l.s8.bf16 %v2243
    %v2615 = vunpack.c.l.s8.bf16 %v2244
    %v2616 = vunpack.c.l.s8.bf16 %v2245
    %v2617 = vunpack.c.l.s8.bf16 %v2246
    %v2618 = vunpack.c.l.s8.bf16 %v2247
    %v2619 = vunpack.c.l.s8.bf16 %v2248
    %v2620 = vunpack.c.l.s8.bf16 %v2249
    %v2621 = vunpack.c.h.s8.bf16 %v2243
    %v2622 = vunpack.c.h.s8.bf16 %v2244
    %v2623 = vunpack.c.h.s8.bf16 %v2245
    %v2624 = vunpack.c.h.s8.bf16 %v2246
    %v2625 = vunpack.c.h.s8.bf16 %v2247
    %v2626 = vunpack.c.h.s8.bf16 %v2248
    %v2627 = vunpack.c.h.s8.bf16 %v2249
    %v2628 = vunpack.c.l.s8.bf16 %v2250
    %v2629 = vunpack.c.l.s8.bf16 %v2251
    %v2630 = vunpack.c.l.s8.bf16 %v2252
    %v2631 = vunpack.c.l.s8.bf16 %v2253
    %v2632 = vunpack.c.l.s8.bf16 %v2254
    %v2633 = vunpack.c.l.s8.bf16 %v2255
    %v2634 = vunpack.c.l.s8.bf16 %v2256
    %v2635 = vunpack.c.h.s8.bf16 %v2250
    %v2636 = vunpack.c.h.s8.bf16 %v2251
    %v2637 = vunpack.c.h.s8.bf16 %v2252
    %v2638 = vunpack.c.h.s8.bf16 %v2253
    %v2639 = vunpack.c.h.s8.bf16 %v2254
    %v2640 = vunpack.c.h.s8.bf16 %v2255
    %v2641 = vunpack.c.h.s8.bf16 %v2256
    %v2642 = vunpack.c.l.s8.bf16 %v2257
    %v2643 = vunpack.c.l.s8.bf16 %v2258
    %v2644 = vunpack.c.l.s8.bf16 %v2259
    %v2645 = vunpack.c.l.s8.bf16 %v2260
    %v2646 = vunpack.c.l.s8.bf16 %v2261
    %v2647 = vunpack.c.l.s8.bf16 %v2262
    %v2648 = vunpack.c.l.s8.bf16 %v2263
    %v2649 = vunpack.c.h.s8.bf16 %v2257
    %v2650 = vunpack.c.h.s8.bf16 %v2258
    %v2651 = vunpack.c.h.s8.bf16 %v2259
    %v2652 = vunpack.c.h.s8.bf16 %v2260
    %v2653 = vunpack.c.h.s8.bf16 %v2261
    %v2654 = vunpack.c.h.s8.bf16 %v2262
    %v2655 = vunpack.c.h.s8.bf16 %v2263
    %v2656 = vunpack.c.l.s8.bf16 %v2264
    %v2657 = vunpack.c.l.s8.bf16 %v2265
    %v2658 = vunpack.c.l.s8.bf16 %v2266
    %v2659 = vunpack.c.l.s8.bf16 %v2267
    %v2660 = vunpack.c.l.s8.bf16 %v2268
    %v2661 = vunpack.c.l.s8.bf16 %v2269
    %v2662 = vunpack.c.l.s8.bf16 %v2270
    %v2663 = vunpack.c.h.s8.bf16 %v2264
    %v2664 = vunpack.c.h.s8.bf16 %v2265
    %v2665 = vunpack.c.h.s8.bf16 %v2266
    %v2666 = vunpack.c.h.s8.bf16 %v2267
    %v2667 = vunpack.c.h.s8.bf16 %v2268
    %v2668 = vunpack.c.h.s8.bf16 %v2269
    %v2669 = vunpack.c.h.s8.bf16 %v2270
    %v2670 = vunpack.c.l.s8.bf16 %v2271
    %v2671 = vunpack.c.l.s8.bf16 %v2272
    %v2672 = vunpack.c.l.s8.bf16 %v2273
    %v2673 = vunpack.c.l.s8.bf16 %v2274
    %v2674 = vunpack.c.l.s8.bf16 %v2275
    %v2675 = vunpack.c.l.s8.bf16 %v2276
    %v2676 = vunpack.c.l.s8.bf16 %v2277
    %v2677 = vunpack.c.h.s8.bf16 %v2271
    %v2678 = vunpack.c.h.s8.bf16 %v2272
    %v2679 = vunpack.c.h.s8.bf16 %v2273
    %v2680 = vunpack.c.h.s8.bf16 %v2274
    %v2681 = vunpack.c.h.s8.bf16 %v2275
    %v2682 = vunpack.c.h.s8.bf16 %v2276
    %v2683 = vunpack.c.h.s8.bf16 %v2277
    %v2684 = vunpack.c.l.s8.bf16 %v2278
    %v2685 = vunpack.c.l.s8.bf16 %v2279
    %v2686 = vunpack.c.l.s8.bf16 %v2280
    %v2687 = vunpack.c.l.s8.bf16 %v2281
    %v2688 = vunpack.c.l.s8.bf16 %v2282
    %v2689 = vunpack.c.l.s8.bf16 %v2283
    %v2690 = vunpack.c.l.s8.bf16 %v2284
    %v2691 = vunpack.c.h.s8.bf16 %v2278
    %v2692 = vunpack.c.h.s8.bf16 %v2279
    %v2693 = vunpack.c.h.s8.bf16 %v2280
    %v2694 = vunpack.c.h.s8.bf16 %v2281
    %v2695 = vunpack.c.h.s8.bf16 %v2282
    %v2696 = vunpack.c.h.s8.bf16 %v2283
    %v2697 = vunpack.c.h.s8.bf16 %v2284
    %v2698 = vunpack.c.l.s8.bf16 %v2285
    %v2699 = vunpack.c.l.s8.bf16 %v2286
    %v2700 = vunpack.c.l.s8.bf16 %v2287
    %v2701 = vunpack.c.l.s8.bf16 %v2288
    %v2702 = vunpack.c.l.s8.bf16 %v2289
    %v2703 = vunpack.c.l.s8.bf16 %v2290
    %v2704 = vunpack.c.l.s8.bf16 %v2291
    %v2705 = vunpack.c.h.s8.bf16 %v2285
    %v2706 = vunpack.c.h.s8.bf16 %v2286
    %v2707 = vunpack.c.h.s8.bf16 %v2287
    %v2708 = vunpack.c.h.s8.bf16 %v2288
    %v2709 = vunpack.c.h.s8.bf16 %v2289
    %v2710 = vunpack.c.h.s8.bf16 %v2290
    %v2711 = vunpack.c.h.s8.bf16 %v2291
    %v2712 = vunpack.c.l.s8.bf16 %v2292
    %v2713 = vunpack.c.l.s8.bf16 %v2293
    %v2714 = vunpack.c.l.s8.bf16 %v2294
    %v2715 = vunpack.c.l.s8.bf16 %v2295
    %v2716 = vunpack.c.l.s8.bf16 %v2296
    %v2717 = vunpack.c.l.s8.bf16 %v2297
    %v2718 = vunpack.c.l.s8.bf16 %v2298
    %v2719 = vunpack.c.h.s8.bf16 %v2292
    %v2720 = vunpack.c.h.s8.bf16 %v2293
    %v2721 = vunpack.c.h.s8.bf16 %v2294
    %v2722 = vunpack.c.h.s8.bf16 %v2295
    %v2723 = vunpack.c.h.s8.bf16 %v2296
    %v2724 = vunpack.c.h.s8.bf16 %v2297
    %v2725 = vunpack.c.h.s8.bf16 %v2298
    %v2726 = vunpack.c.l.s8.bf16 %v2299
    %v2727 = vunpack.c.l.s8.bf16 %v2300
    %v2728 = vunpack.c.l.s8.bf16 %v2301
    %v2729 = vunpack.c.l.s8.bf16 %v2302
    %v2730 = vunpack.c.l.s8.bf16 %v2303
    %v2731 = vunpack.c.l.s8.bf16 %v2304
    %v2732 = vunpack.c.l.s8.bf16 %v2305
    %v2733 = vunpack.c.h.s8.bf16 %v2299
    %v2734 = vunpack.c.h.s8.bf16 %v2300
    %v2735 = vunpack.c.h.s8.bf16 %v2301
    %v2736 = vunpack.c.h.s8.bf16 %v2302
    %v2737 = vunpack.c.h.s8.bf16 %v2303
    %v2738 = vunpack.c.h.s8.bf16 %v2304
    %v2739 = vunpack.c.h.s8.bf16 %v2305
    %v2740 = vunpack.c.l.s8.bf16 %v2306
    %v2741 = vunpack.c.l.s8.bf16 %v2307
    %v2742 = vunpack.c.l.s8.bf16 %v2308
    %v2743 = vunpack.c.l.s8.bf16 %v2309
    %v2744 = vunpack.c.l.s8.bf16 %v2310
    %v2745 = vunpack.c.l.s8.bf16 %v2311
    %v2746 = vunpack.c.l.s8.bf16 %v2312
    %v2747 = vunpack.c.h.s8.bf16 %v2306
    %v2748 = vunpack.c.h.s8.bf16 %v2307
    %v2749 = vunpack.c.h.s8.bf16 %v2308
    %v2750 = vunpack.c.h.s8.bf16 %v2309
    %v2751 = vunpack.c.h.s8.bf16 %v2310
    %v2752 = vunpack.c.h.s8.bf16 %v2311
    %v2753 = vunpack.c.h.s8.bf16 %v2312
    %v2754 = vunpack.c.l.s8.bf16 %v2313
    %v2755 = vunpack.c.l.s8.bf16 %v2314
    %v2756 = vunpack.c.l.s8.bf16 %v2315
    %v2757 = vunpack.c.l.s8.bf16 %v2316
    %v2758 = vunpack.c.l.s8.bf16 %v2317
    %v2759 = vunpack.c.l.s8.bf16 %v2318
    %v2760 = vunpack.c.l.s8.bf16 %v2319
    %v2761 = vunpack.c.h.s8.bf16 %v2313
    %v2762 = vunpack.c.h.s8.bf16 %v2314
    %v2763 = vunpack.c.h.s8.bf16 %v2315
    %v2764 = vunpack.c.h.s8.bf16 %v2316
    %v2765 = vunpack.c.h.s8.bf16 %v2317
    %v2766 = vunpack.c.h.s8.bf16 %v2318
    %v2767 = vunpack.c.h.s8.bf16 %v2319
    %v2768 = vpack.c.bf16 %v2084, %v2084
    %v2769 = vpack.c.bf16 %v2085, %v2085
    %v2770 = vpack.c.bf16 %v2086, %v2086
    %v2771 = vpack.c.bf16 %v2087, %v2087
    %v2772 = vpack.c.bf16 %v2088, %v2088
    %v2773 = vpack.c.bf16 %v2089, %v2089
    %v2774 = vpack.c.bf16 %v2090, %v2090
    %v2775 = vpack.c.bf16 %v2091, %v2091
    %2776 = vmatprep.subr.bf16.mxu0 %v2321
    %2777 = vmatpush1.bf16.msra.mxu0 %v2320
    %2778 = vmatprep.subr.bf16.mxu0 %v2328
    %2779 = vmatpush1.bf16.msra.mxu0 %v2327
    %2780 = vmatprep.subr.bf16.mxu0 %v2335
    %2781 = vmatpush1.bf16.msra.mxu0 %v2334
    %2782 = vmatprep.subr.bf16.mxu0 %v2342
    %2783 = vmatpush1.bf16.msra.mxu0 %v2341
    %2784 = vmatprep.subr.bf16.mxu0 %v2349
    %2785 = vmatpush1.bf16.msra.mxu0 %v2348
    %2786 = vmatprep.subr.bf16.mxu0 %v2356
    %2787 = vmatpush1.bf16.msra.mxu0 %v2355
    %2788 = vmatprep.subr.bf16.mxu0 %v2363
    %2789 = vmatpush1.bf16.msra.mxu0 %v2362
    %2790 = vmatprep.subr.bf16.mxu0 %v2370
    %2791 = vmatpush1.bf16.msra.mxu0 %v2369
    %2792 = vmatprep.subr.bf16.mxu0 %v2377
    %2793 = vmatpush1.bf16.msra.mxu0 %v2376
    %2794 = vmatprep.subr.bf16.mxu0 %v2384
    %2795 = vmatpush1.bf16.msra.mxu0 %v2383
    %2796 = vmatprep.subr.bf16.mxu0 %v2391
    %2797 = vmatpush1.bf16.msra.mxu0 %v2390
    %2798 = vmatprep.subr.bf16.mxu0 %v2398
    %2799 = vmatpush1.bf16.msra.mxu0 %v2397
    %2800 = vmatprep.subr.bf16.mxu0 %v2405
    %2801 = vmatpush1.bf16.msra.mxu0 %v2404
    %2802 = vmatprep.subr.bf16.mxu0 %v2412
    %2803 = vmatpush1.bf16.msra.mxu0 %v2411
    %2804 = vmatprep.subr.bf16.mxu0 %v2419
    %2805 = vmatpush1.bf16.msra.mxu0 %v2418
    %2806 = vmatprep.subr.bf16.mxu0 %v2426
    %2807 = vmatpush1.bf16.msra.mxu0 %v2425
    %2808 = vmatprep.mubr.bf16.mxu0 %v2769
    %2809 = vmatmul.mubr.bf16.gmra.mrb[0].mxu0 %v2768
    %v2810 = vpop.f32.mrb[0].mxu0
    %v2811 = vadd.f32 0.0, %v2810
    %v2812 = vpop.f32.mrb[0].mxu0
    %v2813 = vadd.f32 0.0, %v2812
    %v2814 = vpop.f32.mrb[0].mxu0
    %v2815 = vpop.f32.mrb[0].mxu0
    %2816 = vdwg.mxu0
    %2817 = vmatprep.subr.bf16.mxu0 %v2433
    %2818 = vmatpush1.bf16.msra.mxu0 %v2432
    %2819 = vmatprep.subr.bf16.mxu0 %v2440
    %2820 = vmatpush1.bf16.msra.mxu0 %v2439
    %2821 = vmatprep.subr.bf16.mxu0 %v2447
    %2822 = vmatpush1.bf16.msra.mxu0 %v2446
    %2823 = vmatprep.subr.bf16.mxu0 %v2454
    %2824 = vmatpush1.bf16.msra.mxu0 %v2453
    %2825 = vmatprep.subr.bf16.mxu0 %v2461
    %2826 = vmatpush1.bf16.msra.mxu0 %v2460
    %2827 = vmatprep.subr.bf16.mxu0 %v2468
    %2828 = vmatpush1.bf16.msra.mxu0 %v2467
    %2829 = vmatprep.subr.bf16.mxu0 %v2475
    %2830 = vmatpush1.bf16.msra.mxu0 %v2474
    %2831 = vmatprep.subr.bf16.mxu0 %v2482
    %2832 = vmatpush1.bf16.msra.mxu0 %v2481
    %2833 = vmatprep.subr.bf16.mxu0 %v2489
    %2834 = vmatpush1.bf16.msra.mxu0 %v2488
    %2835 = vmatprep.subr.bf16.mxu0 %v2496
    %2836 = vmatpush1.bf16.msra.mxu0 %v2495
    %2837 = vmatprep.subr.bf16.mxu0 %v2503
    %2838 = vmatpush1.bf16.msra.mxu0 %v2502
    %2839 = vmatprep.subr.bf16.mxu0 %v2510
    %2840 = vmatpush1.bf16.msra.mxu0 %v2509
    %2841 = vmatprep.subr.bf16.mxu0 %v2517
    %2842 = vmatpush1.bf16.msra.mxu0 %v2516
    %2843 = vmatprep.subr.bf16.mxu0 %v2524
    %2844 = vmatpush1.bf16.msra.mxu0 %v2523
    %2845 = vmatprep.subr.bf16.mxu0 %v2531
    %2846 = vmatpush1.bf16.msra.mxu0 %v2530
    %2847 = vmatprep.subr.bf16.mxu0 %v2538
    %2848 = vmatpush1.bf16.msra.mxu0 %v2537
    %2849 = vmatprep.mubr.bf16.mxu0 %v2771
    %2850 = vmatmul.mubr.bf16.gmra.mrb[0].mxu0 %v2770
    %v2851 = vpop.f32.mrb[0].mxu0
    %v2852 = vadd.f32 %v2811, %v2851
    %v2853 = vpop.f32.mrb[0].mxu0
    %v2854 = vadd.f32 %v2813, %v2853
    %v2855 = vpop.f32.mrb[0].mxu0
    %v2856 = vpop.f32.mrb[0].mxu0
    %2857 = vdwg.mxu0
    %2858 = vmatprep.subr.bf16.mxu0 %v2545
    %2859 = vmatpush1.bf16.msra.mxu0 %v2544
    %2860 = vmatprep.subr.bf16.mxu0 %v2552
    %2861 = vmatpush1.bf16.msra.mxu0 %v2551
    %2862 = vmatprep.subr.bf16.mxu0 %v2559
    %2863 = vmatpush1.bf16.msra.mxu0 %v2558
    %2864 = vmatprep.subr.bf16.mxu0 %v2566
    %2865 = vmatpush1.bf16.msra.mxu0 %v2565
    %2866 = vmatprep.subr.bf16.mxu0 %v2573
    %2867 = vmatpush1.bf16.msra.mxu0 %v2572
    %2868 = vmatprep.subr.bf16.mxu0 %v2580
    %2869 = vmatpush1.bf16.msra.mxu0 %v2579
    %2870 = vmatprep.subr.bf16.mxu0 %v2587
    %2871 = vmatpush1.bf16.msra.mxu0 %v2586
    %2872 = vmatprep.subr.bf16.mxu0 %v2594
    %2873 = vmatpush1.bf16.msra.mxu0 %v2593
    %2874 = vmatprep.subr.bf16.mxu0 %v2601
    %2875 = vmatpush1.bf16.msra.mxu0 %v2600
    %2876 = vmatprep.subr.bf16.mxu0 %v2608
    %2877 = vmatpush1.bf16.msra.mxu0 %v2607
    %2878 = vmatprep.subr.bf16.mxu0 %v2615
    %2879 = vmatpush1.bf16.msra.mxu0 %v2614
    %2880 = vmatprep.subr.bf16.mxu0 %v2622
    %2881 = vmatpush1.bf16.msra.mxu0 %v2621
    %2882 = vmatprep.subr.bf16.mxu0 %v2629
    %2883 = vmatpush1.bf16.msra.mxu0 %v2628
    %2884 = vmatprep.subr.bf16.mxu0 %v2636
    %2885 = vmatpush1.bf16.msra.mxu0 %v2635
    %2886 = vmatprep.subr.bf16.mxu0 %v2643
    %2887 = vmatpush1.bf16.msra.mxu0 %v2642
    %2888 = vmatprep.subr.bf16.mxu0 %v2650
    %2889 = vmatpush1.bf16.msra.mxu0 %v2649
    %2890 = vmatprep.mubr.bf16.mxu0 %v2773
    %2891 = vmatmul.mubr.bf16.gmra.mrb[0].mxu0 %v2772
    %v2892 = vpop.f32.mrb[0].mxu0
    %v2893 = vadd.f32 %v2852, %v2892
    %v2894 = vpop.f32.mrb[0].mxu0
    %v2895 = vadd.f32 %v2854, %v2894
    %v2896 = vpop.f32.mrb[0].mxu0
    %v2897 = vpop.f32.mrb[0].mxu0
    %2898 = vdwg.mxu0
    %2899 = vmatprep.subr.bf16.mxu0 %v2657
    %2900 = vmatpush1.bf16.msra.mxu0 %v2656
    %2901 = vmatprep.subr.bf16.mxu0 %v2664
    %2902 = vmatpush1.bf16.msra.mxu0 %v2663
    %2903 = vmatprep.subr.bf16.mxu0 %v2671
    %2904 = vmatpush1.bf16.msra.mxu0 %v2670
    %2905 = vmatprep.subr.bf16.mxu0 %v2678
    %2906 = vmatpush1.bf16.msra.mxu0 %v2677
    %2907 = vmatprep.subr.bf16.mxu0 %v2685
    %2908 = vmatpush1.bf16.msra.mxu0 %v2684
    %2909 = vmatprep.subr.bf16.mxu0 %v2692
    %2910 = vmatpush1.bf16.msra.mxu0 %v2691
    %2911 = vmatprep.subr.bf16.mxu0 %v2699
    %2912 = vmatpush1.bf16.msra.mxu0 %v2698
    %2913 = vmatprep.subr.bf16.mxu0 %v2706
    %2914 = vmatpush1.bf16.msra.mxu0 %v2705
    %2915 = vmatprep.subr.bf16.mxu0 %v2713
    %2916 = vmatpush1.bf16.msra.mxu0 %v2712
    %2917 = vmatprep.subr.bf16.mxu0 %v2720
    %2918 = vmatpush1.bf16.msra.mxu0 %v2719
    %2919 = vmatprep.subr.bf16.mxu0 %v2727
    %2920 = vmatpush1.bf16.msra.mxu0 %v2726
    %2921 = vmatprep.subr.bf16.mxu0 %v2734
    %2922 = vmatpush1.bf16.msra.mxu0 %v2733
    %2923 = vmatprep.subr.bf16.mxu0 %v2741
    %2924 = vmatpush1.bf16.msra.mxu0 %v2740
    %2925 = vmatprep.subr.bf16.mxu0 %v2748
    %2926 = vmatpush1.bf16.msra.mxu0 %v2747
    %2927 = vmatprep.subr.bf16.mxu0 %v2755
    %2928 = vmatpush1.bf16.msra.mxu0 %v2754
    %2929 = vmatprep.subr.bf16.mxu0 %v2762
    %2930 = vmatpush1.bf16.msra.mxu0 %v2761
    %2931 = vmatprep.mubr.bf16.mxu0 %v2775
    %2932 = vmatmul.mubr.bf16.gmra.mrb[0].mxu0 %v2774
    %v2933 = vpop.f32.mrb[0].mxu0
    %v2934 = vadd.f32 %v2893, %v2933
    %v2935 = vpop.f32.mrb[0].mxu0
    %v2936 = vadd.f32 %v2895, %v2935
    %v2937 = vpop.f32.mrb[0].mxu0
    %v2938 = vpop.f32.mrb[0].mxu0
    %2939 = vdwg.mxu0
    %2940 = vmatprep.subr.bf16.mxu0 %v2323
    %2941 = vmatpush1.bf16.msra.mxu0 %v2322
    %2942 = vmatprep.subr.bf16.mxu0 %v2330
    %2943 = vmatpush1.bf16.msra.mxu0 %v2329
    %2944 = vmatprep.subr.bf16.mxu0 %v2337
    %2945 = vmatpush1.bf16.msra.mxu0 %v2336
    %2946 = vmatprep.subr.bf16.mxu0 %v2344
    %2947 = vmatpush1.bf16.msra.mxu0 %v2343
    %2948 = vmatprep.subr.bf16.mxu0 %v2351
    %2949 = vmatpush1.bf16.msra.mxu0 %v2350
    %2950 = vmatprep.subr.bf16.mxu0 %v2358
    %2951 = vmatpush1.bf16.msra.mxu0 %v2357
    %2952 = vmatprep.subr.bf16.mxu0 %v2365
    %2953 = vmatpush1.bf16.msra.mxu0 %v2364
    %2954 = vmatprep.subr.bf16.mxu0 %v2372
    %2955 = vmatpush1.bf16.msra.mxu0 %v2371
    %2956 = vmatprep.subr.bf16.mxu0 %v2379
    %2957 = vmatpush1.bf16.msra.mxu0 %v2378
    %2958 = vmatprep.subr.bf16.mxu0 %v2386
    %2959 = vmatpush1.bf16.msra.mxu0 %v2385
    %2960 = vmatprep.subr.bf16.mxu0 %v2393
    %2961 = vmatpush1.bf16.msra.mxu0 %v2392
    %2962 = vmatprep.subr.bf16.mxu0 %v2400
    %2963 = vmatpush1.bf16.msra.mxu0 %v2399
    %2964 = vmatprep.subr.bf16.mxu0 %v2407
    %2965 = vmatpush1.bf16.msra.mxu0 %v2406
    %2966 = vmatprep.subr.bf16.mxu0 %v2414
    %2967 = vmatpush1.bf16.msra.mxu0 %v2413
    %2968 = vmatprep.subr.bf16.mxu0 %v2421
    %2969 = vmatpush1.bf16.msra.mxu0 %v2420
    %2970 = vmatprep.subr.bf16.mxu0 %v2428
    %2971 = vmatpush1.bf16.msra.mxu0 %v2427
    %2972 = vmatprep.mubr.bf16.mxu0 %v2769
    %2973 = vmatmul.mubr.bf16.gmra.mrb[0].mxu0 %v2768
    %v2974 = vpop.f32.mrb[0].mxu0
    %v2975 = vadd.f32 0.0, %v2974
    %v2976 = vpop.f32.mrb[0].mxu0
    %v2977 = vadd.f32 0.0, %v2976
    %v2978 = vpop.f32.mrb[0].mxu0
    %v2979 = vpop.f32.mrb[0].mxu0
    %2980 = vdwg.mxu0
    %2981 = vmatprep.subr.bf16.mxu0 %v2435
    %2982 = vmatpush1.bf16.msra.mxu0 %v2434
    %2983 = vmatprep.subr.bf16.mxu0 %v2442
    %2984 = vmatpush1.bf16.msra.mxu0 %v2441
    %2985 = vmatprep.subr.bf16.mxu0 %v2449
    %2986 = vmatpush1.bf16.msra.mxu0 %v2448
    %2987 = vmatprep.subr.bf16.mxu0 %v2456
    %2988 = vmatpush1.bf16.msra.mxu0 %v2455
    %2989 = vmatprep.subr.bf16.mxu0 %v2463
    %2990 = vmatpush1.bf16.msra.mxu0 %v2462
    %2991 = vmatprep.subr.bf16.mxu0 %v2470
    %2992 = vmatpush1.bf16.msra.mxu0 %v2469
    %2993 = vmatprep.subr.bf16.mxu0 %v2477
    %2994 = vmatpush1.bf16.msra.mxu0 %v2476
    %2995 = vmatprep.subr.bf16.mxu0 %v2484
    %2996 = vmatpush1.bf16.msra.mxu0 %v2483
    %2997 = vmatprep.subr.bf16.mxu0 %v2491
    %2998 = vmatpush1.bf16.msra.mxu0 %v2490
    %2999 = vmatprep.subr.bf16.mxu0 %v2498
    %3000 = vmatpush1.bf16.msra.mxu0 %v2497
    %3001 = vmatprep.subr.bf16.mxu0 %v2505
    %3002 = vmatpush1.bf16.msra.mxu0 %v2504
    %3003 = vmatprep.subr.bf16.mxu0 %v2512
    %3004 = vmatpush1.bf16.msra.mxu0 %v2511
    %3005 = vmatprep.subr.bf16.mxu0 %v2519
    %3006 = vmatpush1.bf16.msra.mxu0 %v2518
    %3007 = vmatprep.subr.bf16.mxu0 %v2526
    %3008 = vmatpush1.bf16.msra.mxu0 %v2525
    %3009 = vmatprep.subr.bf16.mxu0 %v2533
    %3010 = vmatpush1.bf16.msra.mxu0 %v2532
    %3011 = vmatprep.subr.bf16.mxu0 %v2540
    %3012 = vmatpush1.bf16.msra.mxu0 %v2539
    %3013 = vmatprep.mubr.bf16.mxu0 %v2771
    %3014 = vmatmul.mubr.bf16.gmra.mrb[0].mxu0 %v2770
    %v3015 = vpop.f32.mrb[0].mxu0
    %v3016 = vadd.f32 %v2975, %v3015
    %v3017 = vpop.f32.mrb[0].mxu0
    %v3018 = vadd.f32 %v2977, %v3017
    %v3019 = vpop.f32.mrb[0].mxu0
    %v3020 = vpop.f32.mrb[0].mxu0
    %3021 = vdwg.mxu0
    %3022 = vmatprep.subr.bf16.mxu0 %v2547
    %3023 = vmatpush1.bf16.msra.mxu0 %v2546
    %3024 = vmatprep.subr.bf16.mxu0 %v2554
    %3025 = vmatpush1.bf16.msra.mxu0 %v2553
    %3026 = vmatprep.subr.bf16.mxu0 %v2561
    %3027 = vmatpush1.bf16.msra.mxu0 %v2560
    %3028 = vmatprep.subr.bf16.mxu0 %v2568
    %3029 = vmatpush1.bf16.msra.mxu0 %v2567
    %3030 = vmatprep.subr.bf16.mxu0 %v2575
    %3031 = vmatpush1.bf16.msra.mxu0 %v2574
    %3032 = vmatprep.subr.bf16.mxu0 %v2582
    %3033 = vmatpush1.bf16.msra.mxu0 %v2581
    %3034 = vmatprep.subr.bf16.mxu0 %v2589
    %3035 = vmatpush1.bf16.msra.mxu0 %v2588
    %3036 = vmatprep.subr.bf16.mxu0 %v2596
    %3037 = vmatpush1.bf16.msra.mxu0 %v2595
    %3038 = vmatprep.subr.bf16.mxu0 %v2603
    %3039 = vmatpush1.bf16.msra.mxu0 %v2602
    %3040 = vmatprep.subr.bf16.mxu0 %v2610
    %3041 = vmatpush1.bf16.msra.mxu0 %v2609
    %3042 = vmatprep.subr.bf16.mxu0 %v2617
    %3043 = vmatpush1.bf16.msra.mxu0 %v2616
    %3044 = vmatprep.subr.bf16.mxu0 %v2624
    %3045 = vmatpush1.bf16.msra.mxu0 %v2623
    %3046 = vmatprep.subr.bf16.mxu0 %v2631
    %3047 = vmatpush1.bf16.msra.mxu0 %v2630
    %3048 = vmatprep.subr.bf16.mxu0 %v2638
    %3049 = vmatpush1.bf16.msra.mxu0 %v2637
    %3050 = vmatprep.subr.bf16.mxu0 %v2645
    %3051 = vmatpush1.bf16.msra.mxu0 %v2644
    %3052 = vmatprep.subr.bf16.mxu0 %v2652
    %3053 = vmatpush1.bf16.msra.mxu0 %v2651
    %3054 = vmatprep.mubr.bf16.mxu0 %v2773
    %3055 = vmatmul.mubr.bf16.gmra.mrb[0].mxu0 %v2772
    %v3056 = vpop.f32.mrb[0].mxu0
    %v3057 = vadd.f32 %v3016, %v3056
    %v3058 = vpop.f32.mrb[0].mxu0
    %v3059 = vadd.f32 %v3018, %v3058
    %v3060 = vpop.f32.mrb[0].mxu0
    %v3061 = vpop.f32.mrb[0].mxu0
    %3062 = vdwg.mxu0
    %3063 = vmatprep.subr.bf16.mxu0 %v2659
    %3064 = vmatpush1.bf16.msra.mxu0 %v2658
    %3065 = vmatprep.subr.bf16.mxu0 %v2666
    %3066 = vmatpush1.bf16.msra.mxu0 %v2665
    %3067 = vmatprep.subr.bf16.mxu0 %v2673
    %3068 = vmatpush1.bf16.msra.mxu0 %v2672
    %3069 = vmatprep.subr.bf16.mxu0 %v2680
    %3070 = vmatpush1.bf16.msra.mxu0 %v2679
    %3071 = vmatprep.subr.bf16.mxu0 %v2687
    %3072 = vmatpush1.bf16.msra.mxu0 %v2686
    %3073 = vmatprep.subr.bf16.mxu0 %v2694
    %3074 = vmatpush1.bf16.msra.mxu0 %v2693
    %3075 = vmatprep.subr.bf16.mxu0 %v2701
    %3076 = vmatpush1.bf16.msra.mxu0 %v2700
    %3077 = vmatprep.subr.bf16.mxu0 %v2708
    %3078 = vmatpush1.bf16.msra.mxu0 %v2707
    %3079 = vmatprep.subr.bf16.mxu0 %v2715
    %3080 = vmatpush1.bf16.msra.mxu0 %v2714
    %3081 = vmatprep.subr.bf16.mxu0 %v2722
    %3082 = vmatpush1.bf16.msra.mxu0 %v2721
    %3083 = vmatprep.subr.bf16.mxu0 %v2729
    %3084 = vmatpush1.bf16.msra.mxu0 %v2728
    %3085 = vmatprep.subr.bf16.mxu0 %v2736
    %3086 = vmatpush1.bf16.msra.mxu0 %v2735
    %3087 = vmatprep.subr.bf16.mxu0 %v2743
    %3088 = vmatpush1.bf16.msra.mxu0 %v2742
    %3089 = vmatprep.subr.bf16.mxu0 %v2750
    %3090 = vmatpush1.bf16.msra.mxu0 %v2749
    %3091 = vmatprep.subr.bf16.mxu0 %v2757
    %3092 = vmatpush1.bf16.msra.mxu0 %v2756
    %3093 = vmatprep.subr.bf16.mxu0 %v2764
    %3094 = vmatpush1.bf16.msra.mxu0 %v2763
    %3095 = vmatprep.mubr.bf16.mxu0 %v2775
    %3096 = vmatmul.mubr.bf16.gmra.mrb[0].mxu0 %v2774
    %v3097 = vpop.f32.mrb[0].mxu0
    %v3098 = vadd.f32 %v3057, %v3097
    %v3099 = vpop.f32.mrb[0].mxu0
    %v3100 = vadd.f32 %v3059, %v3099
    %v3101 = vpop.f32.mrb[0].mxu0
    %v3102 = vpop.f32.mrb[0].mxu0
    %3103 = vdwg.mxu0
    %3104 = vmatprep.subr.bf16.mxu0 %v2325
    %3105 = vmatpush1.bf16.msra.mxu0 %v2324
    %3106 = vmatprep.subr.bf16.mxu0 %v2332
    %3107 = vmatpush1.bf16.msra.mxu0 %v2331
    %3108 = vmatprep.subr.bf16.mxu0 %v2339
    %3109 = vmatpush1.bf16.msra.mxu0 %v2338
    %3110 = vmatprep.subr.bf16.mxu0 %v2346
    %3111 = vmatpush1.bf16.msra.mxu0 %v2345
    %3112 = vmatprep.subr.bf16.mxu0 %v2353
    %3113 = vmatpush1.bf16.msra.mxu0 %v2352
    %3114 = vmatprep.subr.bf16.mxu0 %v2360
    %3115 = vmatpush1.bf16.msra.mxu0 %v2359
    %3116 = vmatprep.subr.bf16.mxu0 %v2367
    %3117 = vmatpush1.bf16.msra.mxu0 %v2366
    %3118 = vmatprep.subr.bf16.mxu0 %v2374
    %3119 = vmatpush1.bf16.msra.mxu0 %v2373
    %3120 = vmatprep.subr.bf16.mxu0 %v2381
    %3121 = vmatpush1.bf16.msra.mxu0 %v2380
    %3122 = vmatprep.subr.bf16.mxu0 %v2388
    %3123 = vmatpush1.bf16.msra.mxu0 %v2387
    %3124 = vmatprep.subr.bf16.mxu0 %v2395
    %3125 = vmatpush1.bf16.msra.mxu0 %v2394
    %3126 = vmatprep.subr.bf16.mxu0 %v2402
    %3127 = vmatpush1.bf16.msra.mxu0 %v2401
    %3128 = vmatprep.subr.bf16.mxu0 %v2409
    %3129 = vmatpush1.bf16.msra.mxu0 %v2408
    %3130 = vmatprep.subr.bf16.mxu0 %v2416
    %3131 = vmatpush1.bf16.msra.mxu0 %v2415
    %3132 = vmatprep.subr.bf16.mxu0 %v2423
    %3133 = vmatpush1.bf16.msra.mxu0 %v2422
    %3134 = vmatprep.subr.bf16.mxu0 %v2430
    %3135 = vmatpush1.bf16.msra.mxu0 %v2429
    %3136 = vmatprep.mubr.bf16.mxu0 %v2769
    %3137 = vmatmul.mubr.bf16.gmra.mrb[0].mxu0 %v2768
    %v3138 = vpop.f32.mrb[0].mxu0
    %v3139 = vadd.f32 0.0, %v3138
    %v3140 = vpop.f32.mrb[0].mxu0
    %v3141 = vadd.f32 0.0, %v3140
    %v3142 = vpop.f32.mrb[0].mxu0
    %v3143 = vpop.f32.mrb[0].mxu0
    %3144 = vdwg.mxu0
    %3145 = vmatprep.subr.bf16.mxu0 %v2437
    %3146 = vmatpush1.bf16.msra.mxu0 %v2436
    %3147 = vmatprep.subr.bf16.mxu0 %v2444
    %3148 = vmatpush1.bf16.msra.mxu0 %v2443
    %3149 = vmatprep.subr.bf16.mxu0 %v2451
    %3150 = vmatpush1.bf16.msra.mxu0 %v2450
    %3151 = vmatprep.subr.bf16.mxu0 %v2458
    %3152 = vmatpush1.bf16.msra.mxu0 %v2457
    %3153 = vmatprep.subr.bf16.mxu0 %v2465
    %3154 = vmatpush1.bf16.msra.mxu0 %v2464
    %3155 = vmatprep.subr.bf16.mxu0 %v2472
    %3156 = vmatpush1.bf16.msra.mxu0 %v2471
    %3157 = vmatprep.subr.bf16.mxu0 %v2479
    %3158 = vmatpush1.bf16.msra.mxu0 %v2478
    %3159 = vmatprep.subr.bf16.mxu0 %v2486
    %3160 = vmatpush1.bf16.msra.mxu0 %v2485
    %3161 = vmatprep.subr.bf16.mxu0 %v2493
    %3162 = vmatpush1.bf16.msra.mxu0 %v2492
    %3163 = vmatprep.subr.bf16.mxu0 %v2500
    %3164 = vmatpush1.bf16.msra.mxu0 %v2499
    %3165 = vmatprep.subr.bf16.mxu0 %v2507
    %3166 = vmatpush1.bf16.msra.mxu0 %v2506
    %3167 = vmatprep.subr.bf16.mxu0 %v2514
    %3168 = vmatpush1.bf16.msra.mxu0 %v2513
    %3169 = vmatprep.subr.bf16.mxu0 %v2521
    %3170 = vmatpush1.bf16.msra.mxu0 %v2520
    %3171 = vmatprep.subr.bf16.mxu0 %v2528
    %3172 = vmatpush1.bf16.msra.mxu0 %v2527
    %3173 = vmatprep.subr.bf16.mxu0 %v2535
    %3174 = vmatpush1.bf16.msra.mxu0 %v2534
    %3175 = vmatprep.subr.bf16.mxu0 %v2542
    %3176 = vmatpush1.bf16.msra.mxu0 %v2541
    %3177 = vmatprep.mubr.bf16.mxu0 %v2771
    %3178 = vmatmul.mubr.bf16.gmra.mrb[0].mxu0 %v2770
    %v3179 = vpop.f32.mrb[0].mxu0
    %v3180 = vadd.f32 %v3139, %v3179
    %v3181 = vpop.f32.mrb[0].mxu0
    %v3182 = vadd.f32 %v3141, %v3181
    %v3183 = vpop.f32.mrb[0].mxu0
    %v3184 = vpop.f32.mrb[0].mxu0
    %3185 = vdwg.mxu0
    %3186 = vmatprep.subr.bf16.mxu0 %v2549
    %3187 = vmatpush1.bf16.msra.mxu0 %v2548
    %3188 = vmatprep.subr.bf16.mxu0 %v2556
    %3189 = vmatpush1.bf16.msra.mxu0 %v2555
    %3190 = vmatprep.subr.bf16.mxu0 %v2563
    %3191 = vmatpush1.bf16.msra.mxu0 %v2562
    %3192 = vmatprep.subr.bf16.mxu0 %v2570
    %3193 = vmatpush1.bf16.msra.mxu0 %v2569
    %3194 = vmatprep.subr.bf16.mxu0 %v2577
    %3195 = vmatpush1.bf16.msra.mxu0 %v2576
    %3196 = vmatprep.subr.bf16.mxu0 %v2584
    %3197 = vmatpush1.bf16.msra.mxu0 %v2583
    %3198 = vmatprep.subr.bf16.mxu0 %v2591
    %3199 = vmatpush1.bf16.msra.mxu0 %v2590
    %3200 = vmatprep.subr.bf16.mxu0 %v2598
    %3201 = vmatpush1.bf16.msra.mxu0 %v2597
    %3202 = vmatprep.subr.bf16.mxu0 %v2605
    %3203 = vmatpush1.bf16.msra.mxu0 %v2604
    %3204 = vmatprep.subr.bf16.mxu0 %v2612
    %3205 = vmatpush1.bf16.msra.mxu0 %v2611
    %3206 = vmatprep.subr.bf16.mxu0 %v2619
    %3207 = vmatpush1.bf16.msra.mxu0 %v2618
    %3208 = vmatprep.subr.bf16.mxu0 %v2626
    %3209 = vmatpush1.bf16.msra.mxu0 %v2625
    %3210 = vmatprep.subr.bf16.mxu0 %v2633
    %3211 = vmatpush1.bf16.msra.mxu0 %v2632
    %3212 = vmatprep.subr.bf16.mxu0 %v2640
    %3213 = vmatpush1.bf16.msra.mxu0 %v2639
    %3214 = vmatprep.subr.bf16.mxu0 %v2647
    %3215 = vmatpush1.bf16.msra.mxu0 %v2646
    %3216 = vmatprep.subr.bf16.mxu0 %v2654
    %3217 = vmatpush1.bf16.msra.mxu0 %v2653
    %3218 = vmatprep.mubr.bf16.mxu0 %v2773
    %3219 = vmatmul.mubr.bf16.gmra.mrb[0].mxu0 %v2772
    %v3220 = vpop.f32.mrb[0].mxu0
    %v3221 = vadd.f32 %v3180, %v3220
    %v3222 = vpop.f32.mrb[0].mxu0
    %v3223 = vadd.f32 %v3182, %v3222
    %v3224 = vpop.f32.mrb[0].mxu0
    %v3225 = vpop.f32.mrb[0].mxu0
    %3226 = vdwg.mxu0
    %3227 = vmatprep.subr.bf16.mxu0 %v2661
    %3228 = vmatpush1.bf16.msra.mxu0 %v2660
    %3229 = vmatprep.subr.bf16.mxu0 %v2668
    %3230 = vmatpush1.bf16.msra.mxu0 %v2667
    %3231 = vmatprep.subr.bf16.mxu0 %v2675
    %3232 = vmatpush1.bf16.msra.mxu0 %v2674
    %3233 = vmatprep.subr.bf16.mxu0 %v2682
    %3234 = vmatpush1.bf16.msra.mxu0 %v2681
    %3235 = vmatprep.subr.bf16.mxu0 %v2689
    %3236 = vmatpush1.bf16.msra.mxu0 %v2688
    %3237 = vmatprep.subr.bf16.mxu0 %v2696
    %3238 = vmatpush1.bf16.msra.mxu0 %v2695
    %3239 = vmatprep.subr.bf16.mxu0 %v2703
    %3240 = vmatpush1.bf16.msra.mxu0 %v2702
    %3241 = vmatprep.subr.bf16.mxu0 %v2710
    %3242 = vmatpush1.bf16.msra.mxu0 %v2709
    %3243 = vmatprep.subr.bf16.mxu0 %v2717
    %3244 = vmatpush1.bf16.msra.mxu0 %v2716
    %3245 = vmatprep.subr.bf16.mxu0 %v2724
    %3246 = vmatpush1.bf16.msra.mxu0 %v2723
    %3247 = vmatprep.subr.bf16.mxu0 %v2731
    %3248 = vmatpush1.bf16.msra.mxu0 %v2730
    %3249 = vmatprep.subr.bf16.mxu0 %v2738
    %3250 = vmatpush1.bf16.msra.mxu0 %v2737
    %3251 = vmatprep.subr.bf16.mxu0 %v2745
    %3252 = vmatpush1.bf16.msra.mxu0 %v2744
    %3253 = vmatprep.subr.bf16.mxu0 %v2752
    %3254 = vmatpush1.bf16.msra.mxu0 %v2751
    %3255 = vmatprep.subr.bf16.mxu0 %v2759
    %3256 = vmatpush1.bf16.msra.mxu0 %v2758
    %3257 = vmatprep.subr.bf16.mxu0 %v2766
    %3258 = vmatpush1.bf16.msra.mxu0 %v2765
    %3259 = vmatprep.mubr.bf16.mxu0 %v2775
    %3260 = vmatmul.mubr.bf16.gmra.mrb[0].mxu0 %v2774
    %v3261 = vpop.f32.mrb[0].mxu0
    %v3262 = vadd.f32 %v3221, %v3261
    %v3263 = vpop.f32.mrb[0].mxu0
    %v3264 = vadd.f32 %v3223, %v3263
    %v3265 = vpop.f32.mrb[0].mxu0
    %v3266 = vpop.f32.mrb[0].mxu0
    %3267 = vdwg.mxu0
    %3268 = vmatprep.subr.bf16.mxu0 0
    %3269 = vmatpush1.bf16.msra.mxu0 %v2326
    %3270 = vmatprep.subr.bf16.mxu0 0
    %3271 = vmatpush1.bf16.msra.mxu0 %v2333
    %3272 = vmatprep.subr.bf16.mxu0 0
    %3273 = vmatpush1.bf16.msra.mxu0 %v2340
    %3274 = vmatprep.subr.bf16.mxu0 0
    %3275 = vmatpush1.bf16.msra.mxu0 %v2347
    %3276 = vmatprep.subr.bf16.mxu0 0
    %3277 = vmatpush1.bf16.msra.mxu0 %v2354
    %3278 = vmatprep.subr.bf16.mxu0 0
    %3279 = vmatpush1.bf16.msra.mxu0 %v2361
    %3280 = vmatprep.subr.bf16.mxu0 0
    %3281 = vmatpush1.bf16.msra.mxu0 %v2368
    %3282 = vmatprep.subr.bf16.mxu0 0
    %3283 = vmatpush1.bf16.msra.mxu0 %v2375
    %3284 = vmatprep.subr.bf16.mxu0 0
    %3285 = vmatpush1.bf16.msra.mxu0 %v2382
    %3286 = vmatprep.subr.bf16.mxu0 0
    %3287 = vmatpush1.bf16.msra.mxu0 %v2389
    %3288 = vmatprep.subr.bf16.mxu0 0
    %3289 = vmatpush1.bf16.msra.mxu0 %v2396
    %3290 = vmatprep.subr.bf16.mxu0 0
    %3291 = vmatpush1.bf16.msra.mxu0 %v2403
    %3292 = vmatprep.subr.bf16.mxu0 0
    %3293 = vmatpush1.bf16.msra.mxu0 %v2410
    %3294 = vmatprep.subr.bf16.mxu0 0
    %3295 = vmatpush1.bf16.msra.mxu0 %v2417
    %3296 = vmatprep.subr.bf16.mxu0 0
    %3297 = vmatpush1.bf16.msra.mxu0 %v2424
    %3298 = vmatprep.subr.bf16.mxu0 0
    %3299 = vmatpush1.bf16.msra.mxu0 %v2431
    %3300 = vmatprep.mubr.bf16.mxu0 %v2769
    %3301 = vmatmul.mubr.bf16.gmra.mrb[0].mxu0 %v2768
    %v3302 = vpop.f32.mrb[0].mxu0
    %v3303 = vadd.f32 0.0, %v3302
    %v3304 = vpop.f32.mrb[0].mxu0
    %v3305 = vpop.f32.mrb[0].mxu0
    %v3306 = vpop.f32.mrb[0].mxu0
    %3307 = vdwg.mxu0
    %3308 = vmatprep.subr.bf16.mxu0 0
    %3309 = vmatpush1.bf16.msra.mxu0 %v2438
    %3310 = vmatprep.subr.bf16.mxu0 0
    %3311 = vmatpush1.bf16.msra.mxu0 %v2445
    %3312 = vmatprep.subr.bf16.mxu0 0
    %3313 = vmatpush1.bf16.msra.mxu0 %v2452
    %3314 = vmatprep.subr.bf16.mxu0 0
    %3315 = vmatpush1.bf16.msra.mxu0 %v2459
    %3316 = vmatprep.subr.bf16.mxu0 0
    %3317 = vmatpush1.bf16.msra.mxu0 %v2466
    %3318 = vmatprep.subr.bf16.mxu0 0
    %3319 = vmatpush1.bf16.msra.mxu0 %v2473
    %3320 = vmatprep.subr.bf16.mxu0 0
    %3321 = vmatpush1.bf16.msra.mxu0 %v2480
    %3322 = vmatprep.subr.bf16.mxu0 0
    %3323 = vmatpush1.bf16.msra.mxu0 %v2487
    %3324 = vmatprep.subr.bf16.mxu0 0
    %3325 = vmatpush1.bf16.msra.mxu0 %v2494
    %3326 = vmatprep.subr.bf16.mxu0 0
    %3327 = vmatpush1.bf16.msra.mxu0 %v2501
    %3328 = vmatprep.subr.bf16.mxu0 0
    %3329 = vmatpush1.bf16.msra.mxu0 %v2508
    %3330 = vmatprep.subr.bf16.mxu0 0
    %3331 = vmatpush1.bf16.msra.mxu0 %v2515
    %3332 = vmatprep.subr.bf16.mxu0 0
    %3333 = vmatpush1.bf16.msra.mxu0 %v2522
    %3334 = vmatprep.subr.bf16.mxu0 0
    %3335 = vmatpush1.bf16.msra.mxu0 %v2529
    %3336 = vmatprep.subr.bf16.mxu0 0
    %3337 = vmatpush1.bf16.msra.mxu0 %v2536
    %3338 = vmatprep.subr.bf16.mxu0 0
    %3339 = vmatpush1.bf16.msra.mxu0 %v2543
    %3340 = vmatprep.mubr.bf16.mxu0 %v2771
    %3341 = vmatmul.mubr.bf16.gmra.mrb[0].mxu0 %v2770
    %v3342 = vpop.f32.mrb[0].mxu0
    %v3343 = vadd.f32 %v3303, %v3342
    %v3344 = vpop.f32.mrb[0].mxu0
    %v3345 = vpop.f32.mrb[0].mxu0
    %v3346 = vpop.f32.mrb[0].mxu0
    %3347 = vdwg.mxu0
    %3348 = vmatprep.subr.bf16.mxu0 0
    %3349 = vmatpush1.bf16.msra.mxu0 %v2550
    %3350 = vmatprep.subr.bf16.mxu0 0
    %3351 = vmatpush1.bf16.msra.mxu0 %v2557
    %3352 = vmatprep.subr.bf16.mxu0 0
    %3353 = vmatpush1.bf16.msra.mxu0 %v2564
    %3354 = vmatprep.subr.bf16.mxu0 0
    %3355 = vmatpush1.bf16.msra.mxu0 %v2571
    %3356 = vmatprep.subr.bf16.mxu0 0
    %3357 = vmatpush1.bf16.msra.mxu0 %v2578
    %3358 = vmatprep.subr.bf16.mxu0 0
    %3359 = vmatpush1.bf16.msra.mxu0 %v2585
    %3360 = vmatprep.subr.bf16.mxu0 0
    %3361 = vmatpush1.bf16.msra.mxu0 %v2592
    %3362 = vmatprep.subr.bf16.mxu0 0
    %3363 = vmatpush1.bf16.msra.mxu0 %v2599
    %3364 = vmatprep.subr.bf16.mxu0 0
    %3365 = vmatpush1.bf16.msra.mxu0 %v2606
    %3366 = vmatprep.subr.bf16.mxu0 0
    %3367 = vmatpush1.bf16.msra.mxu0 %v2613
    %3368 = vmatprep.subr.bf16.mxu0 0
    %3369 = vmatpush1.bf16.msra.mxu0 %v2620
    %3370 = vmatprep.subr.bf16.mxu0 0
    %3371 = vmatpush1.bf16.msra.mxu0 %v2627
    %3372 = vmatprep.subr.bf16.mxu0 0
    %3373 = vmatpush1.bf16.msra.mxu0 %v2634
    %3374 = vmatprep.subr.bf16.mxu0 0
    %3375 = vmatpush1.bf16.msra.mxu0 %v2641
    %3376 = vmatprep.subr.bf16.mxu0 0
    %3377 = vmatpush1.bf16.msra.mxu0 %v2648
    %3378 = vmatprep.subr.bf16.mxu0 0
    %3379 = vmatpush1.bf16.msra.mxu0 %v2655
    %3380 = vmatprep.mubr.bf16.mxu0 %v2773
    %3381 = vmatmul.mubr.bf16.gmra.mrb[0].mxu0 %v2772
    %v3382 = vpop.f32.mrb[0].mxu0
    %v3383 = vadd.f32 %v3343, %v3382
    %v3384 = vpop.f32.mrb[0].mxu0
    %v3385 = vpop.f32.mrb[0].mxu0
    %v3386 = vpop.f32.mrb[0].mxu0
    %3387 = vdwg.mxu0
    %3388 = vmatprep.subr.bf16.mxu0 0
    %3389 = vmatpush1.bf16.msra.mxu0 %v2662
    %3390 = vmatprep.subr.bf16.mxu0 0
    %3391 = vmatpush1.bf16.msra.mxu0 %v2669
    %3392 = vmatprep.subr.bf16.mxu0 0
    %3393 = vmatpush1.bf16.msra.mxu0 %v2676
    %3394 = vmatprep.subr.bf16.mxu0 0
    %3395 = vmatpush1.bf16.msra.mxu0 %v2683
    %3396 = vmatprep.subr.bf16.mxu0 0
    %3397 = vmatpush1.bf16.msra.mxu0 %v2690
    %3398 = vmatprep.subr.bf16.mxu0 0
    %3399 = vmatpush1.bf16.msra.mxu0 %v2697
    %3400 = vmatprep.subr.bf16.mxu0 0
    %3401 = vmatpush1.bf16.msra.mxu0 %v2704
    %3402 = vmatprep.subr.bf16.mxu0 0
    %3403 = vmatpush1.bf16.msra.mxu0 %v2711
    %3404 = vmatprep.subr.bf16.mxu0 0
    %3405 = vmatpush1.bf16.msra.mxu0 %v2718
    %3406 = vmatprep.subr.bf16.mxu0 0
    %3407 = vmatpush1.bf16.msra.mxu0 %v2725
    %3408 = vmatprep.subr.bf16.mxu0 0
    %3409 = vmatpush1.bf16.msra.mxu0 %v2732
    %3410 = vmatprep.subr.bf16.mxu0 0
    %3411 = vmatpush1.bf16.msra.mxu0 %v2739
    %3412 = vmatprep.subr.bf16.mxu0 0
    %3413 = vmatpush1.bf16.msra.mxu0 %v2746
    %3414 = vmatprep.subr.bf16.mxu0 0
    %3415 = vmatpush1.bf16.msra.mxu0 %v2753
    %3416 = vmatprep.subr.bf16.mxu0 0
    %3417 = vmatpush1.bf16.msra.mxu0 %v2760
    %3418 = vmatprep.subr.bf16.mxu0 0
    %3419 = vmatpush1.bf16.msra.mxu0 %v2767
    %3420 = vmatprep.mubr.bf16.mxu0 %v2775
    %3421 = vmatmul.mubr.bf16.gmra.mrb[0].mxu0 %v2774
    %v3422 = vpop.f32.mrb[0].mxu0
    %v3423 = vadd.f32 %v3383, %v3422
    %v3424 = vpop.f32.mrb[0].mxu0
    %v3425 = vpop.f32.mrb[0].mxu0
    %v3426 = vpop.f32.mrb[0].mxu0
    %3427 = vdwg.mxu0
    %v3428 = vld [vmem:[#allocation13 + $0x3a] sm:$0xff]
    %v3430 = vlaneseq
    %v3431 = vshrl.u32 %v3430, 7
    %v3432 = vsub.s32 0, %v3431
    %v3433 = vrot.slane %v3428, %v3432
    %v3434 = vlaneseq
    %v3435 = vshrl.u32 %v3434, 7
    %v3436 = vsub.s32 1, %v3435
    %v3437 = vrot.slane %v3428, %v3436
    %v3438 = vlaneseq
    %v3439 = vshrl.u32 %v3438, 7
    %v3440 = vsub.s32 2, %v3439
    %v3441 = vrot.slane %v3428, %v3440
    %v3442 = vlaneseq
    %v3443 = vshrl.u32 %v3442, 7
    %v3444 = vsub.s32 3, %v3443
    %v3445 = vrot.slane %v3428, %v3444
    %v3446 = vlaneseq
    %v3447 = vshrl.u32 %v3446, 7
    %v3448 = vsub.s32 4, %v3447
    %v3449 = vrot.slane %v3428, %v3448
    %v3450 = vlaneseq
    %v3451 = vshrl.u32 %v3450, 7
    %v3452 = vsub.s32 5, %v3451
    %v3453 = vrot.slane %v3428, %v3452
    %v3454 = vlaneseq
    %v3455 = vshrl.u32 %v3454, 7
    %v3456 = vsub.s32 6, %v3455
    %v3457 = vrot.slane %v3428, %v3456
    %v3465 = vmul.f32 %v2934, %v3433
    %v3466 = vmul.f32 %v2936, %v3437
    %v3467 = vmul.f32 %v3098, %v3441
    %v3468 = vmul.f32 %v3100, %v3445
    %v3469 = vmul.f32 %v3262, %v3449
    %v3470 = vmul.f32 %v3264, %v3453
    %v3471 = vmul.f32 %v3423, %v3457
    %v3472 = vld [vmem:[#allocation13 + $0x41] sm:$0xff]
    %v3474 = vlaneseq
    %v3475 = vshrl.u32 %v3474, 7
    %v3476 = vsub.s32 0, %v3475
    %v3477 = vrot.slane %v3472, %v3476
    %v3478 = vlaneseq
    %v3479 = vshrl.u32 %v3478, 7
    %v3480 = vsub.s32 1, %v3479
    %v3481 = vrot.slane %v3472, %v3480
    %v3482 = vlaneseq
    %v3483 = vshrl.u32 %v3482, 7
    %v3484 = vsub.s32 2, %v3483
    %v3485 = vrot.slane %v3472, %v3484
    %v3486 = vlaneseq
    %v3487 = vshrl.u32 %v3486, 7
    %v3488 = vsub.s32 3, %v3487
    %v3489 = vrot.slane %v3472, %v3488
    %v3490 = vlaneseq
    %v3491 = vshrl.u32 %v3490, 7
    %v3492 = vsub.s32 4, %v3491
    %v3493 = vrot.slane %v3472, %v3492
    %v3494 = vlaneseq
    %v3495 = vshrl.u32 %v3494, 7
    %v3496 = vsub.s32 5, %v3495
    %v3497 = vrot.slane %v3472, %v3496
    %v3498 = vlaneseq
    %v3499 = vshrl.u32 %v3498, 7
    %v3500 = vsub.s32 6, %v3499
    %v3501 = vrot.slane %v3472, %v3500
    %v3509 = vadd.f32 %v3465, %v3477
    %v3510 = vadd.f32 %v3466, %v3481
    %v3511 = vadd.f32 %v3467, %v3485
    %v3512 = vadd.f32 %v3468, %v3489
    %v3513 = vadd.f32 %v3469, %v3493
    %v3514 = vadd.f32 %v3470, %v3497
    %v3515 = vadd.f32 %v3471, %v3501
    %v3516 = vtanh.pop %v3509
    %v3517 = vtanh.pop %v3510
    %v3518 = vtanh.pop %v3511
    %v3519 = vtanh.pop %v3512
    %v3520 = vtanh.pop %v3513
    %v3521 = vtanh.pop %v3514
    %v3522 = vtanh.pop %v3515
    %v3523 = vpack.c.bf16 %v3516, %v3516
    %v3524 = vpack.c.bf16 %v3517, %v3517
    %v3525 = vpack.c.bf16 %v3518, %v3518
    %v3526 = vpack.c.bf16 %v3519, %v3519
    %v3527 = vpack.c.bf16 %v3520, %v3520
    %v3528 = vpack.c.bf16 %v3521, %v3521
    %v3529 = vpack.c.bf16 %v3522, %v3522
    %v3537 = vcombine.low %v3523, %v3524
    %v3538 = vcombine.low %v3525, %v3526
    %v3539 = vcombine.low %v3527, %v3528
    %v3541 = vunpack.c.l.s4 1966171168
    %v3542 = vunpack.c.0.s8 %v3541
    %v3543 = vlaneseq
    %v3544 = vshrl.u32 %v3543, 7
    %v3545 = vsub.s32 %v3542, %v3544
    %v3546 = vrot.slane %v3537, %v3545
    %v3548 = vunpack.c.l.s4 1966171168
    %v3549 = vunpack.c.0.s8 %v3548
    %v3550 = vlaneseq
    %v3551 = vshrl.u32 %v3550, 7
    %v3552 = vsub.s32 %v3549, %v3551
    %v3553 = vrot.slane %v3538, %v3552
    %v3555 = vunpack.c.l.s4 1966171168
    %v3556 = vunpack.c.0.s8 %v3555
    %v3557 = vlaneseq
    %v3558 = vshrl.u32 %v3557, 7
    %v3559 = vsub.s32 %v3556, %v3558
    %v3560 = vrot.slane %v3539, %v3559
    %v3562 = vunpack.c.l.s4 1966171168
    %v3563 = vunpack.c.0.s8 %v3562
    %v3564 = vlaneseq
    %v3565 = vshrl.u32 %v3564, 7
    %v3566 = vsub.s32 %v3563, %v3565
    %v3567 = vrot.slane %v3529, %v3566
    %v3568 = vcombine.low %v3546, %v3553
    %v3569 = vcombine.low %v3560, %v3567
    %v3571 = vunpack.c.l.s4 1966171168
    %v3572 = vunpack.c.0.s8 %v3571
    %v3573 = vlaneseq
    %v3574 = vshrl.u32 %v3573, 7
    %v3575 = vsub.s32 %v3572, %v3574
    %v3576 = vrot.slane %v3568, %v3575
    %v3578 = vunpack.c.l.s4 1966171168
    %v3579 = vunpack.c.0.s8 %v3578
    %v3580 = vlaneseq
    %v3581 = vshrl.u32 %v3580, 7
    %v3582 = vsub.s32 %v3579, %v3581
    %v3583 = vrot.slane %v3569, %v3582
    %v3584 = vcombine.low %v3576, %v3583
    %3586 = vst [vmem:[#allocation14] sm:$0x7f] %v3584
    // Predicated region
    $region50: #{tpu_custom_call.1} parent=1 // pred_check
      _
    $region51: #{tpu_custom_call.1} parent=1 // pred_check_branch
      %3588 = sbr.rel (0) target = $region53
    $region52: #{tpu_custom_call.1} parent=1 // pred_region
      %s3590 = ssub.s32 112, 112
      %3591 = vsyncadd [#allocation7], %s3590
      %s3593 = sshll.u32 [#allocation14], 4
      %s3594 = int_to_ptr.vmem [resolvable:$true] %s3593
      %3596 = dma.vmem_to_hbm [thread:$0]  %s3594, 112, %s7, [#allocation7]
    $region53: #{tpu_custom_call.1} parent=1 // pred_fallthru
      _
    // Predicated region
    $region54: #{tpu_custom_call.1} parent=1 // pred_check
      _
    $region55: #{tpu_custom_call.1} parent=1 // pred_check_branch
      %3598 = sbr.rel (0) target = $region57
    $region56: #{tpu_custom_call.1} parent=1 // pred_region
      %3599 = dma.done [#allocation7], 112
    $region57: #{tpu_custom_call.1} parent=1 // pred_fallthru
      _
    %3600 = vsyncpa [#allocation6], 1
    %3601 = vsyncpa [#allocation9], 1
    %3602 = vsyncpa [#allocation12], 1
    %3603 = vsyncpa [#allocation7], 1
  %3604 = vsyncmov [#allocation4]
  %s3605 = vpop.sfrf %3604
  %p3606 = scmp.eq.s32.totalorder %s3605, 0
  %p3607 = pneg %p3606
  %3609 = shalt.err (%p3607)
  %s3610 = scalar_lea.sflag [#allocation4], 1
  %3611 = vsyncmov %s3610
  %s3612 = vpop.sfrf %3611
  %p3613 = scmp.eq.s32.totalorder %s3612, 0
  %p3614 = pneg %p3613
  %3616 = shalt.err (%p3614)

</llo_original>
